<compile_context>
chip_gen: v7x
topology: tpu7x:2x2x1
jax: 0.10.0
libtpu: 0.0.40
codegen_flags: <defaults>
</compile_context>

<pallas_src>
import functools

import jax
import jax.numpy as jnp
from jax.experimental import pallas as pl
from jax.experimental.pallas import tpu as pltpu

EPS = 1e-5


# ----------------------------- Pallas kernels ------------------------------


def _conv1_stats_kernel(x_ref, w_ref, y_ref, s_ref, q_ref, xp_ref, col_ref,
                        *, H, W, Cin, Cout):
    """3x3 conv (pad=1) as a single im2col MXU matmul, channel-major output,
    plus per-(batch, channel) sum / sum-of-squares for IBNorm."""
    # zero-padded input in scratch (scratch persists across steps -> re-zero)
    xp_ref[...] = jnp.zeros_like(xp_ref)
    xp_ref[1:H + 1, 1:W + 1, :] = x_ref[0]
    xp = xp_ref[...]                                       # (H+2, W+2, Cin) bf16

    # implicit im2col: 9 shifted windows -> (H*W, 9*Cin) scratch
    for dy in range(3):
        for dx in range(3):
            tap = dy * 3 + dx
            col_ref[:, tap * Cin:(tap + 1) * Cin] = (
                xp[dy:dy + H, dx:dx + W, :].reshape(H * W, Cin))

    # ONE K=9*Cin matmul (bf16 operands, f32 accumulation).
    res = jnp.dot(col_ref[...], w_ref[...],
                  preferred_element_type=jnp.float32)      # (H*W, Cout) f32

    # NOTE: conv1's bias is NOT added -- IBNorm subtracts the mean right after,
    # so a per-channel constant cancels exactly.
    s_ref[0] = jnp.sum(res, axis=0, keepdims=True)         # (1, Cout)
    q_ref[0] = jnp.sum(res * res, axis=0, keepdims=True)   # (1, Cout)
    # channel-major store: (Cout, H*W) == NCHW rows; no XLA transpose needed.
    y_ref[0] = jnp.transpose(res)


def _norm_up_conv2_kernel(y_ref, sc_ref, sh_ref, img_ref, l_ref, rt_ref,
                          wi_ref, b_ref, hr_ref, pred_ref, pimg_ref,
                          *, H, W, Cout):
    """Fused IBNorm+ReLU, bilinear x2 upsample + 3x3 conv (folded into 6 MXU
    matmuls), raw-image taps (27 VPU FMAs), bias and sigmoid."""
    H2, W2 = 2 * H, 2 * W

    # ---- IBNorm affine + ReLU; hr2x side output (exact f32, NCHW rows)
    hr = jnp.maximum(y_ref[0] * sc_ref[0] + sh_ref[0], 0.0)   # (Cout*H, W) f32
    hr_ref[0] = hr
    hr_b = hr.astype(jnp.bfloat16)

    # ---- hr contribution: upsample + conv taps folded into matmuls
    acc = jnp.zeros((H2, W2), jnp.float32) + b_ref[0]
    for ox in range(3):
        t = jnp.dot(l_ref[ox], hr_b,
                    preferred_element_type=jnp.float32)       # (2H, W)
        acc = acc + jnp.dot(t.astype(jnp.bfloat16), rt_ref[ox],
                            preferred_element_type=jnp.float32)  # (2H, 2W)

    # ---- raw image channels: zero border in scratch + 9 taps per channel
    pimg_ref[...] = jnp.zeros_like(pimg_ref)
    for c in range(3):
        pimg_ref[1:H2 + 1, 1:W2 + 1] = img_ref[0, c]
        pim = pimg_ref[...]
        for dy in range(3):
            for dx in range(3):
                acc = acc + (wi_ref[c * 9 + dy * 3 + dx]
                             * pim[dy:dy + H2, dx:dx + W2])

    pred_ref[0] = jax.nn.sigmoid(acc)


def _norm_relu_kernel(y_ref, sc_ref, sh_ref, hr_ref):
    """IBNorm affine + ReLU only (inference=True path)."""
    hr_ref[0] = jnp.maximum(y_ref[0] * sc_ref[0] + sh_ref[0], 0.0)


# --------------------------- pallas_call wrappers ---------------------------


def conv1_with_stats(x_nhwc_bf16, w1_bf16, H, W, Cin, Cout):
    N = x_nhwc_bf16.shape[0]
    kernel = functools.partial(_conv1_stats_kernel, H=H, W=W, Cin=Cin, Cout=Cout)
    return pl.pallas_call(
        kernel,
        out_shape=(
            jax.ShapeDtypeStruct((N, Cout, H * W), jnp.float32),  # lane-dense
            jax.ShapeDtypeStruct((N, 1, Cout), jnp.float32),
            jax.ShapeDtypeStruct((N, 1, Cout), jnp.float32),
        ),
        grid=(N,),
        in_specs=[
            pl.BlockSpec((1, H, W, Cin), lambda n: (n, 0, 0, 0)),
            pl.BlockSpec((9 * Cin, Cout), lambda n: (0, 0)),
        ],
        out_specs=(
            pl.BlockSpec((1, Cout, H * W), lambda n: (n, 0, 0)),
            pl.BlockSpec((1, 1, Cout), lambda n: (n, 0, 0)),
            pl.BlockSpec((1, 1, Cout), lambda n: (n, 0, 0)),
        ),
        scratch_shapes=[
            pltpu.VMEM((H + 2, W + 2, Cin), jnp.bfloat16),   # padded input
            pltpu.VMEM((H * W, 9 * Cin), jnp.bfloat16),      # im2col staging
        ],
        compiler_params=pltpu.CompilerParams(
            dimension_semantics=("parallel",),
            vmem_limit_bytes=48 << 20),
    )(x_nhwc_bf16, w1_bf16)


def norm_up_conv2(y1r, scale_rows, shift_rows, img, l_mats, rt_mats,
                  w2_img, b2, H, W, Cout):
    N = y1r.shape[0]
    H2, W2 = 2 * H, 2 * W
    kernel = functools.partial(_norm_up_conv2_kernel, H=H, W=W, Cout=Cout)
    return pl.pallas_call(
        kernel,
        out_shape=(
            jax.ShapeDtypeStruct((N, Cout * H, W), jnp.float32),  # hr2x (NCHW rows)
            jax.ShapeDtypeStruct((N, H2, W2), jnp.float32),       # pred_detail
        ),
        grid=(N,),
        in_specs=[
            pl.BlockSpec((1, Cout * H, W), lambda n: (n, 0, 0)),
            pl.BlockSpec((1, Cout * H, 1), lambda n: (n, 0, 0)),
            pl.BlockSpec((1, Cout * H, 1), lambda n: (n, 0, 0)),
            pl.BlockSpec((1, 3, H2, W2), lambda n: (n, 0, 0, 0)),
            pl.BlockSpec((3, H2, Cout * H), lambda n: (0, 0, 0)),
            pl.BlockSpec((3, W, W2), lambda n: (0, 0, 0)),
            pl.BlockSpec(memory_space=pltpu.MemorySpace.SMEM),   # img-tap weights
            pl.BlockSpec(memory_space=pltpu.MemorySpace.SMEM),   # conv2 bias
        ],
        out_specs=(
            pl.BlockSpec((1, Cout * H, W), lambda n: (n, 0, 0)),
            pl.BlockSpec((1, H2, W2), lambda n: (n, 0, 0)),
        ),
        scratch_shapes=[pltpu.VMEM((H2 + 2, W2 + 2), jnp.float32)],
        compiler_params=pltpu.CompilerParams(
            dimension_semantics=("parallel",),
            vmem_limit_bytes=48 << 20),
    )(y1r, scale_rows, shift_rows, img, l_mats, rt_mats, w2_img, b2)


def norm_relu(y1r, scale_rows, shift_rows, H, W, Cout):
    N = y1r.shape[0]
    return pl.pallas_call(
        _norm_relu_kernel,
        out_shape=jax.ShapeDtypeStruct((N, Cout * H, W), jnp.float32),
        grid=(N,),
        in_specs=[
            pl.BlockSpec((1, Cout * H, W), lambda n: (n, 0, 0)),
            pl.BlockSpec((1, Cout * H, 1), lambda n: (n, 0, 0)),
            pl.BlockSpec((1, Cout * H, 1), lambda n: (n, 0, 0)),
        ],
        out_specs=pl.BlockSpec((1, Cout * H, W), lambda n: (n, 0, 0)),
        compiler_params=pltpu.CompilerParams(dimension_semantics=("parallel",)),
    )(y1r, scale_rows, shift_rows)


# ------------------------------- JAX glue -----------------------------------


def _upsample_matrix(out_size, in_size):
    """Dense bilinear interpolation matrix (align_corners=False, PyTorch
    source-index convention with negative-src clamp)."""
    o = jnp.arange(out_size, dtype=jnp.float32)
    src = jnp.maximum((o + 0.5) * (in_size / out_size) - 0.5, 0.0)
    i0 = jnp.minimum(jnp.floor(src).astype(jnp.int32), in_size - 1)
    i1 = jnp.minimum(i0 + 1, in_size - 1)
    w1 = src - i0.astype(jnp.float32)
    w0 = 1.0 - w1
    rows = jnp.arange(out_size)
    u = jnp.zeros((out_size, in_size), jnp.float32)
    u = u.at[rows, i0].add(w0)
    u = u.at[rows, i1].add(w1)
    return u


def _shift_rows(m, o):
    """out[a] = m[a + o] if in range else 0 (folds the conv zero border)."""
    if o == 0:
        return m
    z = jnp.zeros((abs(o),) + m.shape[1:], m.dtype)
    if o > 0:
        return jnp.concatenate([m[o:], z], axis=0)
    return jnp.concatenate([z, m[:o]], axis=0)


def _conv2_matrices(w2, H, W, Cout):
    """Fold (bilinear x2 upsample + 3x3 conv taps + zero border) into
    per-dx matrices so that  pred_hr = sum_dx  L[dx] @ hr_stack @ Rt[dx]."""
    uh = _upsample_matrix(2 * H, H)                       # (2H, H)
    uw = _upsample_matrix(2 * W, W)                       # (2W, W)
    uh_sh = [_shift_rows(uh, o) for o in (-1, 0, 1)]      # indexed by dy
    uw_sh = [_shift_rows(uw, o) for o in (-1, 0, 1)]      # indexed by dx
    w_hr = w2[0, :Cout]                                   # (Cout, 3, 3)
    l_list = []
    for dx in range(3):
        cols = [sum(w_hr[c, dy, dx] * uh_sh[dy] for dy in range(3))
                for c in range(Cout)]
        l_list.append(jnp.concatenate(cols, axis=1))      # (2H, Cout*H)
    l_mats = jnp.stack(l_list, axis=0).astype(jnp.bfloat16)       # (3, 2H, Cout*H)
    rt_mats = jnp.stack([uw_sh[dx].T for dx in range(3)],
                        axis=0).astype(jnp.bfloat16)              # (3, W, 2W)
    return l_mats, rt_mats


# ----------------------------- Model wrapper --------------------------------


def init_params(key, in_channels, out_channels):
    ks = jax.random.split(key, 6)
    bn_ch = out_channels // 2

    # conv1: (Cout, Cin, 3, 3) -> matmul weight (9*Cin, Cout), row order
    # ((dy*3 + dx)*Cin + cin), matching the in-kernel im2col column order.
    w1 = jax.random.normal(ks[0], (out_channels, in_channels, 3, 3), jnp.float32) * 0.1
    w1_mat = jnp.transpose(w1, (2, 3, 1, 0)).reshape(9 * in_channels, out_channels)
    # conv1 bias exists in the PyTorch module but cancels exactly under IBNorm.
    b1 = jax.random.normal(ks[1], (out_channels,), jnp.float32) * 0.1  # unused

    # IBNorm affine params (BatchNorm half only); pad to full channel count.
    gamma_bn = 1.0 + 0.1 * jax.random.normal(ks[2], (bn_ch,), jnp.float32)
    beta_bn = 0.1 * jax.random.normal(ks[3], (bn_ch,), jnp.float32)
    gamma = jnp.concatenate([gamma_bn, jnp.ones((out_channels - bn_ch,), jnp.float32)])
    beta = jnp.concatenate([beta_bn, jnp.zeros((out_channels - bn_ch,), jnp.float32)])

    # conv2: (1, Cout+3, 3, 3), hr channels first then 3 img channels (cat order)
    c2_in = out_channels + 3
    w2 = jax.random.normal(ks[4], (1, c2_in, 3, 3), jnp.float32) * 0.1
    b2 = jax.random.normal(ks[5], (1,), jnp.float32) * 0.1

    return dict(w1=w1_mat.astype(jnp.bfloat16), b1=b1, gamma=gamma, beta=beta,
                w2=w2, b2=b2)


def layer2_for_hr_branch_forward(x_nchw, img_nchw, params, inference=False):
    N, Cin, H, W = x_nchw.shape
    Cout = params["w1"].shape[-1]
    bn_ch = Cout // 2

    # ---- conv1 + IBNorm partial sums.
    # Only XLA glue on the input: one fused transpose/cast pass over x (the
    # smallest tensor); padding happens inside the kernel.
    x_nhwc = jnp.transpose(x_nchw, (0, 2, 3, 1)).astype(jnp.bfloat16)
    y1, s, q = conv1_with_stats(x_nhwc, params["w1"], H, W, Cin, Cout)
    s = s[:, 0, :]                       # (N, Cout)  sum over H*W
    q = q[:, 0, :]                       # (N, Cout)  sum of squares over H*W
    # (N, Cout, H*W) and (N, Cout*H, W) share the same linear layout -> free.
    y1r = y1.reshape(N, Cout * H, W)

    # ---- IBNorm statistics -> per-(n, channel) scale/shift (tiny O(N*C) math)
    # TODO(synk): E[x^2]-mean^2 can cancel for large-mean activations; a
    # centered second pass would be safer when importing pretrained weights.
    hw = float(H * W)
    mean_in = s / hw
    var_in = jnp.maximum(q / hw - mean_in * mean_in, 0.0)
    mean_bn = jnp.sum(s, axis=0) / (N * hw)
    var_bn = jnp.maximum(jnp.sum(q, axis=0) / (N * hw) - mean_bn * mean_bn, 0.0)
    is_bn = (jnp.arange(Cout) < bn_ch)[None, :]
    mean = jnp.where(is_bn, mean_bn[None, :], mean_in)
    inv = jnp.where(is_bn, jax.lax.rsqrt(var_bn + EPS)[None, :],
                    jax.lax.rsqrt(var_in + EPS))
    scale = params["gamma"][None, :] * inv                  # (N, Cout)
    shift = params["beta"][None, :] - mean * scale          # (N, Cout)
    # one scalar per (n, channel-row): (N, Cout*H, 1) -- tiny, no W-tiling
    scale_rows = jnp.repeat(scale, H, axis=1)[:, :, None]
    shift_rows = jnp.repeat(shift, H, axis=1)[:, :, None]

    if inference:
        hr2x = norm_relu(y1r, scale_rows, shift_rows, H, W, Cout)
        return jnp.zeros((0,), jnp.float32), hr2x.reshape(N, Cout, H, W)

    # ---- fused IBNorm+ReLU + bilinear x2 upsample + concat(img) + conv2 + sigmoid
    l_mats, rt_mats = _conv2_matrices(params["w2"], H, W, Cout)
    w2_img = params["w2"][0, Cout:Cout + 3].reshape(27)     # cat order: hr, img
    hr2x, pred = norm_up_conv2(y1r, scale_rows, shift_rows, img_nchw,
                               l_mats, rt_mats, w2_img, params["b2"],
                               H, W, Cout)
    return pred[:, None, :, :], hr2x.reshape(N, Cout, H, W)


# --------------------------------- main --------------------------------------

if __name__ == "__main__":
    N, Cin, Cout, H, W = 2, 4, 8, 16, 16

    key = jax.random.PRNGKey(0)
    kx, kimg, kp = jax.random.split(key, 3)
    x = jax.random.normal(kx, (N, Cin, H, W), jnp.float32)            # NCHW
    img = jax.random.normal(kimg, (N, 3, 2 * H, 2 * W), jnp.float32)  # NCHW
    params = init_params(kp, Cin, Cout)

    fwd = jax.jit(functools.partial(layer2_for_hr_branch_forward, inference=False))
    pred_detail, hr2x = fwd(x, img, params)
    pred_detail = jax.block_until_ready(pred_detail)
    hr2x = jax.block_until_ready(hr2x)

    assert pred_detail.shape == (N, 1, 2 * H, 2 * W), pred_detail.shape
    assert hr2x.shape == (N, Cout, H, W), hr2x.shape
    assert bool(jnp.all(jnp.isfinite(pred_detail))) and bool(jnp.all(jnp.isfinite(hr2x)))
    assert bool(jnp.all((pred_detail >= 0.0) & (pred_detail <= 1.0)))  # sigmoid range
    assert bool(jnp.all(hr2x >= 0.0))                                   # ReLU range

    print("KERNEL_OK")
</pallas_src>

<mosaic_0001>
module attributes {stable_mosaic.version = 11 : i64} {
  func.func private @main(%arg0: i32) attributes {dimension_semantics = [#tpu.dimension_semantics<core_parallel>], iteration_bounds = array<i64: 2>, tpu.core_type = #tpu.core_type<sc_scalar_subcore>, window_params = []} {
    return
  }
}

module attributes {stable_mosaic.version = 11 : i64} {
  func.func private @main(%arg0: i32) attributes {dimension_semantics = [#tpu.dimension_semantics<core_parallel>], iteration_bounds = array<i64: 2>, tpu.core_type = #tpu.core_type<sc_scalar_subcore>, window_params = []} {
    return
  }
}

module attributes {stable_mosaic.version = 11 : i64} {
  func.func @_conv1_stats_kernel(%arg0: i32, %arg1: memref<1x16x16x4xbf16, #tpu.memory_space<vmem>>, %arg2: memref<36x8xbf16, #tpu.memory_space<vmem>>, %arg3: memref<1x8x256xf32, #tpu.memory_space<vmem>>, %arg4: memref<1x1x8xf32, #tpu.memory_space<vmem>>, %arg5: memref<1x1x8xf32, #tpu.memory_space<vmem>>, %arg6: memref<18x18x4xbf16, #tpu.memory_space<vmem>>, %arg7: memref<256x36xbf16, #tpu.memory_space<vmem>>) attributes {dimension_semantics = [#tpu.dimension_semantics<parallel>], iteration_bounds = array<i64: 2>, scalar_prefetch = 0 : i64, scratch_operands = 2 : i64, tpu.core_type = #tpu.core_type<tc>, window_params = [{transform_indices = @transform_0, window_bounds = array<i64: 1, 16, 16, 4>}, {pipeline_mode = #tpu.pipeline_mode<synchronous>, transform_indices = @transform_1, window_bounds = array<i64: 36, 8>}, {transform_indices = @transform_2, window_bounds = array<i64: 1, 8, 256>}, {transform_indices = @transform_3, window_bounds = array<i64: 1, 1, 8>}, {transform_indices = @transform_4, window_bounds = array<i64: 1, 1, 8>}]} {
    %cst = arith.constant 0.000000e+00 : bf16
    %0 = vector.broadcast %cst : bf16 to vector<18x18x4xbf16>
    %c0 = arith.constant 0 : index
    %c0_0 = arith.constant 0 : index
    %c0_1 = arith.constant 0 : index
    %1 = vector.load %arg6[%c0, %c0_0, %c0_1] : memref<18x18x4xbf16, #tpu.memory_space<vmem>>, vector<18x18x4xbf16>
    tpu.vector_store %arg6[%c0, %c0_0, %c0_1], %0 {strides = array<i32>} : memref<18x18x4xbf16, #tpu.memory_space<vmem>>, vector<18x18x4xbf16>,
    %c0_2 = arith.constant 0 : index
    %c0_3 = arith.constant 0 : index
    %c0_4 = arith.constant 0 : index
    %c0_5 = arith.constant 0 : index
    %2 = vector.load %arg1[%c0_2, %c0_3, %c0_4, %c0_5] : memref<1x16x16x4xbf16, #tpu.memory_space<vmem>>, vector<1x16x16x4xbf16>
    %3 = vector.shape_cast %2 : vector<1x16x16x4xbf16> to vector<16x16x4xbf16>
    %c1 = arith.constant 1 : index
    %c1_6 = arith.constant 1 : index
    %c0_7 = arith.constant 0 : index
    %4 = vector.load %arg6[%c1, %c1_6, %c0_7] : memref<18x18x4xbf16, #tpu.memory_space<vmem>>, vector<16x16x4xbf16>
    tpu.vector_store %arg6[%c1, %c1_6, %c0_7], %3 {strides = array<i32>} : memref<18x18x4xbf16, #tpu.memory_space<vmem>>, vector<16x16x4xbf16>,
    %c0_8 = arith.constant 0 : index
    %c0_9 = arith.constant 0 : index
    %c0_10 = arith.constant 0 : index
    %5 = vector.load %arg6[%c0_8, %c0_9, %c0_10] : memref<18x18x4xbf16, #tpu.memory_space<vmem>>, vector<18x18x4xbf16>
    %6 = vector.extract_strided_slice %5 {offsets = [0, 0, 0], sizes = [16, 16, 4], strides = [1, 1, 1]} : vector<18x18x4xbf16> to vector<16x16x4xbf16>
    %7 = vector.shape_cast %6 : vector<16x16x4xbf16> to vector<256x4xbf16>
    %c0_11 = arith.constant 0 : index
    %c0_12 = arith.constant 0 : index
    %8 = vector.load %arg7[%c0_11, %c0_12] : memref<256x36xbf16, #tpu.memory_space<vmem>>, vector<256x4xbf16>
    tpu.vector_store %arg7[%c0_11, %c0_12], %7 {strides = array<i32>} : memref<256x36xbf16, #tpu.memory_space<vmem>>, vector<256x4xbf16>,
    %9 = vector.extract_strided_slice %5 {offsets = [0, 1, 0], sizes = [16, 16, 4], strides = [1, 1, 1]} : vector<18x18x4xbf16> to vector<16x16x4xbf16>
    %10 = vector.shape_cast %9 : vector<16x16x4xbf16> to vector<256x4xbf16>
    %c0_13 = arith.constant 0 : index
    %c4 = arith.constant 4 : index
    %11 = vector.load %arg7[%c0_13, %c4] : memref<256x36xbf16, #tpu.memory_space<vmem>>, vector<256x4xbf16>
    tpu.vector_store %arg7[%c0_13, %c4], %10 {strides = array<i32>} : memref<256x36xbf16, #tpu.memory_space<vmem>>, vector<256x4xbf16>,
    %12 = vector.extract_strided_slice %5 {offsets = [0, 2, 0], sizes = [16, 16, 4], strides = [1, 1, 1]} : vector<18x18x4xbf16> to vector<16x16x4xbf16>
    %13 = vector.shape_cast %12 : vector<16x16x4xbf16> to vector<256x4xbf16>
    %c0_14 = arith.constant 0 : index
    %c8 = arith.constant 8 : index
    %14 = vector.load %arg7[%c0_14, %c8] : memref<256x36xbf16, #tpu.memory_space<vmem>>, vector<256x4xbf16>
    tpu.vector_store %arg7[%c0_14, %c8], %13 {strides = array<i32>} : memref<256x36xbf16, #tpu.memory_space<vmem>>, vector<256x4xbf16>,
    %15 = vector.extract_strided_slice %5 {offsets = [1, 0, 0], sizes = [16, 16, 4], strides = [1, 1, 1]} : vector<18x18x4xbf16> to vector<16x16x4xbf16>
    %16 = vector.shape_cast %15 : vector<16x16x4xbf16> to vector<256x4xbf16>
    %c0_15 = arith.constant 0 : index
    %c12 = arith.constant 12 : index
    %17 = vector.load %arg7[%c0_15, %c12] : memref<256x36xbf16, #tpu.memory_space<vmem>>, vector<256x4xbf16>
    tpu.vector_store %arg7[%c0_15, %c12], %16 {strides = array<i32>} : memref<256x36xbf16, #tpu.memory_space<vmem>>, vector<256x4xbf16>,
    %18 = vector.extract_strided_slice %5 {offsets = [1, 1, 0], sizes = [16, 16, 4], strides = [1, 1, 1]} : vector<18x18x4xbf16> to vector<16x16x4xbf16>
    %19 = vector.shape_cast %18 : vector<16x16x4xbf16> to vector<256x4xbf16>
    %c0_16 = arith.constant 0 : index
    %c16 = arith.constant 16 : index
    %20 = vector.load %arg7[%c0_16, %c16] : memref<256x36xbf16, #tpu.memory_space<vmem>>, vector<256x4xbf16>
    tpu.vector_store %arg7[%c0_16, %c16], %19 {strides = array<i32>} : memref<256x36xbf16, #tpu.memory_space<vmem>>, vector<256x4xbf16>,
    %21 = vector.extract_strided_slice %5 {offsets = [1, 2, 0], sizes = [16, 16, 4], strides = [1, 1, 1]} : vector<18x18x4xbf16> to vector<16x16x4xbf16>
    %22 = vector.shape_cast %21 : vector<16x16x4xbf16> to vector<256x4xbf16>
    %c0_17 = arith.constant 0 : index
    %c20 = arith.constant 20 : index
    %23 = vector.load %arg7[%c0_17, %c20] : memref<256x36xbf16, #tpu.memory_space<vmem>>, vector<256x4xbf16>
    tpu.vector_store %arg7[%c0_17, %c20], %22 {strides = array<i32>} : memref<256x36xbf16, #tpu.memory_space<vmem>>, vector<256x4xbf16>,
    %24 = vector.extract_strided_slice %5 {offsets = [2, 0, 0], sizes = [16, 16, 4], strides = [1, 1, 1]} : vector<18x18x4xbf16> to vector<16x16x4xbf16>
    %25 = vector.shape_cast %24 : vector<16x16x4xbf16> to vector<256x4xbf16>
    %c0_18 = arith.constant 0 : index
    %c24 = arith.constant 24 : index
    %26 = vector.load %arg7[%c0_18, %c24] : memref<256x36xbf16, #tpu.memory_space<vmem>>, vector<256x4xbf16>
    tpu.vector_store %arg7[%c0_18, %c24], %25 {strides = array<i32>} : memref<256x36xbf16, #tpu.memory_space<vmem>>, vector<256x4xbf16>,
    %27 = vector.extract_strided_slice %5 {offsets = [2, 1, 0], sizes = [16, 16, 4], strides = [1, 1, 1]} : vector<18x18x4xbf16> to vector<16x16x4xbf16>
    %28 = vector.shape_cast %27 : vector<16x16x4xbf16> to vector<256x4xbf16>
    %c0_19 = arith.constant 0 : index
    %c28 = arith.constant 28 : index
    %29 = vector.load %arg7[%c0_19, %c28] : memref<256x36xbf16, #tpu.memory_space<vmem>>, vector<256x4xbf16>
    tpu.vector_store %arg7[%c0_19, %c28], %28 {strides = array<i32>} : memref<256x36xbf16, #tpu.memory_space<vmem>>, vector<256x4xbf16>,
    %30 = vector.extract_strided_slice %5 {offsets = [2, 2, 0], sizes = [16, 16, 4], strides = [1, 1, 1]} : vector<18x18x4xbf16> to vector<16x16x4xbf16>
    %31 = vector.shape_cast %30 : vector<16x16x4xbf16> to vector<256x4xbf16>
    %c0_20 = arith.constant 0 : index
    %c32 = arith.constant 32 : index
    %32 = vector.load %arg7[%c0_20, %c32] : memref<256x36xbf16, #tpu.memory_space<vmem>>, vector<256x4xbf16>
    tpu.vector_store %arg7[%c0_20, %c32], %31 {strides = array<i32>} : memref<256x36xbf16, #tpu.memory_space<vmem>>, vector<256x4xbf16>,
    %c0_21 = arith.constant 0 : index
    %c0_22 = arith.constant 0 : index
    %33 = vector.load %arg7[%c0_21, %c0_22] : memref<256x36xbf16, #tpu.memory_space<vmem>>, vector<256x36xbf16>
    %c0_23 = arith.constant 0 : index
    %c0_24 = arith.constant 0 : index
    %34 = vector.load %arg2[%c0_23, %c0_24] : memref<36x8xbf16, #tpu.memory_space<vmem>>, vector<36x8xbf16>
    %cst_25 = arith.constant dense<0.000000e+00> : vector<256x8xf32>
    %35 = tpu.matmul %33, %34, %cst_25 {dimension_numbers = #tpu.dot_dimension_numbers<[1], [0], [0], [1], [0, 0, 1, 1], [], []>} : vector<256x36xbf16>, vector<36x8xbf16>, vector<256x8xf32> -> vector<256x8xf32>
    %cst_26 = arith.constant dense<0.000000e+00> : vector<8xf32>
    %36 = vector.multi_reduction <add>, %35, %cst_26 [0] : vector<256x8xf32> to vector<8xf32>
    %37 = vector.shape_cast %36 : vector<8xf32> to vector<1x8xf32>
    %c0_27 = arith.constant 0 : index
    %c0_28 = arith.constant 0 : index
    %c0_29 = arith.constant 0 : index
    %38 = vector.load %arg4[%c0_27, %c0_28, %c0_29] : memref<1x1x8xf32, #tpu.memory_space<vmem>>, vector<1x1x8xf32>
    %39 = vector.shape_cast %38 : vector<1x1x8xf32> to vector<1x8xf32>
    %40 = vector.shape_cast %37 : vector<1x8xf32> to vector<1x1x8xf32>
    tpu.vector_store %arg4[%c0_27, %c0_28, %c0_29], %40 {strides = array<i32>} : memref<1x1x8xf32, #tpu.memory_space<vmem>>, vector<1x1x8xf32>,
    %41 = arith.mulf %35, %35 : vector<256x8xf32>
    %cst_30 = arith.constant dense<0.000000e+00> : vector<8xf32>
    %42 = vector.multi_reduction <add>, %41, %cst_30 [0] : vector<256x8xf32> to vector<8xf32>
    %43 = vector.shape_cast %42 : vector<8xf32> to vector<1x8xf32>
    %c0_31 = arith.constant 0 : index
    %c0_32 = arith.constant 0 : index
    %c0_33 = arith.constant 0 : index
    %44 = vector.load %arg5[%c0_31, %c0_32, %c0_33] : memref<1x1x8xf32, #tpu.memory_space<vmem>>, vector<1x1x8xf32>
    %45 = vector.shape_cast %44 : vector<1x1x8xf32> to vector<1x8xf32>
    %46 = vector.shape_cast %43 : vector<1x8xf32> to vector<1x1x8xf32>
    tpu.vector_store %arg5[%c0_31, %c0_32, %c0_33], %46 {strides = array<i32>} : memref<1x1x8xf32, #tpu.memory_space<vmem>>, vector<1x1x8xf32>,
    %47 = tpu.transpose %35, [1, 0] : vector<256x8xf32> -> vector<8x256xf32>
    %c0_34 = arith.constant 0 : index
    %c0_35 = arith.constant 0 : index
    %c0_36 = arith.constant 0 : index
    %48 = vector.load %arg3[%c0_34, %c0_35, %c0_36] : memref<1x8x256xf32, #tpu.memory_space<vmem>>, vector<1x8x256xf32>
    %49 = vector.shape_cast %48 : vector<1x8x256xf32> to vector<8x256xf32>
    %50 = vector.shape_cast %47 : vector<8x256xf32> to vector<1x8x256xf32>
    tpu.vector_store %arg3[%c0_34, %c0_35, %c0_36], %50 {strides = array<i32>} : memref<1x8x256xf32, #tpu.memory_space<vmem>>, vector<1x8x256xf32>,
    return
  }
  func.func @transform_0(%arg0: i32) -> (i32, i32, i32, i32) {
    %c0_i32 = arith.constant 0 : i32
    %c0_i32_0 = arith.constant 0 : i32
    %c0_i32_1 = arith.constant 0 : i32
    %c0_i32_2 = arith.constant 0 : i32
    return %arg0, %c0_i32, %c0_i32_0, %c0_i32_1 : i32, i32, i32, i32
  }
  func.func @transform_1(%arg0: i32) -> (i32, i32) {
    %c0_i32 = arith.constant 0 : i32
    %c0_i32_0 = arith.constant 0 : i32
    %c0_i32_1 = arith.constant 0 : i32
    return %c0_i32, %c0_i32_0 : i32, i32
  }
  func.func @transform_2(%arg0: i32) -> (i32, i32, i32) {
    %c0_i32 = arith.constant 0 : i32
    %c0_i32_0 = arith.constant 0 : i32
    %c0_i32_1 = arith.constant 0 : i32
    return %arg0, %c0_i32, %c0_i32_0 : i32, i32, i32
  }
  func.func @transform_3(%arg0: i32) -> (i32, i32, i32) {
    %c0_i32 = arith.constant 0 : i32
    %c0_i32_0 = arith.constant 0 : i32
    %c0_i32_1 = arith.constant 0 : i32
    return %arg0, %c0_i32, %c0_i32_0 : i32, i32, i32
  }
  func.func @transform_4(%arg0: i32) -> (i32, i32, i32) {
    %c0_i32 = arith.constant 0 : i32
    %c0_i32_0 = arith.constant 0 : i32
    %c0_i32_1 = arith.constant 0 : i32
    return %arg0, %c0_i32, %c0_i32_0 : i32, i32, i32
  }
}

module attributes {stable_mosaic.version = 11 : i64} {
  func.func @_norm_up_conv2_kernel(%arg0: i32, %arg1: memref<1x128x16xf32, #tpu.memory_space<vmem>>, %arg2: memref<1x128x1xf32, #tpu.memory_space<vmem>>, %arg3: memref<1x128x1xf32, #tpu.memory_space<vmem>>, %arg4: memref<1x3x32x32xf32, #tpu.memory_space<vmem>>, %arg5: memref<3x32x128xbf16, #tpu.memory_space<vmem>>, %arg6: memref<3x16x32xbf16, #tpu.memory_space<vmem>>, %arg7: memref<27xf32, #tpu.memory_space<smem>>, %arg8: memref<1xf32, #tpu.memory_space<smem>>, %arg9: memref<1x128x16xf32, #tpu.memory_space<vmem>>, %arg10: memref<1x32x32xf32, #tpu.memory_space<vmem>>, %arg11: memref<34x34xf32, #tpu.memory_space<vmem>>) attributes {dimension_semantics = [#tpu.dimension_semantics<parallel>], iteration_bounds = array<i64: 2>, scalar_prefetch = 0 : i64, scratch_operands = 1 : i64, tpu.core_type = #tpu.core_type<tc>, window_params = [{transform_indices = @transform_0, window_bounds = array<i64: 1, 128, 16>}, {transform_indices = @transform_1, window_bounds = array<i64: 1, 128, 1>}, {transform_indices = @transform_2, window_bounds = array<i64: 1, 128, 1>}, {transform_indices = @transform_3, window_bounds = array<i64: 1, 3, 32, 32>}, {pipeline_mode = #tpu.pipeline_mode<synchronous>, transform_indices = @transform_4, window_bounds = array<i64: 3, 32, 128>}, {pipeline_mode = #tpu.pipeline_mode<synchronous>, transform_indices = @transform_5, window_bounds = array<i64: 3, 16, 32>}, {transform_indices = @transform_6, window_bounds = array<i64: 27>}, {transform_indices = @transform_7, window_bounds = array<i64: 1>}, {transform_indices = @transform_8, window_bounds = array<i64: 1, 128, 16>}, {transform_indices = @transform_9, window_bounds = array<i64: 1, 32, 32>}]} {
    %c0 = arith.constant 0 : index
    %c0_0 = arith.constant 0 : index
    %c0_1 = arith.constant 0 : index
    %0 = vector.load %arg1[%c0, %c0_0, %c0_1] : memref<1x128x16xf32, #tpu.memory_space<vmem>>, vector<1x128x16xf32>
    %1 = vector.shape_cast %0 : vector<1x128x16xf32> to vector<128x16xf32>
    %c0_2 = arith.constant 0 : index
    %c0_3 = arith.constant 0 : index
    %c0_4 = arith.constant 0 : index
    %2 = vector.load %arg2[%c0_2, %c0_3, %c0_4] : memref<1x128x1xf32, #tpu.memory_space<vmem>>, vector<1x128x1xf32>
    %3 = vector.shape_cast %2 : vector<1x128x1xf32> to vector<128x1xf32>
    %4 = vector.broadcast %3 : vector<128x1xf32> to vector<128x16xf32>
    %5 = arith.mulf %1, %4 : vector<128x16xf32>
    %c0_5 = arith.constant 0 : index
    %c0_6 = arith.constant 0 : index
    %c0_7 = arith.constant 0 : index
    %6 = vector.load %arg3[%c0_5, %c0_6, %c0_7] : memref<1x128x1xf32, #tpu.memory_space<vmem>>, vector<1x128x1xf32>
    %7 = vector.shape_cast %6 : vector<1x128x1xf32> to vector<128x1xf32>
    %8 = vector.broadcast %7 : vector<128x1xf32> to vector<128x16xf32>
    %9 = arith.addf %5, %8 : vector<128x16xf32>
    %cst = arith.constant 0.000000e+00 : f32
    %10 = vector.broadcast %cst : f32 to vector<128x16xf32>
    %11 = arith.maximumf %9, %10 : vector<128x16xf32>
    %c0_8 = arith.constant 0 : index
    %c0_9 = arith.constant 0 : index
    %c0_10 = arith.constant 0 : index
    %12 = vector.load %arg9[%c0_8, %c0_9, %c0_10] : memref<1x128x16xf32, #tpu.memory_space<vmem>>, vector<1x128x16xf32>
    %13 = vector.shape_cast %12 : vector<1x128x16xf32> to vector<128x16xf32>
    %14 = vector.shape_cast %11 : vector<128x16xf32> to vector<1x128x16xf32>
    tpu.vector_store %arg9[%c0_8, %c0_9, %c0_10], %14 {strides = array<i32>} : memref<1x128x16xf32, #tpu.memory_space<vmem>>, vector<1x128x16xf32>,
    %15 = arith.truncf %11 : vector<128x16xf32> to vector<128x16xbf16>
    %cst_11 = arith.constant 0.000000e+00 : f32
    %16 = vector.broadcast %cst_11 : f32 to vector<32x32xf32>
    %c0_12 = arith.constant 0 : index
    %17 = memref.load %arg8[%c0_12] : memref<1xf32, #tpu.memory_space<smem>>
    %18 = vector.broadcast %17 : f32 to vector<32x32xf32>
    %19 = arith.addf %16, %18 : vector<32x32xf32>
    %c0_13 = arith.constant 0 : index
    %c0_14 = arith.constant 0 : index
    %c0_15 = arith.constant 0 : index
    %20 = vector.load %arg5[%c0_13, %c0_14, %c0_15] : memref<3x32x128xbf16, #tpu.memory_space<vmem>>, vector<1x32x128xbf16>
    %21 = vector.shape_cast %20 : vector<1x32x128xbf16> to vector<32x128xbf16>
    %cst_16 = arith.constant dense<0.000000e+00> : vector<32x16xf32>
    %22 = tpu.matmul %21, %15, %cst_16 {dimension_numbers = #tpu.dot_dimension_numbers<[1], [0], [0], [1], [0, 0, 1, 1], [], []>} : vector<32x128xbf16>, vector<128x16xbf16>, vector<32x16xf32> -> vector<32x16xf32>
    %23 = arith.truncf %22 : vector<32x16xf32> to vector<32x16xbf16>
    %c0_17 = arith.constant 0 : index
    %c0_18 = arith.constant 0 : index
    %c0_19 = arith.constant 0 : index
    %24 = vector.load %arg6[%c0_17, %c0_18, %c0_19] : memref<3x16x32xbf16, #tpu.memory_space<vmem>>, vector<1x16x32xbf16>
    %25 = vector.shape_cast %24 : vector<1x16x32xbf16> to vector<16x32xbf16>
    %cst_20 = arith.constant dense<0.000000e+00> : vector<32x32xf32>
    %26 = tpu.matmul %23, %25, %cst_20 {dimension_numbers = #tpu.dot_dimension_numbers<[1], [0], [0], [1], [0, 0, 1, 1], [], []>} : vector<32x16xbf16>, vector<16x32xbf16>, vector<32x32xf32> -> vector<32x32xf32>
    %27 = arith.addf %19, %26 : vector<32x32xf32>
    %c1 = arith.constant 1 : index
    %c0_21 = arith.constant 0 : index
    %c0_22 = arith.constant 0 : index
    %28 = vector.load %arg5[%c1, %c0_21, %c0_22] : memref<3x32x128xbf16, #tpu.memory_space<vmem>>, vector<1x32x128xbf16>
    %29 = vector.shape_cast %28 : vector<1x32x128xbf16> to vector<32x128xbf16>
    %cst_23 = arith.constant dense<0.000000e+00> : vector<32x16xf32>
    %30 = tpu.matmul %29, %15, %cst_23 {dimension_numbers = #tpu.dot_dimension_numbers<[1], [0], [0], [1], [0, 0, 1, 1], [], []>} : vector<32x128xbf16>, vector<128x16xbf16>, vector<32x16xf32> -> vector<32x16xf32>
    %31 = arith.truncf %30 : vector<32x16xf32> to vector<32x16xbf16>
    %c1_24 = arith.constant 1 : index
    %c0_25 = arith.constant 0 : index
    %c0_26 = arith.constant 0 : index
    %32 = vector.load %arg6[%c1_24, %c0_25, %c0_26] : memref<3x16x32xbf16, #tpu.memory_space<vmem>>, vector<1x16x32xbf16>
    %33 = vector.shape_cast %32 : vector<1x16x32xbf16> to vector<16x32xbf16>
    %cst_27 = arith.constant dense<0.000000e+00> : vector<32x32xf32>
    %34 = tpu.matmul %31, %33, %cst_27 {dimension_numbers = #tpu.dot_dimension_numbers<[1], [0], [0], [1], [0, 0, 1, 1], [], []>} : vector<32x16xbf16>, vector<16x32xbf16>, vector<32x32xf32> -> vector<32x32xf32>
    %35 = arith.addf %27, %34 : vector<32x32xf32>
    %c2 = arith.constant 2 : index
    %c0_28 = arith.constant 0 : index
    %c0_29 = arith.constant 0 : index
    %36 = vector.load %arg5[%c2, %c0_28, %c0_29] : memref<3x32x128xbf16, #tpu.memory_space<vmem>>, vector<1x32x128xbf16>
    %37 = vector.shape_cast %36 : vector<1x32x128xbf16> to vector<32x128xbf16>
    %cst_30 = arith.constant dense<0.000000e+00> : vector<32x16xf32>
    %38 = tpu.matmul %37, %15, %cst_30 {dimension_numbers = #tpu.dot_dimension_numbers<[1], [0], [0], [1], [0, 0, 1, 1], [], []>} : vector<32x128xbf16>, vector<128x16xbf16>, vector<32x16xf32> -> vector<32x16xf32>
    %39 = arith.truncf %38 : vector<32x16xf32> to vector<32x16xbf16>
    %c2_31 = arith.constant 2 : index
    %c0_32 = arith.constant 0 : index
    %c0_33 = arith.constant 0 : index
    %40 = vector.load %arg6[%c2_31, %c0_32, %c0_33] : memref<3x16x32xbf16, #tpu.memory_space<vmem>>, vector<1x16x32xbf16>
    %41 = vector.shape_cast %40 : vector<1x16x32xbf16> to vector<16x32xbf16>
    %cst_34 = arith.constant dense<0.000000e+00> : vector<32x32xf32>
    %42 = tpu.matmul %39, %41, %cst_34 {dimension_numbers = #tpu.dot_dimension_numbers<[1], [0], [0], [1], [0, 0, 1, 1], [], []>} : vector<32x16xbf16>, vector<16x32xbf16>, vector<32x32xf32> -> vector<32x32xf32>
    %43 = arith.addf %35, %42 : vector<32x32xf32>
    %cst_35 = arith.constant 0.000000e+00 : f32
    %44 = vector.broadcast %cst_35 : f32 to vector<34x34xf32>
    %c0_36 = arith.constant 0 : index
    %c0_37 = arith.constant 0 : index
    %45 = vector.load %arg11[%c0_36, %c0_37] : memref<34x34xf32, #tpu.memory_space<vmem>>, vector<34x34xf32>
    tpu.vector_store %arg11[%c0_36, %c0_37], %44 {strides = array<i32>} : memref<34x34xf32, #tpu.memory_space<vmem>>, vector<34x34xf32>,
    %c0_38 = arith.constant 0 : index
    %c0_39 = arith.constant 0 : index
    %c0_40 = arith.constant 0 : index
    %c0_41 = arith.constant 0 : index
    %46 = vector.load %arg4[%c0_38, %c0_39, %c0_40, %c0_41] : memref<1x3x32x32xf32, #tpu.memory_space<vmem>>, vector<1x1x32x32xf32>
    %47 = vector.shape_cast %46 : vector<1x1x32x32xf32> to vector<32x32xf32>
    %c1_42 = arith.constant 1 : index
    %c1_43 = arith.constant 1 : index
    %48 = vector.load %arg11[%c1_42, %c1_43] : memref<34x34xf32, #tpu.memory_space<vmem>>, vector<32x32xf32>
    tpu.vector_store %arg11[%c1_42, %c1_43], %47 {strides = array<i32>} : memref<34x34xf32, #tpu.memory_space<vmem>>, vector<32x32xf32>,
    %c0_44 = arith.constant 0 : index
    %c0_45 = arith.constant 0 : index
    %49 = vector.load %arg11[%c0_44, %c0_45] : memref<34x34xf32, #tpu.memory_space<vmem>>, vector<34x34xf32>
    %c0_46 = arith.constant 0 : index
    %50 = memref.load %arg7[%c0_46] : memref<27xf32, #tpu.memory_space<smem>>
    %51 = vector.extract_strided_slice %49 {offsets = [0, 0], sizes = [32, 32], strides = [1, 1]} : vector<34x34xf32> to vector<32x32xf32>
    %52 = vector.broadcast %50 : f32 to vector<32x32xf32>
    %53 = arith.mulf %52, %51 : vector<32x32xf32>
    %54 = arith.addf %43, %53 : vector<32x32xf32>
    %c1_47 = arith.constant 1 : index
    %55 = memref.load %arg7[%c1_47] : memref<27xf32, #tpu.memory_space<smem>>
    %56 = vector.extract_strided_slice %49 {offsets = [0, 1], sizes = [32, 32], strides = [1, 1]} : vector<34x34xf32> to vector<32x32xf32>
    %57 = vector.broadcast %55 : f32 to vector<32x32xf32>
    %58 = arith.mulf %57, %56 : vector<32x32xf32>
    %59 = arith.addf %54, %58 : vector<32x32xf32>
    %c2_48 = arith.constant 2 : index
    %60 = memref.load %arg7[%c2_48] : memref<27xf32, #tpu.memory_space<smem>>
    %61 = vector.extract_strided_slice %49 {offsets = [0, 2], sizes = [32, 32], strides = [1, 1]} : vector<34x34xf32> to vector<32x32xf32>
    %62 = vector.broadcast %60 : f32 to vector<32x32xf32>
    %63 = arith.mulf %62, %61 : vector<32x32xf32>
    %64 = arith.addf %59, %63 : vector<32x32xf32>
    %c3 = arith.constant 3 : index
    %65 = memref.load %arg7[%c3] : memref<27xf32, #tpu.memory_space<smem>>
    %66 = vector.extract_strided_slice %49 {offsets = [1, 0], sizes = [32, 32], strides = [1, 1]} : vector<34x34xf32> to vector<32x32xf32>
    %67 = vector.broadcast %65 : f32 to vector<32x32xf32>
    %68 = arith.mulf %67, %66 : vector<32x32xf32>
    %69 = arith.addf %64, %68 : vector<32x32xf32>
    %c4 = arith.constant 4 : index
    %70 = memref.load %arg7[%c4] : memref<27xf32, #tpu.memory_space<smem>>
    %71 = vector.extract_strided_slice %49 {offsets = [1, 1], sizes = [32, 32], strides = [1, 1]} : vector<34x34xf32> to vector<32x32xf32>
    %72 = vector.broadcast %70 : f32 to vector<32x32xf32>
    %73 = arith.mulf %72, %71 : vector<32x32xf32>
    %74 = arith.addf %69, %73 : vector<32x32xf32>
    %c5 = arith.constant 5 : index
    %75 = memref.load %arg7[%c5] : memref<27xf32, #tpu.memory_space<smem>>
    %76 = vector.extract_strided_slice %49 {offsets = [1, 2], sizes = [32, 32], strides = [1, 1]} : vector<34x34xf32> to vector<32x32xf32>
    %77 = vector.broadcast %75 : f32 to vector<32x32xf32>
    %78 = arith.mulf %77, %76 : vector<32x32xf32>
    %79 = arith.addf %74, %78 : vector<32x32xf32>
    %c6 = arith.constant 6 : index
    %80 = memref.load %arg7[%c6] : memref<27xf32, #tpu.memory_space<smem>>
    %81 = vector.extract_strided_slice %49 {offsets = [2, 0], sizes = [32, 32], strides = [1, 1]} : vector<34x34xf32> to vector<32x32xf32>
    %82 = vector.broadcast %80 : f32 to vector<32x32xf32>
    %83 = arith.mulf %82, %81 : vector<32x32xf32>
    %84 = arith.addf %79, %83 : vector<32x32xf32>
    %c7 = arith.constant 7 : index
    %85 = memref.load %arg7[%c7] : memref<27xf32, #tpu.memory_space<smem>>
    %86 = vector.extract_strided_slice %49 {offsets = [2, 1], sizes = [32, 32], strides = [1, 1]} : vector<34x34xf32> to vector<32x32xf32>
    %87 = vector.broadcast %85 : f32 to vector<32x32xf32>
    %88 = arith.mulf %87, %86 : vector<32x32xf32>
    %89 = arith.addf %84, %88 : vector<32x32xf32>
    %c8 = arith.constant 8 : index
    %90 = memref.load %arg7[%c8] : memref<27xf32, #tpu.memory_space<smem>>
    %91 = vector.extract_strided_slice %49 {offsets = [2, 2], sizes = [32, 32], strides = [1, 1]} : vector<34x34xf32> to vector<32x32xf32>
    %92 = vector.broadcast %90 : f32 to vector<32x32xf32>
    %93 = arith.mulf %92, %91 : vector<32x32xf32>
    %94 = arith.addf %89, %93 : vector<32x32xf32>
    %c0_49 = arith.constant 0 : index
    %c1_50 = arith.constant 1 : index
    %c0_51 = arith.constant 0 : index
    %c0_52 = arith.constant 0 : index
    %95 = vector.load %arg4[%c0_49, %c1_50, %c0_51, %c0_52] : memref<1x3x32x32xf32, #tpu.memory_space<vmem>>, vector<1x1x32x32xf32>
    %96 = vector.shape_cast %95 : vector<1x1x32x32xf32> to vector<32x32xf32>
    %c1_53 = arith.constant 1 : index
    %c1_54 = arith.constant 1 : index
    %97 = vector.load %arg11[%c1_53, %c1_54] : memref<34x34xf32, #tpu.memory_space<vmem>>, vector<32x32xf32>
    tpu.vector_store %arg11[%c1_53, %c1_54], %96 {strides = array<i32>} : memref<34x34xf32, #tpu.memory_space<vmem>>, vector<32x32xf32>,
    %c0_55 = arith.constant 0 : index
    %c0_56 = arith.constant 0 : index
    %98 = vector.load %arg11[%c0_55, %c0_56] : memref<34x34xf32, #tpu.memory_space<vmem>>, vector<34x34xf32>
    %c9 = arith.constant 9 : index
    %99 = memref.load %arg7[%c9] : memref<27xf32, #tpu.memory_space<smem>>
    %100 = vector.extract_strided_slice %98 {offsets = [0, 0], sizes = [32, 32], strides = [1, 1]} : vector<34x34xf32> to vector<32x32xf32>
    %101 = vector.broadcast %99 : f32 to vector<32x32xf32>
    %102 = arith.mulf %101, %100 : vector<32x32xf32>
    %103 = arith.addf %94, %102 : vector<32x32xf32>
    %c10 = arith.constant 10 : index
    %104 = memref.load %arg7[%c10] : memref<27xf32, #tpu.memory_space<smem>>
    %105 = vector.extract_strided_slice %98 {offsets = [0, 1], sizes = [32, 32], strides = [1, 1]} : vector<34x34xf32> to vector<32x32xf32>
    %106 = vector.broadcast %104 : f32 to vector<32x32xf32>
    %107 = arith.mulf %106, %105 : vector<32x32xf32>
    %108 = arith.addf %103, %107 : vector<32x32xf32>
    %c11 = arith.constant 11 : index
    %109 = memref.load %arg7[%c11] : memref<27xf32, #tpu.memory_space<smem>>
    %110 = vector.extract_strided_slice %98 {offsets = [0, 2], sizes = [32, 32], strides = [1, 1]} : vector<34x34xf32> to vector<32x32xf32>
    %111 = vector.broadcast %109 : f32 to vector<32x32xf32>
    %112 = arith.mulf %111, %110 : vector<32x32xf32>
    %113 = arith.addf %108, %112 : vector<32x32xf32>
    %c12 = arith.constant 12 : index
    %114 = memref.load %arg7[%c12] : memref<27xf32, #tpu.memory_space<smem>>
    %115 = vector.extract_strided_slice %98 {offsets = [1, 0], sizes = [32, 32], strides = [1, 1]} : vector<34x34xf32> to vector<32x32xf32>
    %116 = vector.broadcast %114 : f32 to vector<32x32xf32>
    %117 = arith.mulf %116, %115 : vector<32x32xf32>
    %118 = arith.addf %113, %117 : vector<32x32xf32>
    %c13 = arith.constant 13 : index
    %119 = memref.load %arg7[%c13] : memref<27xf32, #tpu.memory_space<smem>>
    %120 = vector.extract_strided_slice %98 {offsets = [1, 1], sizes = [32, 32], strides = [1, 1]} : vector<34x34xf32> to vector<32x32xf32>
    %121 = vector.broadcast %119 : f32 to vector<32x32xf32>
    %122 = arith.mulf %121, %120 : vector<32x32xf32>
    %123 = arith.addf %118, %122 : vector<32x32xf32>
    %c14 = arith.constant 14 : index
    %124 = memref.load %arg7[%c14] : memref<27xf32, #tpu.memory_space<smem>>
    %125 = vector.extract_strided_slice %98 {offsets = [1, 2], sizes = [32, 32], strides = [1, 1]} : vector<34x34xf32> to vector<32x32xf32>
    %126 = vector.broadcast %124 : f32 to vector<32x32xf32>
    %127 = arith.mulf %126, %125 : vector<32x32xf32>
    %128 = arith.addf %123, %127 : vector<32x32xf32>
    %c15 = arith.constant 15 : index
    %129 = memref.load %arg7[%c15] : memref<27xf32, #tpu.memory_space<smem>>
    %130 = vector.extract_strided_slice %98 {offsets = [2, 0], sizes = [32, 32], strides = [1, 1]} : vector<34x34xf32> to vector<32x32xf32>
    %131 = vector.broadcast %129 : f32 to vector<32x32xf32>
    %132 = arith.mulf %131, %130 : vector<32x32xf32>
    %133 = arith.addf %128, %132 : vector<32x32xf32>
    %c16 = arith.constant 16 : index
    %134 = memref.load %arg7[%c16] : memref<27xf32, #tpu.memory_space<smem>>
    %135 = vector.extract_strided_slice %98 {offsets = [2, 1], sizes = [32, 32], strides = [1, 1]} : vector<34x34xf32> to vector<32x32xf32>
    %136 = vector.broadcast %134 : f32 to vector<32x32xf32>
    %137 = arith.mulf %136, %135 : vector<32x32xf32>
    %138 = arith.addf %133, %137 : vector<32x32xf32>
    %c17 = arith.constant 17 : index
    %139 = memref.load %arg7[%c17] : memref<27xf32, #tpu.memory_space<smem>>
    %140 = vector.extract_strided_slice %98 {offsets = [2, 2], sizes = [32, 32], strides = [1, 1]} : vector<34x34xf32> to vector<32x32xf32>
    %141 = vector.broadcast %139 : f32 to vector<32x32xf32>
    %142 = arith.mulf %141, %140 : vector<32x32xf32>
    %143 = arith.addf %138, %142 : vector<32x32xf32>
    %c0_57 = arith.constant 0 : index
    %c2_58 = arith.constant 2 : index
    %c0_59 = arith.constant 0 : index
    %c0_60 = arith.constant 0 : index
    %144 = vector.load %arg4[%c0_57, %c2_58, %c0_59, %c0_60] : memref<1x3x32x32xf32, #tpu.memory_space<vmem>>, vector<1x1x32x32xf32>
    %145 = vector.shape_cast %144 : vector<1x1x32x32xf32> to vector<32x32xf32>
    %c1_61 = arith.constant 1 : index
    %c1_62 = arith.constant 1 : index
    %146 = vector.load %arg11[%c1_61, %c1_62] : memref<34x34xf32, #tpu.memory_space<vmem>>, vector<32x32xf32>
    tpu.vector_store %arg11[%c1_61, %c1_62], %145 {strides = array<i32>} : memref<34x34xf32, #tpu.memory_space<vmem>>, vector<32x32xf32>,
    %c0_63 = arith.constant 0 : index
    %c0_64 = arith.constant 0 : index
    %147 = vector.load %arg11[%c0_63, %c0_64] : memref<34x34xf32, #tpu.memory_space<vmem>>, vector<34x34xf32>
    %c18 = arith.constant 18 : index
    %148 = memref.load %arg7[%c18] : memref<27xf32, #tpu.memory_space<smem>>
    %149 = vector.extract_strided_slice %147 {offsets = [0, 0], sizes = [32, 32], strides = [1, 1]} : vector<34x34xf32> to vector<32x32xf32>
    %150 = vector.broadcast %148 : f32 to vector<32x32xf32>
    %151 = arith.mulf %150, %149 : vector<32x32xf32>
    %152 = arith.addf %143, %151 : vector<32x32xf32>
    %c19 = arith.constant 19 : index
    %153 = memref.load %arg7[%c19] : memref<27xf32, #tpu.memory_space<smem>>
    %154 = vector.extract_strided_slice %147 {offsets = [0, 1], sizes = [32, 32], strides = [1, 1]} : vector<34x34xf32> to vector<32x32xf32>
    %155 = vector.broadcast %153 : f32 to vector<32x32xf32>
    %156 = arith.mulf %155, %154 : vector<32x32xf32>
    %157 = arith.addf %152, %156 : vector<32x32xf32>
    %c20 = arith.constant 20 : index
    %158 = memref.load %arg7[%c20] : memref<27xf32, #tpu.memory_space<smem>>
    %159 = vector.extract_strided_slice %147 {offsets = [0, 2], sizes = [32, 32], strides = [1, 1]} : vector<34x34xf32> to vector<32x32xf32>
    %160 = vector.broadcast %158 : f32 to vector<32x32xf32>
    %161 = arith.mulf %160, %159 : vector<32x32xf32>
    %162 = arith.addf %157, %161 : vector<32x32xf32>
    %c21 = arith.constant 21 : index
    %163 = memref.load %arg7[%c21] : memref<27xf32, #tpu.memory_space<smem>>
    %164 = vector.extract_strided_slice %147 {offsets = [1, 0], sizes = [32, 32], strides = [1, 1]} : vector<34x34xf32> to vector<32x32xf32>
    %165 = vector.broadcast %163 : f32 to vector<32x32xf32>
    %166 = arith.mulf %165, %164 : vector<32x32xf32>
    %167 = arith.addf %162, %166 : vector<32x32xf32>
    %c22 = arith.constant 22 : index
    %168 = memref.load %arg7[%c22] : memref<27xf32, #tpu.memory_space<smem>>
    %169 = vector.extract_strided_slice %147 {offsets = [1, 1], sizes = [32, 32], strides = [1, 1]} : vector<34x34xf32> to vector<32x32xf32>
    %170 = vector.broadcast %168 : f32 to vector<32x32xf32>
    %171 = arith.mulf %170, %169 : vector<32x32xf32>
    %172 = arith.addf %167, %171 : vector<32x32xf32>
    %c23 = arith.constant 23 : index
    %173 = memref.load %arg7[%c23] : memref<27xf32, #tpu.memory_space<smem>>
    %174 = vector.extract_strided_slice %147 {offsets = [1, 2], sizes = [32, 32], strides = [1, 1]} : vector<34x34xf32> to vector<32x32xf32>
    %175 = vector.broadcast %173 : f32 to vector<32x32xf32>
    %176 = arith.mulf %175, %174 : vector<32x32xf32>
    %177 = arith.addf %172, %176 : vector<32x32xf32>
    %c24 = arith.constant 24 : index
    %178 = memref.load %arg7[%c24] : memref<27xf32, #tpu.memory_space<smem>>
    %179 = vector.extract_strided_slice %147 {offsets = [2, 0], sizes = [32, 32], strides = [1, 1]} : vector<34x34xf32> to vector<32x32xf32>
    %180 = vector.broadcast %178 : f32 to vector<32x32xf32>
    %181 = arith.mulf %180, %179 : vector<32x32xf32>
    %182 = arith.addf %177, %181 : vector<32x32xf32>
    %c25 = arith.constant 25 : index
    %183 = memref.load %arg7[%c25] : memref<27xf32, #tpu.memory_space<smem>>
    %184 = vector.extract_strided_slice %147 {offsets = [2, 1], sizes = [32, 32], strides = [1, 1]} : vector<34x34xf32> to vector<32x32xf32>
    %185 = vector.broadcast %183 : f32 to vector<32x32xf32>
    %186 = arith.mulf %185, %184 : vector<32x32xf32>
    %187 = arith.addf %182, %186 : vector<32x32xf32>
    %c26 = arith.constant 26 : index
    %188 = memref.load %arg7[%c26] : memref<27xf32, #tpu.memory_space<smem>>
    %189 = vector.extract_strided_slice %147 {offsets = [2, 2], sizes = [32, 32], strides = [1, 1]} : vector<34x34xf32> to vector<32x32xf32>
    %190 = vector.broadcast %188 : f32 to vector<32x32xf32>
    %191 = arith.mulf %190, %189 : vector<32x32xf32>
    %192 = arith.addf %187, %191 : vector<32x32xf32>
    %193 = arith.negf %192 : vector<32x32xf32>
    %194 = math.exp %193 : vector<32x32xf32>
    %cst_65 = arith.constant 1.000000e+00 : f32
    %195 = vector.broadcast %cst_65 : f32 to vector<32x32xf32>
    %196 = arith.addf %195, %194 : vector<32x32xf32>
    %197 = arith.divf %195, %196 : vector<32x32xf32>
    %c0_66 = arith.constant 0 : index
    %c0_67 = arith.constant 0 : index
    %c0_68 = arith.constant 0 : index
    %198 = vector.load %arg10[%c0_66, %c0_67, %c0_68] : memref<1x32x32xf32, #tpu.memory_space<vmem>>, vector<1x32x32xf32>
    %199 = vector.shape_cast %198 : vector<1x32x32xf32> to vector<32x32xf32>
    %200 = vector.shape_cast %197 : vector<32x32xf32> to vector<1x32x32xf32>
    tpu.vector_store %arg10[%c0_66, %c0_67, %c0_68], %200 {strides = array<i32>} : memref<1x32x32xf32, #tpu.memory_space<vmem>>, vector<1x32x32xf32>,
    return
  }
  func.func @transform_0(%arg0: i32) -> (i32, i32, i32) {
    %c0_i32 = arith.constant 0 : i32
    %c0_i32_0 = arith.constant 0 : i32
    %c0_i32_1 = arith.constant 0 : i32
    return %arg0, %c0_i32, %c0_i32_0 : i32, i32, i32
  }
  func.func @transform_1(%arg0: i32) -> (i32, i32, i32) {
    %c0_i32 = arith.constant 0 : i32
    %c0_i32_0 = arith.constant 0 : i32
    %c0_i32_1 = arith.constant 0 : i32
    return %arg0, %c0_i32, %c0_i32_0 : i32, i32, i32
  }
  func.func @transform_2(%arg0: i32) -> (i32, i32, i32) {
    %c0_i32 = arith.constant 0 : i32
    %c0_i32_0 = arith.constant 0 : i32
    %c0_i32_1 = arith.constant 0 : i32
    return %arg0, %c0_i32, %c0_i32_0 : i32, i32, i32
  }
  func.func @transform_3(%arg0: i32) -> (i32, i32, i32, i32) {
    %c0_i32 = arith.constant 0 : i32
    %c0_i32_0 = arith.constant 0 : i32
    %c0_i32_1 = arith.constant 0 : i32
    %c0_i32_2 = arith.constant 0 : i32
    return %arg0, %c0_i32, %c0_i32_0, %c0_i32_1 : i32, i32, i32, i32
  }
  func.func @transform_4(%arg0: i32) -> (i32, i32, i32) {
    %c0_i32 = arith.constant 0 : i32
    %c0_i32_0 = arith.constant 0 : i32
    %c0_i32_1 = arith.constant 0 : i32
    %c0_i32_2 = arith.constant 0 : i32
    return %c0_i32, %c0_i32_0, %c0_i32_1 : i32, i32, i32
  }
  func.func @transform_5(%arg0: i32) -> (i32, i32, i32) {
    %c0_i32 = arith.constant 0 : i32
    %c0_i32_0 = arith.constant 0 : i32
    %c0_i32_1 = arith.constant 0 : i32
    %c0_i32_2 = arith.constant 0 : i32
    return %c0_i32, %c0_i32_0, %c0_i32_1 : i32, i32, i32
  }
  func.func @transform_6(%arg0: i32) -> i32 {
    %c0_i32 = arith.constant 0 : i32
    %c0_i32_0 = arith.constant 0 : i32
    return %c0_i32 : i32
  }
  func.func @transform_7(%arg0: i32) -> i32 {
    %c0_i32 = arith.constant 0 : i32
    %c0_i32_0 = arith.constant 0 : i32
    return %c0_i32 : i32
  }
  func.func @transform_8(%arg0: i32) -> (i32, i32, i32) {
    %c0_i32 = arith.constant 0 : i32
    %c0_i32_0 = arith.constant 0 : i32
    %c0_i32_1 = arith.constant 0 : i32
    return %arg0, %c0_i32, %c0_i32_0 : i32, i32, i32
  }
  func.func @transform_9(%arg0: i32) -> (i32, i32, i32) {
    %c0_i32 = arith.constant 0 : i32
    %c0_i32_0 = arith.constant 0 : i32
    %c0_i32_1 = arith.constant 0 : i32
    return %arg0, %c0_i32, %c0_i32_0 : i32, i32, i32
  }
}

</mosaic_0001>

<llo_original>
// kernel: squeeze.151
$region0: #{squeeze.151}
  %s0 = inlined_call_operand.vmem [shape: f32[1,3,3,3], index: 0, kind: input, shape index: {}]
  %s1 = inlined_call_operand.vmem [shape: f32[27], index: 1, kind: output, shape index: {}]
  $region1: #{squeeze.151} parent=0
    #allocation0 [shape = 'u8[4096]{0}', space=vmem, size = 0x1000, scoped, tag = 'scoped mem for output reshape']
    #allocation1 [shape = 'u8[12288]{0}', space=vmem, size = 0x3000, scoped, tag = 'scoped mem for input reshape']
    %s3 = sshllo.u32 0, 4
    %s4 = smul.addr 4, 2
    %s5 = scalar_lea.vmem %s0, %s4
    %v6 = vld [vmem:[%s5] sm:%s3]
    %s7 = scalar_lea.vmem [#allocation1], 16
    %8 = vst [vmem:[%s7] sm:%s3] %v6
    %s9 = scalar_lea.vmem %s0, 4
    %v10 = vld [vmem:[%s9] sm:%s3]
    %s11 = scalar_lea.vmem [#allocation1], 8
    %12 = vst [vmem:[%s11] sm:%s3] %v10
    %v13 = vld [vmem:[%s0] sm:%s3]
    %14 = vst [vmem:[#allocation1] sm:%s3] %v13
    %v15 = vld [vmem:[#allocation1] sm:$0x1]
    %vm16 = vcmask 23552
    %17 = vst.msk [vmem:[#allocation0] sm:$0x1] %vm16, %v15
    %s18 = scalar_lea.vmem [#allocation1], 18
    %v19 = vld [vmem:[%s18] sm:$0x1]
    %20 = vrot.lane.b32.xlu0 %v19, 24
    %v21 = vpop.permute.xlu0 %20
    %vm22 = vcmask 220352
    %23 = vst.msk [vmem:[#allocation0] sm:$0x1] %vm22, %v21
    %s24 = scalar_lea.vmem [#allocation1], 17
    %v25 = vld [vmem:[%s24] sm:$0x1]
    %26 = vrot.lane.b32.xlu0 %v25, 21
    %v27 = vpop.permute.xlu0 %26
    %vm28 = vcmask 195752
    %29 = vst.msk [vmem:[#allocation0] sm:$0x1] %vm28, %v27
    %s30 = scalar_lea.vmem [#allocation1], 16
    %v31 = vld [vmem:[%s30] sm:$0x1]
    %32 = vrot.lane.b32.xlu0 %v31, 18
    %v33 = vpop.permute.xlu0 %32
    %vm34 = vcmask 171152
    %35 = vst.msk [vmem:[#allocation0] sm:$0x1] %vm34, %v33
    %s36 = scalar_lea.vmem [#allocation1], 10
    %v37 = vld [vmem:[%s36] sm:$0x1]
    %38 = vrot.lane.b32.xlu0 %v37, 15
    %v39 = vpop.permute.xlu0 %38
    %vm40 = vcmask 146552
    %41 = vst.msk [vmem:[#allocation0] sm:$0x1] %vm40, %v39
    %s42 = scalar_lea.vmem [#allocation1], 9
    %v43 = vld [vmem:[%s42] sm:$0x1]
    %44 = vrot.lane.b32.xlu0 %v43, 12
    %v45 = vpop.permute.xlu0 %44
    %vm46 = vcmask 121952
    %47 = vst.msk [vmem:[#allocation0] sm:$0x1] %vm46, %v45
    %s48 = scalar_lea.vmem [#allocation1], 8
    %v49 = vld [vmem:[%s48] sm:$0x1]
    %50 = vrot.lane.b32.xlu0 %v49, 9
    %v51 = vpop.permute.xlu0 %50
    %vm52 = vcmask 97352
    %53 = vst.msk [vmem:[#allocation0] sm:$0x1] %vm52, %v51
    %s54 = scalar_lea.vmem [#allocation1], 2
    %v55 = vld [vmem:[%s54] sm:$0x1]
    %56 = vrot.lane.b32.xlu0 %v55, 6
    %v57 = vpop.permute.xlu0 %56
    %vm58 = vcmask 72752
    %59 = vst.msk [vmem:[#allocation0] sm:$0x1] %vm58, %v57
    %s60 = scalar_lea.vmem [#allocation1], 1
    %v61 = vld [vmem:[%s60] sm:$0x1]
    %62 = vrot.lane.b32.xlu0 %v61, 3
    %v63 = vpop.permute.xlu0 %62
    %vm64 = vcmask 48152
    %65 = vst.msk [vmem:[#allocation0] sm:$0x1] %vm64, %v63
    %s67 = sshllo.u32 0, 1
    %v69 = vld [vmem:[#allocation0] sm:%s67]
    %s70 = sshllo.u32 0, 1
    %71 = vst [vmem:[%s1] sm:%s70] %v69

// kernel: layer2_for_hr_branch_forward.3
$region0: #{layer2_for_hr_branch_forward.3}
  #allocation0 [shape = 'u32[]', space=smem, size = 0x4, offset = 0x4, fixed_abs, tag = 'smem constant byte address 0x4 - core index']
  #allocation1 [shape = 'u32[144,128]{1,0:T(1,128)}', space=vmem, size = 0x12000, scoped, tag = 'internal scratch']
  #allocation2 [shape = 'f32[34,34]{1,0:T(8,128)}', space=vmem, size = 0x5000, scoped, tag = 'scratch operand']
  #allocation3 [shape = 'f32[1]{0:T(128)S(6)}', space=smem, size = 0x200, scoped, tag = 'scoped memory for layer2_for_hr_branch_forward.3']
  %s0 = inlined_call_operand.vmem [shape: f32[2,128,16], index: 0, kind: input, shape index: {}]
  %s1 = inlined_call_operand.vmem [shape: f32[2,128,1], index: 1, kind: input, shape index: {}]
  %s2 = inlined_call_operand.vmem [shape: f32[2,128,1], index: 2, kind: input, shape index: {}]
  %s3 = inlined_call_operand.vmem [shape: f32[2,3,32,32], index: 3, kind: input, shape index: {}]
  %s4 = inlined_call_operand.vmem [shape: bf16[3,32,128], index: 4, kind: input, shape index: {}]
  %s5 = inlined_call_operand.vmem [shape: bf16[3,16,32], index: 5, kind: input, shape index: {}]
  %s6 = inlined_call_operand.vmem [shape: f32[27], index: 6, kind: input, shape index: {}]
  %s7 = inlined_call_operand.<no memory space> [shape: f32[1], index: 7, kind: input, shape index: {}]
  %s8 = inlined_call_operand.hbm [shape: f32[2,128,16], index: 8, kind: output, shape index: {0}]
  %s9 = inlined_call_operand.hbm [shape: f32[2,32,32], index: 9, kind: output, shape index: {1}]
  %10 = xla_tuple %s8, %s9
  %s11 = sld [smem:[#allocation0]]
  $region77: #{layer2_for_hr_branch_forward.3} parent=0
    _
  %s13 = ssub.s32 1, %s11
  %s14 = scalar_select 0, %s13, %s11
  %15 = sst [smem:[#allocation3]] %s7
  $region1: #{layer2_for_hr_branch_forward.3} parent=0
    #allocation4 [shape = 'u8[512]{0}', space=smem, size = 0x200, scoped, tag = 'input window, operand 6, single buffered']
    #allocation5 [shape = 's32[2]{0}', space=sflag, size = 0x8, scoped, tag = 'scoped memory for layer2_for_hr_branch_forward.3']
    #allocation6 [shape = 's32[2]{0}', space=sflag, size = 0x8, scoped, tag = 'scoped memory for layer2_for_hr_branch_forward.3']
    #allocation7 [shape = 'u8[131072]{0}', space=vmem, size = 0x20000, scoped, tag = 'output window, operand 0']
    #allocation8 [shape = 'u8[32768]{0}', space=vmem, size = 0x8000, scoped, tag = 'output window, operand 1']
    #allocation9 [shape = 's32[2]{0}', space=sflag, size = 0x8, scoped, tag = 'scoped memory for layer2_for_hr_branch_forward.3']
    %16 = vsyncpa [#allocation6], 0
    %17 = vsyncpa [#allocation5], 0
    %s18 = scalar_lea.sflag [#allocation5], 1
    %19 = vsyncpa %s18, 0
    %20 = vsyncpa [#allocation9], 0
    %s21 = scalar_lea.sflag [#allocation9], 1
    %22 = vsyncpa %s21, 0
    loop: start=0, step=1, limit=4
    $region2: #{layer2_for_hr_branch_forward.3} parent=1 // loop_pre_header
      _
    $region3: #{layer2_for_hr_branch_forward.3} parent=1 // loop_header
      %s24 = sphi 0, %s28
      %p25 = scmp.ge.s32.totalorder %s24, 4
      %s34 = sphi 0, %s36
      %s37 = sphi 0, %s34
      %s38 = sphi 0, %s37
      %s54 = sphi 0, %s38
      %s60 = sphi 0, %s62
      %s63 = sphi 0, %s60
      %s64 = sphi 0, %s63
      %s80 = sphi 0, %s64
      %s86 = sphi 0, %s88
      %s89 = sphi 0, %s86
      %s90 = sphi 0, %s89
      %s106 = sphi 0, %s90
      %s112 = sphi 0, %s114
      %s115 = sphi 0, %s112
      %s116 = sphi 0, %s115
      %s132 = sphi 0, %s116
      %s136 = sphi 0, %s136
      %s138 = sphi 0, %s136
      %s139 = sphi 0, %s138
      %s153 = sphi 0, %s139
      %s157 = sphi 0, %s157
      %s159 = sphi 0, %s157
      %s160 = sphi 0, %s159
      %s174 = sphi 0, %s160
      %s178 = sphi 0, %s178
      %s180 = sphi 0, %s178
      %s181 = sphi 0, %s180
      %s195 = sphi 0, %s181
      %s199 = sphi 0, %s199
      %s201 = sphi 0, %s199
      %s202 = sphi 0, %s201
      %s216 = sphi 0, %s202
      %s222 = sphi 0, %s224
      %s225 = sphi 0, %s222
      %s226 = sphi 0, %s225
      %s242 = sphi 0, %s226
      %s248 = sphi 0, %s250
      %s251 = sphi 0, %s248
      %s252 = sphi 0, %s251
      %s268 = sphi 0, %s252
    $region4: #{layer2_for_hr_branch_forward.3} parent=1 // loop_header_branch
      %27 = sbr.rel (%p25) target = $region8
    $region5: #{layer2_for_hr_branch_forward.3} parent=1 // loop_body
      %s29 = ssub.s32 %s24, 1
      %s30 = ssub.s32 %s24, 2
      %s31 = sadd.s32 %s24, 1
      %s32 = ssub.s32 %s24, %s31
      %p33 = scmp.eq.s32.totalorder %s32, 0
      %s35 = sadd.s32 %s34, 1
      %s36 = scalar_select %p33, %s34, %s35
      %p39 = pneg %p33
      %p40 = scmp.eq.s32.totalorder %s24, 1
      %p41 = por %p39, %p40
      %p42 = scmp.ne.s32.totalorder %s34, %s37
      %p43 = scmp.eq.s32.totalorder %s24, 0
      %p44 = por %p42, %p43
      %p45 = scmp.ne.s32.totalorder %s34, %s37
      %p46 = scmp.eq.s32.totalorder %s29, 1
      %p47 = por %p45, %p46
      %p48 = scmp.ne.s32.totalorder %s37, %s38
      %p49 = scmp.eq.s32.totalorder %s29, 0
      %p50 = por %p48, %p49
      %p51 = scmp.ne.s32.totalorder %s37, %s38
      %p52 = scmp.eq.s32.totalorder %s30, 1
      %p53 = por %p51, %p52
      %p55 = scmp.ne.s32.totalorder %s38, %s54
      %p56 = scmp.eq.s32.totalorder %s30, 0
      %p57 = por %p55, %p56
      %s58 = ssub.s32 %s24, %s31
      %p59 = scmp.eq.s32.totalorder %s58, 0
      %s61 = sadd.s32 %s60, 1
      %s62 = scalar_select %p59, %s60, %s61
      %p65 = pneg %p59
      %p66 = scmp.eq.s32.totalorder %s24, 1
      %p67 = por %p65, %p66
      %p68 = scmp.ne.s32.totalorder %s60, %s63
      %p69 = scmp.eq.s32.totalorder %s24, 0
      %p70 = por %p68, %p69
      %p71 = scmp.ne.s32.totalorder %s60, %s63
      %p72 = scmp.eq.s32.totalorder %s29, 1
      %p73 = por %p71, %p72
      %p74 = scmp.ne.s32.totalorder %s63, %s64
      %p75 = scmp.eq.s32.totalorder %s29, 0
      %p76 = por %p74, %p75
      %p77 = scmp.ne.s32.totalorder %s63, %s64
      %p78 = scmp.eq.s32.totalorder %s30, 1
      %p79 = por %p77, %p78
      %p81 = scmp.ne.s32.totalorder %s64, %s80
      %p82 = scmp.eq.s32.totalorder %s30, 0
      %p83 = por %p81, %p82
      %s84 = ssub.s32 %s24, %s31
      %p85 = scmp.eq.s32.totalorder %s84, 0
      %s87 = sadd.s32 %s86, 1
      %s88 = scalar_select %p85, %s86, %s87
      %p91 = pneg %p85
      %p92 = scmp.eq.s32.totalorder %s24, 1
      %p93 = por %p91, %p92
      %p94 = scmp.ne.s32.totalorder %s86, %s89
      %p95 = scmp.eq.s32.totalorder %s24, 0
      %p96 = por %p94, %p95
      %p97 = scmp.ne.s32.totalorder %s86, %s89
      %p98 = scmp.eq.s32.totalorder %s29, 1
      %p99 = por %p97, %p98
      %p100 = scmp.ne.s32.totalorder %s89, %s90
      %p101 = scmp.eq.s32.totalorder %s29, 0
      %p102 = por %p100, %p101
      %p103 = scmp.ne.s32.totalorder %s89, %s90
      %p104 = scmp.eq.s32.totalorder %s30, 1
      %p105 = por %p103, %p104
      %p107 = scmp.ne.s32.totalorder %s90, %s106
      %p108 = scmp.eq.s32.totalorder %s30, 0
      %p109 = por %p107, %p108
      %s110 = ssub.s32 %s24, %s31
      %p111 = scmp.eq.s32.totalorder %s110, 0
      %s113 = sadd.s32 %s112, 1
      %s114 = scalar_select %p111, %s112, %s113
      %p117 = pneg %p111
      %p118 = scmp.eq.s32.totalorder %s24, 1
      %p119 = por %p117, %p118
      %p120 = scmp.ne.s32.totalorder %s112, %s115
      %p121 = scmp.eq.s32.totalorder %s24, 0
      %p122 = por %p120, %p121
      %p123 = scmp.ne.s32.totalorder %s112, %s115
      %p124 = scmp.eq.s32.totalorder %s29, 1
      %p125 = por %p123, %p124
      %p126 = scmp.ne.s32.totalorder %s115, %s116
      %p127 = scmp.eq.s32.totalorder %s29, 0
      %p128 = por %p126, %p127
      %p129 = scmp.ne.s32.totalorder %s115, %s116
      %p130 = scmp.eq.s32.totalorder %s30, 1
      %p131 = por %p129, %p130
      %p133 = scmp.ne.s32.totalorder %s116, %s132
      %p134 = scmp.eq.s32.totalorder %s30, 0
      %p135 = por %p133, %p134
      %s137 = sadd.s32 %s136, 1
      %p140 = scmp.eq.s32.totalorder %s24, 1
      %p141 = scmp.ne.s32.totalorder %s136, %s138
      %p142 = scmp.eq.s32.totalorder %s24, 0
      %p143 = por %p141, %p142
      %p144 = scmp.ne.s32.totalorder %s136, %s138
      %p145 = scmp.eq.s32.totalorder %s29, 1
      %p146 = por %p144, %p145
      %p147 = scmp.ne.s32.totalorder %s138, %s139
      %p148 = scmp.eq.s32.totalorder %s29, 0
      %p149 = por %p147, %p148
      %p150 = scmp.ne.s32.totalorder %s138, %s139
      %p151 = scmp.eq.s32.totalorder %s30, 1
      %p152 = por %p150, %p151
      %p154 = scmp.ne.s32.totalorder %s139, %s153
      %p155 = scmp.eq.s32.totalorder %s30, 0
      %p156 = por %p154, %p155
      %s158 = sadd.s32 %s157, 1
      %p161 = scmp.eq.s32.totalorder %s24, 1
      %p162 = scmp.ne.s32.totalorder %s157, %s159
      %p163 = scmp.eq.s32.totalorder %s24, 0
      %p164 = por %p162, %p163
      %p165 = scmp.ne.s32.totalorder %s157, %s159
      %p166 = scmp.eq.s32.totalorder %s29, 1
      %p167 = por %p165, %p166
      %p168 = scmp.ne.s32.totalorder %s159, %s160
      %p169 = scmp.eq.s32.totalorder %s29, 0
      %p170 = por %p168, %p169
      %p171 = scmp.ne.s32.totalorder %s159, %s160
      %p172 = scmp.eq.s32.totalorder %s30, 1
      %p173 = por %p171, %p172
      %p175 = scmp.ne.s32.totalorder %s160, %s174
      %p176 = scmp.eq.s32.totalorder %s30, 0
      %p177 = por %p175, %p176
      %s179 = sadd.s32 %s178, 1
      %p182 = scmp.eq.s32.totalorder %s24, 1
      %p183 = scmp.ne.s32.totalorder %s178, %s180
      %p184 = scmp.eq.s32.totalorder %s24, 0
      %p185 = por %p183, %p184
      %p186 = scmp.ne.s32.totalorder %s178, %s180
      %p187 = scmp.eq.s32.totalorder %s29, 1
      %p188 = por %p186, %p187
      %p189 = scmp.ne.s32.totalorder %s180, %s181
      %p190 = scmp.eq.s32.totalorder %s29, 0
      %p191 = por %p189, %p190
      %p192 = scmp.ne.s32.totalorder %s180, %s181
      %p193 = scmp.eq.s32.totalorder %s30, 1
      %p194 = por %p192, %p193
      %p196 = scmp.ne.s32.totalorder %s181, %s195
      %p197 = scmp.eq.s32.totalorder %s30, 0
      %p198 = por %p196, %p197
      %s200 = sadd.s32 %s199, 1
      %p203 = scmp.eq.s32.totalorder %s24, 1
      %p204 = scmp.ne.s32.totalorder %s199, %s201
      %p205 = scmp.eq.s32.totalorder %s24, 0
      %p206 = por %p204, %p205
      %p207 = scmp.ne.s32.totalorder %s199, %s201
      %p208 = scmp.eq.s32.totalorder %s29, 1
      %p209 = por %p207, %p208
      %p210 = scmp.ne.s32.totalorder %s201, %s202
      %p211 = scmp.eq.s32.totalorder %s29, 0
      %p212 = por %p210, %p211
      %p213 = scmp.ne.s32.totalorder %s201, %s202
      %p214 = scmp.eq.s32.totalorder %s30, 1
      %p215 = por %p213, %p214
      %p217 = scmp.ne.s32.totalorder %s202, %s216
      %p218 = scmp.eq.s32.totalorder %s30, 0
      %p219 = por %p217, %p218
      %s220 = ssub.s32 %s24, %s31
      %p221 = scmp.eq.s32.totalorder %s220, 0
      %s223 = sadd.s32 %s222, 1
      %s224 = scalar_select %p221, %s222, %s223
      %p227 = pneg %p221
      %p228 = scmp.eq.s32.totalorder %s24, 1
      %p229 = por %p227, %p228
      %p230 = scmp.ne.s32.totalorder %s222, %s225
      %p231 = scmp.eq.s32.totalorder %s24, 0
      %p232 = por %p230, %p231
      %p233 = scmp.ne.s32.totalorder %s222, %s225
      %p234 = scmp.eq.s32.totalorder %s29, 1
      %p235 = por %p233, %p234
      %p236 = scmp.ne.s32.totalorder %s225, %s226
      %p237 = scmp.eq.s32.totalorder %s29, 0
      %p238 = por %p236, %p237
      %p239 = scmp.ne.s32.totalorder %s225, %s226
      %p240 = scmp.eq.s32.totalorder %s30, 1
      %p241 = por %p239, %p240
      %p243 = scmp.ne.s32.totalorder %s226, %s242
      %p244 = scmp.eq.s32.totalorder %s30, 0
      %p245 = por %p243, %p244
      %s246 = ssub.s32 %s24, %s31
      %p247 = scmp.eq.s32.totalorder %s246, 0
      %s249 = sadd.s32 %s248, 1
      %s250 = scalar_select %p247, %s248, %s249
      %p253 = pneg %p247
      %p254 = scmp.eq.s32.totalorder %s24, 1
      %p255 = por %p253, %p254
      %p256 = scmp.ne.s32.totalorder %s248, %s251
      %p257 = scmp.eq.s32.totalorder %s24, 0
      %p258 = por %p256, %p257
      %p259 = scmp.ne.s32.totalorder %s248, %s251
      %p260 = scmp.eq.s32.totalorder %s29, 1
      %p261 = por %p259, %p260
      %p262 = scmp.ne.s32.totalorder %s251, %s252
      %p263 = scmp.eq.s32.totalorder %s29, 0
      %p264 = por %p262, %p263
      %p265 = scmp.ne.s32.totalorder %s251, %s252
      %p266 = scmp.eq.s32.totalorder %s30, 1
      %p267 = por %p265, %p266
      %p269 = scmp.ne.s32.totalorder %s252, %s268
      %p270 = scmp.eq.s32.totalorder %s30, 0
      %p271 = por %p269, %p270
      %p272 = scmp.le.s32.totalorder 1, %s24
      %p273 = scmp.lt.s32.totalorder %s24, 3
      %p274 = pnand %p272, %p273
      %p275 = pneg %p274
      // Predicated region
      $region9: #{layer2_for_hr_branch_forward.3} parent=5 // pred_check
        _
      $region10: #{layer2_for_hr_branch_forward.3} parent=5 // pred_check_branch
        %277 = sbr.rel (%p274) target = $region12
      $region11: #{layer2_for_hr_branch_forward.3} parent=5 // pred_region
        %s278 = ssub.s32 %s24, 1
        // Predicated region
        $region13: #{layer2_for_hr_branch_forward.3} parent=11 // pred_check
          %p279 = pneg %p149
        $region14: #{layer2_for_hr_branch_forward.3} parent=11 // pred_check_branch
          %281 = sbr.rel (%p279) target = $region16
        $region15: #{layer2_for_hr_branch_forward.3} parent=11 // pred_region
          _
        $region16: #{layer2_for_hr_branch_forward.3} parent=11 // pred_fallthru
          _
        // Predicated region
        $region17: #{layer2_for_hr_branch_forward.3} parent=11 // pred_check
          %p282 = pneg %p170
        $region18: #{layer2_for_hr_branch_forward.3} parent=11 // pred_check_branch
          %284 = sbr.rel (%p282) target = $region20
        $region19: #{layer2_for_hr_branch_forward.3} parent=11 // pred_region
          _
        $region20: #{layer2_for_hr_branch_forward.3} parent=11 // pred_fallthru
          _
        // Predicated region
        $region21: #{layer2_for_hr_branch_forward.3} parent=11 // pred_check
          %p285 = pneg %p191
        $region22: #{layer2_for_hr_branch_forward.3} parent=11 // pred_check_branch
          %287 = sbr.rel (%p285) target = $region24
        $region23: #{layer2_for_hr_branch_forward.3} parent=11 // pred_region
          %s289 = ssub.s32 16, 16
          %290 = vsyncadd [#allocation6], %s289
          %s292 = sshll.u32 %s6, 4
          %s293 = int_to_ptr.vmem [resolvable:$true] %s292
          %295 = dma.vmem_to_smem %s293, 16, [#allocation4], [#allocation6]
        $region24: #{layer2_for_hr_branch_forward.3} parent=11 // pred_fallthru
          _
        // Predicated region
        $region25: #{layer2_for_hr_branch_forward.3} parent=11 // pred_check
          %p296 = pneg %p212
        $region26: #{layer2_for_hr_branch_forward.3} parent=11 // pred_check_branch
          %298 = sbr.rel (%p296) target = $region28
        $region27: #{layer2_for_hr_branch_forward.3} parent=11 // pred_region
          _
        $region28: #{layer2_for_hr_branch_forward.3} parent=11 // pred_fallthru
          _
      $region12: #{layer2_for_hr_branch_forward.3} parent=5 // pred_fallthru
        _
      %p299 = scmp.lt.s32.totalorder %s24, 2
      // Predicated region
      $region29: #{layer2_for_hr_branch_forward.3} parent=5 // pred_check
        %p300 = pneg %p299
      $region30: #{layer2_for_hr_branch_forward.3} parent=5 // pred_check_branch
        %302 = sbr.rel (%p300) target = $region32
      $region31: #{layer2_for_hr_branch_forward.3} parent=5 // pred_region
        // Predicated region
        $region33: #{layer2_for_hr_branch_forward.3} parent=31 // pred_check
          %p303 = pneg %p44
        $region34: #{layer2_for_hr_branch_forward.3} parent=31 // pred_check_branch
          %305 = sbr.rel (%p303) target = $region36
        $region35: #{layer2_for_hr_branch_forward.3} parent=31 // pred_region
          %p306 = scmp.lt.s32.totalorder %s24, 1
          %s307 = scalar_select %p306, %s24, 1
          %s308 = smul.addr %s307, 16
          %s309 = smul.addr %s308, 8
          %s310 = scalar_lea.vmem %s0, %s309
        $region36: #{layer2_for_hr_branch_forward.3} parent=31 // pred_fallthru
          _
        // Predicated region
        $region37: #{layer2_for_hr_branch_forward.3} parent=31 // pred_check
          %p311 = pneg %p70
        $region38: #{layer2_for_hr_branch_forward.3} parent=31 // pred_check_branch
          %313 = sbr.rel (%p311) target = $region40
        $region39: #{layer2_for_hr_branch_forward.3} parent=31 // pred_region
          %p314 = scmp.lt.s32.totalorder %s24, 1
          %s315 = scalar_select %p314, %s24, 1
          %s316 = smul.addr %s315, 16
          %s317 = smul.addr %s316, 8
          %s318 = scalar_lea.vmem %s1, %s317
        $region40: #{layer2_for_hr_branch_forward.3} parent=31 // pred_fallthru
          _
        // Predicated region
        $region41: #{layer2_for_hr_branch_forward.3} parent=31 // pred_check
          %p319 = pneg %p96
        $region42: #{layer2_for_hr_branch_forward.3} parent=31 // pred_check_branch
          %321 = sbr.rel (%p319) target = $region44
        $region43: #{layer2_for_hr_branch_forward.3} parent=31 // pred_region
          %p322 = scmp.lt.s32.totalorder %s24, 1
          %s323 = scalar_select %p322, %s24, 1
          %s324 = smul.addr %s323, 16
          %s325 = smul.addr %s324, 8
          %s326 = scalar_lea.vmem %s2, %s325
        $region44: #{layer2_for_hr_branch_forward.3} parent=31 // pred_fallthru
          _
        // Predicated region
        $region45: #{layer2_for_hr_branch_forward.3} parent=31 // pred_check
          %p327 = pneg %p122
        $region46: #{layer2_for_hr_branch_forward.3} parent=31 // pred_check_branch
          %329 = sbr.rel (%p327) target = $region48
        $region47: #{layer2_for_hr_branch_forward.3} parent=31 // pred_region
          %p330 = scmp.lt.s32.totalorder %s24, 1
          %s331 = scalar_select %p330, %s24, 1
          %s332 = smul.addr %s331, 12
          %s333 = smul.addr %s332, 8
          %s334 = scalar_lea.vmem %s3, %s333
        $region48: #{layer2_for_hr_branch_forward.3} parent=31 // pred_fallthru
          _
      $region32: #{layer2_for_hr_branch_forward.3} parent=5 // pred_fallthru
        _
      %p335 = scmp.le.s32.totalorder 1, %s24
      %p336 = scmp.lt.s32.totalorder %s24, 3
      %p337 = pnand %p335, %p336
      %p338 = pneg %p337
      // Predicated region
      $region49: #{layer2_for_hr_branch_forward.3} parent=5 // pred_check
        _
      $region50: #{layer2_for_hr_branch_forward.3} parent=5 // pred_check_branch
        %340 = sbr.rel (%p337) target = $region52
      $region51: #{layer2_for_hr_branch_forward.3} parent=5 // pred_region
        %s341 = ssub.s32 %s24, 1
        // Predicated region
        $region53: #{layer2_for_hr_branch_forward.3} parent=51 // pred_check
          %p342 = pneg %p191
        $region54: #{layer2_for_hr_branch_forward.3} parent=51 // pred_check_branch
          %344 = sbr.rel (%p342) target = $region56
        $region55: #{layer2_for_hr_branch_forward.3} parent=51 // pred_region
          %345 = dma.done [#allocation6], 16
        $region56: #{layer2_for_hr_branch_forward.3} parent=51 // pred_fallthru
          _
        %346 = sfence
        %p347 = scmp.lt.s32.totalorder %s29, 1
        %s348 = scalar_select %p347, %s29, 1
        %s349 = smul.addr %s348, 16
        %s350 = smul.addr %s349, 8
        %s351 = scalar_lea.vmem %s0, %s350
        %p352 = pneg %p50
        %p353 = pneg %p47
        %p354 = scmp.lt.s32.totalorder %s29, 1
        %s355 = scalar_select %p354, %s29, 1
        %s356 = smul.addr %s355, 16
        %s357 = smul.addr %s356, 8
        %s358 = scalar_lea.vmem %s1, %s357
        %p359 = pneg %p76
        %p360 = pneg %p73
        %p361 = scmp.lt.s32.totalorder %s29, 1
        %s362 = scalar_select %p361, %s29, 1
        %s363 = smul.addr %s362, 16
        %s364 = smul.addr %s363, 8
        %s365 = scalar_lea.vmem %s2, %s364
        %p366 = pneg %p102
        %p367 = pneg %p99
        %p368 = scmp.lt.s32.totalorder %s29, 1
        %s369 = scalar_select %p368, %s29, 1
        %s370 = smul.addr %s369, 12
        %s371 = smul.addr %s370, 8
        %s372 = scalar_lea.vmem %s3, %s371
        %p373 = pneg %p128
        %p374 = pneg %p125
        %p375 = pneg %p149
        %p376 = pneg %p146
        %p377 = pneg %p170
        %p378 = pneg %p167
        %p379 = pneg %p191
        %p380 = pneg %p188
        %p381 = pneg %p212
        %p382 = pneg %p209
        %p383 = pneg %p238
        %p384 = pneg %p235
        %s385 = sand.u32 %s225, 1
        %s386 = scalar_lea.sflag [#allocation5], %s385
        %s387 = sand.u32 %s225, 1
        %s388 = smul.addr %s387, 128
        %s389 = scalar_lea.vmem [#allocation7], %s388
        %p390 = pneg %p264
        %p391 = pneg %p261
        %s392 = sand.u32 %s251, 1
        %s393 = scalar_lea.sflag [#allocation9], %s392
        %s394 = sand.u32 %s251, 1
        %s395 = smul.addr %s394, 32
        %s396 = scalar_lea.vmem [#allocation8], %s395
        %p397 = scmp.lt.s32.totalorder %s29, 1
        %s398 = scalar_select %p397, %s29, 1
        %s399 = smul.addr %s398, 16
        %s400 = smul.addr %s399, 8
        %s401 = scalar_lea.vmem %s0, %s400
        %p402 = scmp.lt.s32.totalorder %s29, 1
        %s403 = scalar_select %p402, %s29, 1
        %s404 = smul.addr %s403, 16
        %s405 = smul.addr %s404, 8
        %s406 = scalar_lea.vmem %s1, %s405
        %p407 = scmp.lt.s32.totalorder %s29, 1
        %s408 = scalar_select %p407, %s29, 1
        %s409 = smul.addr %s408, 16
        %s410 = smul.addr %s409, 8
        %s411 = scalar_lea.vmem %s2, %s410
        %p412 = scmp.lt.s32.totalorder %s29, 1
        %s413 = scalar_select %p412, %s29, 1
        %s414 = smul.addr %s413, 12
        %s415 = smul.addr %s414, 8
        %s416 = scalar_lea.vmem %s3, %s415
        %v418 = vld [vmem:[%s401] sm:$0xff]
        %v419 = vld [vmem:[%s401 + $0x8] sm:$0xff]
        %v420 = vld [vmem:[%s401 + $0x10] sm:$0xff]
        %v421 = vld [vmem:[%s401 + $0x18] sm:$0xff]
        %v422 = vld [vmem:[%s401 + $0x20] sm:$0xff]
        %v423 = vld [vmem:[%s401 + $0x28] sm:$0xff]
        %v424 = vld [vmem:[%s401 + $0x30] sm:$0xff]
        %v425 = vld [vmem:[%s401 + $0x38] sm:$0xff]
        %v426 = vld [vmem:[%s401 + $0x40] sm:$0xff]
        %v427 = vld [vmem:[%s401 + $0x48] sm:$0xff]
        %v428 = vld [vmem:[%s401 + $0x50] sm:$0xff]
        %v429 = vld [vmem:[%s401 + $0x58] sm:$0xff]
        %v430 = vld [vmem:[%s401 + $0x60] sm:$0xff]
        %v431 = vld [vmem:[%s401 + $0x68] sm:$0xff]
        %v432 = vld [vmem:[%s401 + $0x70] sm:$0xff]
        %v433 = vld [vmem:[%s401 + $0x78] sm:$0xff]
        %v434 = vld [vmem:[%s406] sm:$0xff]
        %v435 = vld [vmem:[%s406 + $0x8] sm:$0xff]
        %v436 = vld [vmem:[%s406 + $0x10] sm:$0xff]
        %v437 = vld [vmem:[%s406 + $0x18] sm:$0xff]
        %v438 = vld [vmem:[%s406 + $0x20] sm:$0xff]
        %v439 = vld [vmem:[%s406 + $0x28] sm:$0xff]
        %v440 = vld [vmem:[%s406 + $0x30] sm:$0xff]
        %v441 = vld [vmem:[%s406 + $0x38] sm:$0xff]
        %v442 = vld [vmem:[%s406 + $0x40] sm:$0xff]
        %v443 = vld [vmem:[%s406 + $0x48] sm:$0xff]
        %v444 = vld [vmem:[%s406 + $0x50] sm:$0xff]
        %v445 = vld [vmem:[%s406 + $0x58] sm:$0xff]
        %v446 = vld [vmem:[%s406 + $0x60] sm:$0xff]
        %v447 = vld [vmem:[%s406 + $0x68] sm:$0xff]
        %v448 = vld [vmem:[%s406 + $0x70] sm:$0xff]
        %v449 = vld [vmem:[%s406 + $0x78] sm:$0xff]
        %451 = vset.pattern.permute.xlu0 0
        %452 = vperm.xlu0 %451, %v434
        %v453 = vpop.permute.xlu0 %452
        %456 = vset.pattern.permute.xlu0 0
        %457 = vperm.xlu0 %456, %v435
        %v458 = vpop.permute.xlu0 %457
        %461 = vset.pattern.permute.xlu0 0
        %462 = vperm.xlu0 %461, %v436
        %v463 = vpop.permute.xlu0 %462
        %466 = vset.pattern.permute.xlu0 0
        %467 = vperm.xlu0 %466, %v437
        %v468 = vpop.permute.xlu0 %467
        %471 = vset.pattern.permute.xlu0 0
        %472 = vperm.xlu0 %471, %v438
        %v473 = vpop.permute.xlu0 %472
        %476 = vset.pattern.permute.xlu0 0
        %477 = vperm.xlu0 %476, %v439
        %v478 = vpop.permute.xlu0 %477
        %481 = vset.pattern.permute.xlu0 0
        %482 = vperm.xlu0 %481, %v440
        %v483 = vpop.permute.xlu0 %482
        %486 = vset.pattern.permute.xlu0 0
        %487 = vperm.xlu0 %486, %v441
        %v488 = vpop.permute.xlu0 %487
        %491 = vset.pattern.permute.xlu0 0
        %492 = vperm.xlu0 %491, %v442
        %v493 = vpop.permute.xlu0 %492
        %496 = vset.pattern.permute.xlu0 0
        %497 = vperm.xlu0 %496, %v443
        %v498 = vpop.permute.xlu0 %497
        %501 = vset.pattern.permute.xlu0 0
        %502 = vperm.xlu0 %501, %v444
        %v503 = vpop.permute.xlu0 %502
        %506 = vset.pattern.permute.xlu0 0
        %507 = vperm.xlu0 %506, %v445
        %v508 = vpop.permute.xlu0 %507
        %511 = vset.pattern.permute.xlu0 0
        %512 = vperm.xlu0 %511, %v446
        %v513 = vpop.permute.xlu0 %512
        %516 = vset.pattern.permute.xlu0 0
        %517 = vperm.xlu0 %516, %v447
        %v518 = vpop.permute.xlu0 %517
        %521 = vset.pattern.permute.xlu0 0
        %522 = vperm.xlu0 %521, %v448
        %v523 = vpop.permute.xlu0 %522
        %526 = vset.pattern.permute.xlu0 0
        %527 = vperm.xlu0 %526, %v449
        %v528 = vpop.permute.xlu0 %527
        %v530 = vmul.f32 %v418, %v453
        %v531 = vmul.f32 %v419, %v458
        %v532 = vmul.f32 %v420, %v463
        %v533 = vmul.f32 %v421, %v468
        %v534 = vmul.f32 %v422, %v473
        %v535 = vmul.f32 %v423, %v478
        %v536 = vmul.f32 %v424, %v483
        %v537 = vmul.f32 %v425, %v488
        %v538 = vmul.f32 %v426, %v493
        %v539 = vmul.f32 %v427, %v498
        %v540 = vmul.f32 %v428, %v503
        %v541 = vmul.f32 %v429, %v508
        %v542 = vmul.f32 %v430, %v513
        %v543 = vmul.f32 %v431, %v518
        %v544 = vmul.f32 %v432, %v523
        %v545 = vmul.f32 %v433, %v528
        %v546 = vld [vmem:[%s411] sm:$0xff]
        %v547 = vld [vmem:[%s411 + $0x8] sm:$0xff]
        %v548 = vld [vmem:[%s411 + $0x10] sm:$0xff]
        %v549 = vld [vmem:[%s411 + $0x18] sm:$0xff]
        %v550 = vld [vmem:[%s411 + $0x20] sm:$0xff]
        %v551 = vld [vmem:[%s411 + $0x28] sm:$0xff]
        %v552 = vld [vmem:[%s411 + $0x30] sm:$0xff]
        %v553 = vld [vmem:[%s411 + $0x38] sm:$0xff]
        %v554 = vld [vmem:[%s411 + $0x40] sm:$0xff]
        %v555 = vld [vmem:[%s411 + $0x48] sm:$0xff]
        %v556 = vld [vmem:[%s411 + $0x50] sm:$0xff]
        %v557 = vld [vmem:[%s411 + $0x58] sm:$0xff]
        %v558 = vld [vmem:[%s411 + $0x60] sm:$0xff]
        %v559 = vld [vmem:[%s411 + $0x68] sm:$0xff]
        %v560 = vld [vmem:[%s411 + $0x70] sm:$0xff]
        %v561 = vld [vmem:[%s411 + $0x78] sm:$0xff]
        %563 = vset.pattern.permute.xlu0 0
        %564 = vperm.xlu0 %563, %v546
        %v565 = vpop.permute.xlu0 %564
        %568 = vset.pattern.permute.xlu0 0
        %569 = vperm.xlu0 %568, %v547
        %v570 = vpop.permute.xlu0 %569
        %573 = vset.pattern.permute.xlu0 0
        %574 = vperm.xlu0 %573, %v548
        %v575 = vpop.permute.xlu0 %574
        %578 = vset.pattern.permute.xlu0 0
        %579 = vperm.xlu0 %578, %v549
        %v580 = vpop.permute.xlu0 %579
        %583 = vset.pattern.permute.xlu0 0
        %584 = vperm.xlu0 %583, %v550
        %v585 = vpop.permute.xlu0 %584
        %588 = vset.pattern.permute.xlu0 0
        %589 = vperm.xlu0 %588, %v551
        %v590 = vpop.permute.xlu0 %589
        %593 = vset.pattern.permute.xlu0 0
        %594 = vperm.xlu0 %593, %v552
        %v595 = vpop.permute.xlu0 %594
        %598 = vset.pattern.permute.xlu0 0
        %599 = vperm.xlu0 %598, %v553
        %v600 = vpop.permute.xlu0 %599
        %603 = vset.pattern.permute.xlu0 0
        %604 = vperm.xlu0 %603, %v554
        %v605 = vpop.permute.xlu0 %604
        %608 = vset.pattern.permute.xlu0 0
        %609 = vperm.xlu0 %608, %v555
        %v610 = vpop.permute.xlu0 %609
        %613 = vset.pattern.permute.xlu0 0
        %614 = vperm.xlu0 %613, %v556
        %v615 = vpop.permute.xlu0 %614
        %618 = vset.pattern.permute.xlu0 0
        %619 = vperm.xlu0 %618, %v557
        %v620 = vpop.permute.xlu0 %619
        %623 = vset.pattern.permute.xlu0 0
        %624 = vperm.xlu0 %623, %v558
        %v625 = vpop.permute.xlu0 %624
        %628 = vset.pattern.permute.xlu0 0
        %629 = vperm.xlu0 %628, %v559
        %v630 = vpop.permute.xlu0 %629
        %633 = vset.pattern.permute.xlu0 0
        %634 = vperm.xlu0 %633, %v560
        %v635 = vpop.permute.xlu0 %634
        %638 = vset.pattern.permute.xlu0 0
        %639 = vperm.xlu0 %638, %v561
        %v640 = vpop.permute.xlu0 %639
        %v642 = vadd.f32 %v530, %v565
        %v643 = vadd.f32 %v531, %v570
        %v644 = vadd.f32 %v532, %v575
        %v645 = vadd.f32 %v533, %v580
        %v646 = vadd.f32 %v534, %v585
        %v647 = vadd.f32 %v535, %v590
        %v648 = vadd.f32 %v536, %v595
        %v649 = vadd.f32 %v537, %v600
        %v650 = vadd.f32 %v538, %v605
        %v651 = vadd.f32 %v539, %v610
        %v652 = vadd.f32 %v540, %v615
        %v653 = vadd.f32 %v541, %v620
        %v654 = vadd.f32 %v542, %v625
        %v655 = vadd.f32 %v543, %v630
        %v656 = vadd.f32 %v544, %v635
        %v657 = vadd.f32 %v545, %v640
        %v658 = vmax.f32 %v642, 0.0
        %v659 = vmax.f32 %v643, 0.0
        %v660 = vmax.f32 %v644, 0.0
        %v661 = vmax.f32 %v645, 0.0
        %v662 = vmax.f32 %v646, 0.0
        %v663 = vmax.f32 %v647, 0.0
        %v664 = vmax.f32 %v648, 0.0
        %v665 = vmax.f32 %v649, 0.0
        %v666 = vmax.f32 %v650, 0.0
        %v667 = vmax.f32 %v651, 0.0
        %v668 = vmax.f32 %v652, 0.0
        %v669 = vmax.f32 %v653, 0.0
        %v670 = vmax.f32 %v654, 0.0
        %v671 = vmax.f32 %v655, 0.0
        %v672 = vmax.f32 %v656, 0.0
        %v673 = vmax.f32 %v657, 0.0
        %vm674 = vcmask 130048
        %675 = vst.msk [vmem:[%s389] sm:$0xff] %vm674, %v658
        %676 = vst.msk [vmem:[%s389 + $0x8] sm:$0xff] %vm674, %v659
        %677 = vst.msk [vmem:[%s389 + $0x10] sm:$0xff] %vm674, %v660
        %678 = vst.msk [vmem:[%s389 + $0x18] sm:$0xff] %vm674, %v661
        %679 = vst.msk [vmem:[%s389 + $0x20] sm:$0xff] %vm674, %v662
        %680 = vst.msk [vmem:[%s389 + $0x28] sm:$0xff] %vm674, %v663
        %681 = vst.msk [vmem:[%s389 + $0x30] sm:$0xff] %vm674, %v664
        %682 = vst.msk [vmem:[%s389 + $0x38] sm:$0xff] %vm674, %v665
        %683 = vst.msk [vmem:[%s389 + $0x40] sm:$0xff] %vm674, %v666
        %684 = vst.msk [vmem:[%s389 + $0x48] sm:$0xff] %vm674, %v667
        %685 = vst.msk [vmem:[%s389 + $0x50] sm:$0xff] %vm674, %v668
        %686 = vst.msk [vmem:[%s389 + $0x58] sm:$0xff] %vm674, %v669
        %687 = vst.msk [vmem:[%s389 + $0x60] sm:$0xff] %vm674, %v670
        %688 = vst.msk [vmem:[%s389 + $0x68] sm:$0xff] %vm674, %v671
        %689 = vst.msk [vmem:[%s389 + $0x70] sm:$0xff] %vm674, %v672
        %690 = vst.msk [vmem:[%s389 + $0x78] sm:$0xff] %vm674, %v673
        %v691 = vpack.c.bf16 %v659, %v658
        %v692 = vpack.c.bf16 %v661, %v660
        %v693 = vpack.c.bf16 %v663, %v662
        %v694 = vpack.c.bf16 %v665, %v664
        %v695 = vpack.c.bf16 %v667, %v666
        %v696 = vpack.c.bf16 %v669, %v668
        %v697 = vpack.c.bf16 %v671, %v670
        %v698 = vpack.c.bf16 %v673, %v672
        %s699 = sld [smem:[#allocation3]]
        %v700 = vstv %s699
        %v701 = vadd.f32 %v700, 0.0
        %v702 = vld [vmem:[%s4] sm:$0xf]
        %v703 = vld [vmem:[%s4 + $0x4] sm:$0xf]
        %v704 = vld [vmem:[%s4 + $0x8] sm:$0xf]
        %v705 = vld [vmem:[%s4 + $0xc] sm:$0xf]
        %v710 = vunpack.c.l.b16 %v702
        %v711 = vunpack.c.l.b16 %v703
        %v712 = vunpack.c.l.b16 %v704
        %v713 = vunpack.c.l.b16 %v705
        %v714 = vpack.c.b16 %v711, %v710
        %v715 = vpack.c.b16 %v713, %v712
        %718 = vmatprep.subr.bf16.mxu0 0
        %719 = vmatpush1.bf16.msra.mxu0 %v691
        %720 = vmatprep.subr.bf16.mxu0 0
        %721 = vmatpush1.bf16.msra.mxu0 %v692
        %722 = vmatprep.subr.bf16.mxu0 0
        %723 = vmatpush1.bf16.msra.mxu0 %v693
        %724 = vmatprep.subr.bf16.mxu0 0
        %725 = vmatpush1.bf16.msra.mxu0 %v694
        %726 = vmatprep.subr.bf16.mxu0 0
        %727 = vmatpush1.bf16.msra.mxu0 %v695
        %728 = vmatprep.subr.bf16.mxu0 0
        %729 = vmatpush1.bf16.msra.mxu0 %v696
        %730 = vmatprep.subr.bf16.mxu0 0
        %731 = vmatpush1.bf16.msra.mxu0 %v697
        %732 = vmatprep.subr.bf16.mxu0 0
        %733 = vmatpush1.bf16.msra.mxu0 %v698
        %734 = vmatprep.subr.bf16.mxu0 0
        %735 = vmatpush1.bf16.msra.mxu0 0
        %736 = vmatprep.subr.bf16.mxu0 0
        %737 = vmatpush1.bf16.msra.mxu0 0
        %738 = vmatprep.subr.bf16.mxu0 0
        %739 = vmatpush1.bf16.msra.mxu0 0
        %740 = vmatprep.subr.bf16.mxu0 0
        %741 = vmatpush1.bf16.msra.mxu0 0
        %742 = vmatprep.subr.bf16.mxu0 0
        %743 = vmatpush1.bf16.msra.mxu0 0
        %744 = vmatprep.subr.bf16.mxu0 0
        %745 = vmatpush1.bf16.msra.mxu0 0
        %746 = vmatprep.subr.bf16.mxu0 0
        %747 = vmatpush1.bf16.msra.mxu0 0
        %748 = vmatprep.subr.bf16.mxu0 0
        %749 = vmatpush1.bf16.msra.mxu0 0
        %750 = vmatprep.mubr.bf16.mxu0 0
        %751 = vmatmul.mubr.bf16.gmra.mrb[0].mxu0 %v714
        %v752 = vpop.f32.mrb[0].mxu0
        %v753 = vadd.f32 0.0, %v752
        %v754 = vpop.f32.mrb[0].mxu0
        %v755 = vpop.f32.mrb[0].mxu0
        %v756 = vadd.f32 0.0, %v755
        %v757 = vpop.f32.mrb[0].mxu0
        %758 = vmatprep.mubr.bf16.mxu0 0
        %759 = vmatmul.mubr.bf16.gmra.mrb[0].mxu0 %v715
        %v760 = vpop.f32.mrb[0].mxu0
        %v761 = vadd.f32 0.0, %v760
        %v762 = vpop.f32.mrb[0].mxu0
        %v763 = vpop.f32.mrb[0].mxu0
        %v764 = vadd.f32 0.0, %v763
        %v765 = vpop.f32.mrb[0].mxu0
        %766 = vdwg.mxu0
        %v767 = vpack.c.bf16 %v756, %v753
        %v768 = vpack.c.bf16 %v764, %v761
        %v769 = vld [vmem:[%s5] sm:$0xf]
        %v770 = vld [vmem:[%s5 + $0x4] sm:$0xf]
        %v773 = vunpack.c.l.b16 %v769
        %v774 = vunpack.c.l.b16 %v770
        %v775 = vpack.c.b16 %v774, %v773
        %v778 = vsel %vm674, %v767, 0
        %v781 = vsel %vm674, %v768, 0
        %783 = vmatprep.subr.bf16.mxu0 0
        %784 = vmatpush1.bf16.msra.mxu0 %v775
        %785 = vmatprep.subr.bf16.mxu0 0
        %786 = vmatpush1.bf16.msra.mxu0 0
        %787 = vmatprep.subr.bf16.mxu0 0
        %788 = vmatpush1.bf16.msra.mxu0 0
        %789 = vmatprep.subr.bf16.mxu0 0
        %790 = vmatpush1.bf16.msra.mxu0 0
        %791 = vmatprep.subr.bf16.mxu0 0
        %792 = vmatpush1.bf16.msra.mxu0 0
        %793 = vmatprep.subr.bf16.mxu0 0
        %794 = vmatpush1.bf16.msra.mxu0 0
        %795 = vmatprep.subr.bf16.mxu0 0
        %796 = vmatpush1.bf16.msra.mxu0 0
        %797 = vmatprep.subr.bf16.mxu0 0
        %798 = vmatpush1.bf16.msra.mxu0 0
        %799 = vmatprep.subr.bf16.mxu0 0
        %800 = vmatpush1.bf16.msra.mxu0 0
        %801 = vmatprep.subr.bf16.mxu0 0
        %802 = vmatpush1.bf16.msra.mxu0 0
        %803 = vmatprep.subr.bf16.mxu0 0
        %804 = vmatpush1.bf16.msra.mxu0 0
        %805 = vmatprep.subr.bf16.mxu0 0
        %806 = vmatpush1.bf16.msra.mxu0 0
        %807 = vmatprep.subr.bf16.mxu0 0
        %808 = vmatpush1.bf16.msra.mxu0 0
        %809 = vmatprep.subr.bf16.mxu0 0
        %810 = vmatpush1.bf16.msra.mxu0 0
        %811 = vmatprep.subr.bf16.mxu0 0
        %812 = vmatpush1.bf16.msra.mxu0 0
        %813 = vmatprep.subr.bf16.mxu0 0
        %814 = vmatpush1.bf16.msra.mxu0 0
        %815 = vmatprep.mubr.bf16.mxu0 0
        %816 = vmatmul.mubr.bf16.gmra.mrb[0].mxu0 %v778
        %v817 = vpop.f32.mrb[0].mxu0
        %v818 = vadd.f32 0.0, %v817
        %v819 = vpop.f32.mrb[0].mxu0
        %v820 = vpop.f32.mrb[0].mxu0
        %v821 = vadd.f32 0.0, %v820
        %v822 = vpop.f32.mrb[0].mxu0
        %823 = vmatprep.mubr.bf16.mxu0 0
        %824 = vmatmul.mubr.bf16.gmra.mrb[0].mxu0 %v781
        %v825 = vpop.f32.mrb[0].mxu0
        %v826 = vadd.f32 0.0, %v825
        %v827 = vpop.f32.mrb[0].mxu0
        %v828 = vpop.f32.mrb[0].mxu0
        %v829 = vadd.f32 0.0, %v828
        %v830 = vpop.f32.mrb[0].mxu0
        %831 = vdwg.mxu0
        %v832 = vadd.f32 %v701, %v818
        %v833 = vadd.f32 %v701, %v821
        %v834 = vadd.f32 %v701, %v826
        %v835 = vadd.f32 %v701, %v829
        %s836 = scalar_lea.vmem %s4, 16
        %v837 = vld [vmem:[%s836] sm:$0xf]
        %v838 = vld [vmem:[%s836 + $0x4] sm:$0xf]
        %v839 = vld [vmem:[%s836 + $0x8] sm:$0xf]
        %v840 = vld [vmem:[%s836 + $0xc] sm:$0xf]
        %v845 = vunpack.c.l.b16 %v837
        %v846 = vunpack.c.l.b16 %v838
        %v847 = vunpack.c.l.b16 %v839
        %v848 = vunpack.c.l.b16 %v840
        %v849 = vpack.c.b16 %v846, %v845
        %v850 = vpack.c.b16 %v848, %v847
        %853 = vmatprep.subr.bf16.mxu0 0
        %854 = vmatpush1.bf16.msra.mxu0 %v691
        %855 = vmatprep.subr.bf16.mxu0 0
        %856 = vmatpush1.bf16.msra.mxu0 %v692
        %857 = vmatprep.subr.bf16.mxu0 0
        %858 = vmatpush1.bf16.msra.mxu0 %v693
        %859 = vmatprep.subr.bf16.mxu0 0
        %860 = vmatpush1.bf16.msra.mxu0 %v694
        %861 = vmatprep.subr.bf16.mxu0 0
        %862 = vmatpush1.bf16.msra.mxu0 %v695
        %863 = vmatprep.subr.bf16.mxu0 0
        %864 = vmatpush1.bf16.msra.mxu0 %v696
        %865 = vmatprep.subr.bf16.mxu0 0
        %866 = vmatpush1.bf16.msra.mxu0 %v697
        %867 = vmatprep.subr.bf16.mxu0 0
        %868 = vmatpush1.bf16.msra.mxu0 %v698
        %869 = vmatprep.subr.bf16.mxu0 0
        %870 = vmatpush1.bf16.msra.mxu0 0
        %871 = vmatprep.subr.bf16.mxu0 0
        %872 = vmatpush1.bf16.msra.mxu0 0
        %873 = vmatprep.subr.bf16.mxu0 0
        %874 = vmatpush1.bf16.msra.mxu0 0
        %875 = vmatprep.subr.bf16.mxu0 0
        %876 = vmatpush1.bf16.msra.mxu0 0
        %877 = vmatprep.subr.bf16.mxu0 0
        %878 = vmatpush1.bf16.msra.mxu0 0
        %879 = vmatprep.subr.bf16.mxu0 0
        %880 = vmatpush1.bf16.msra.mxu0 0
        %881 = vmatprep.subr.bf16.mxu0 0
        %882 = vmatpush1.bf16.msra.mxu0 0
        %883 = vmatprep.subr.bf16.mxu0 0
        %884 = vmatpush1.bf16.msra.mxu0 0
        %885 = vmatprep.mubr.bf16.mxu0 0
        %886 = vmatmul.mubr.bf16.gmra.mrb[0].mxu0 %v849
        %v887 = vpop.f32.mrb[0].mxu0
        %v888 = vadd.f32 0.0, %v887
        %v889 = vpop.f32.mrb[0].mxu0
        %v890 = vpop.f32.mrb[0].mxu0
        %v891 = vadd.f32 0.0, %v890
        %v892 = vpop.f32.mrb[0].mxu0
        %893 = vmatprep.mubr.bf16.mxu0 0
        %894 = vmatmul.mubr.bf16.gmra.mrb[0].mxu0 %v850
        %v895 = vpop.f32.mrb[0].mxu0
        %v896 = vadd.f32 0.0, %v895
        %v897 = vpop.f32.mrb[0].mxu0
        %v898 = vpop.f32.mrb[0].mxu0
        %v899 = vadd.f32 0.0, %v898
        %v900 = vpop.f32.mrb[0].mxu0
        %901 = vdwg.mxu0
        %v902 = vpack.c.bf16 %v891, %v888
        %v903 = vpack.c.bf16 %v899, %v896
        %s904 = scalar_lea.vmem %s5, 8
        %v905 = vld [vmem:[%s904] sm:$0xf]
        %v906 = vld [vmem:[%s904 + $0x4] sm:$0xf]
        %v909 = vunpack.c.l.b16 %v905
        %v910 = vunpack.c.l.b16 %v906
        %v911 = vpack.c.b16 %v910, %v909
        %v914 = vsel %vm674, %v902, 0
        %v917 = vsel %vm674, %v903, 0
        %919 = vmatprep.subr.bf16.mxu0 0
        %920 = vmatpush1.bf16.msra.mxu0 %v911
        %921 = vmatprep.subr.bf16.mxu0 0
        %922 = vmatpush1.bf16.msra.mxu0 0
        %923 = vmatprep.subr.bf16.mxu0 0
        %924 = vmatpush1.bf16.msra.mxu0 0
        %925 = vmatprep.subr.bf16.mxu0 0
        %926 = vmatpush1.bf16.msra.mxu0 0
        %927 = vmatprep.subr.bf16.mxu0 0
        %928 = vmatpush1.bf16.msra.mxu0 0
        %929 = vmatprep.subr.bf16.mxu0 0
        %930 = vmatpush1.bf16.msra.mxu0 0
        %931 = vmatprep.subr.bf16.mxu0 0
        %932 = vmatpush1.bf16.msra.mxu0 0
        %933 = vmatprep.subr.bf16.mxu0 0
        %934 = vmatpush1.bf16.msra.mxu0 0
        %935 = vmatprep.subr.bf16.mxu0 0
        %936 = vmatpush1.bf16.msra.mxu0 0
        %937 = vmatprep.subr.bf16.mxu0 0
        %938 = vmatpush1.bf16.msra.mxu0 0
        %939 = vmatprep.subr.bf16.mxu0 0
        %940 = vmatpush1.bf16.msra.mxu0 0
        %941 = vmatprep.subr.bf16.mxu0 0
        %942 = vmatpush1.bf16.msra.mxu0 0
        %943 = vmatprep.subr.bf16.mxu0 0
        %944 = vmatpush1.bf16.msra.mxu0 0
        %945 = vmatprep.subr.bf16.mxu0 0
        %946 = vmatpush1.bf16.msra.mxu0 0
        %947 = vmatprep.subr.bf16.mxu0 0
        %948 = vmatpush1.bf16.msra.mxu0 0
        %949 = vmatprep.subr.bf16.mxu0 0
        %950 = vmatpush1.bf16.msra.mxu0 0
        %951 = vmatprep.mubr.bf16.mxu0 0
        %952 = vmatmul.mubr.bf16.gmra.mrb[0].mxu0 %v914
        %v953 = vpop.f32.mrb[0].mxu0
        %v954 = vadd.f32 0.0, %v953
        %v955 = vpop.f32.mrb[0].mxu0
        %v956 = vpop.f32.mrb[0].mxu0
        %v957 = vadd.f32 0.0, %v956
        %v958 = vpop.f32.mrb[0].mxu0
        %959 = vmatprep.mubr.bf16.mxu0 0
        %960 = vmatmul.mubr.bf16.gmra.mrb[0].mxu0 %v917
        %v961 = vpop.f32.mrb[0].mxu0
        %v962 = vadd.f32 0.0, %v961
        %v963 = vpop.f32.mrb[0].mxu0
        %v964 = vpop.f32.mrb[0].mxu0
        %v965 = vadd.f32 0.0, %v964
        %v966 = vpop.f32.mrb[0].mxu0
        %967 = vdwg.mxu0
        %v968 = vadd.f32 %v832, %v954
        %v969 = vadd.f32 %v833, %v957
        %v970 = vadd.f32 %v834, %v962
        %v971 = vadd.f32 %v835, %v965
        %s972 = scalar_lea.vmem %s4, 32
        %v973 = vld [vmem:[%s972] sm:$0xf]
        %v974 = vld [vmem:[%s972 + $0x4] sm:$0xf]
        %v975 = vld [vmem:[%s972 + $0x8] sm:$0xf]
        %v976 = vld [vmem:[%s972 + $0xc] sm:$0xf]
        %v981 = vunpack.c.l.b16 %v973
        %v982 = vunpack.c.l.b16 %v974
        %v983 = vunpack.c.l.b16 %v975
        %v984 = vunpack.c.l.b16 %v976
        %v985 = vpack.c.b16 %v982, %v981
        %v986 = vpack.c.b16 %v984, %v983
        %989 = vmatprep.subr.bf16.mxu0 0
        %990 = vmatpush1.bf16.msra.mxu0 %v691
        %991 = vmatprep.subr.bf16.mxu0 0
        %992 = vmatpush1.bf16.msra.mxu0 %v692
        %993 = vmatprep.subr.bf16.mxu0 0
        %994 = vmatpush1.bf16.msra.mxu0 %v693
        %995 = vmatprep.subr.bf16.mxu0 0
        %996 = vmatpush1.bf16.msra.mxu0 %v694
        %997 = vmatprep.subr.bf16.mxu0 0
        %998 = vmatpush1.bf16.msra.mxu0 %v695
        %999 = vmatprep.subr.bf16.mxu0 0
        %1000 = vmatpush1.bf16.msra.mxu0 %v696
        %1001 = vmatprep.subr.bf16.mxu0 0
        %1002 = vmatpush1.bf16.msra.mxu0 %v697
        %1003 = vmatprep.subr.bf16.mxu0 0
        %1004 = vmatpush1.bf16.msra.mxu0 %v698
        %1005 = vmatprep.subr.bf16.mxu0 0
        %1006 = vmatpush1.bf16.msra.mxu0 0
        %1007 = vmatprep.subr.bf16.mxu0 0
        %1008 = vmatpush1.bf16.msra.mxu0 0
        %1009 = vmatprep.subr.bf16.mxu0 0
        %1010 = vmatpush1.bf16.msra.mxu0 0
        %1011 = vmatprep.subr.bf16.mxu0 0
        %1012 = vmatpush1.bf16.msra.mxu0 0
        %1013 = vmatprep.subr.bf16.mxu0 0
        %1014 = vmatpush1.bf16.msra.mxu0 0
        %1015 = vmatprep.subr.bf16.mxu0 0
        %1016 = vmatpush1.bf16.msra.mxu0 0
        %1017 = vmatprep.subr.bf16.mxu0 0
        %1018 = vmatpush1.bf16.msra.mxu0 0
        %1019 = vmatprep.subr.bf16.mxu0 0
        %1020 = vmatpush1.bf16.msra.mxu0 0
        %1021 = vmatprep.mubr.bf16.mxu0 0
        %1022 = vmatmul.mubr.bf16.gmra.mrb[0].mxu0 %v985
        %v1023 = vpop.f32.mrb[0].mxu0
        %v1024 = vadd.f32 0.0, %v1023
        %v1025 = vpop.f32.mrb[0].mxu0
        %v1026 = vpop.f32.mrb[0].mxu0
        %v1027 = vadd.f32 0.0, %v1026
        %v1028 = vpop.f32.mrb[0].mxu0
        %1029 = vmatprep.mubr.bf16.mxu0 0
        %1030 = vmatmul.mubr.bf16.gmra.mrb[0].mxu0 %v986
        %v1031 = vpop.f32.mrb[0].mxu0
        %v1032 = vadd.f32 0.0, %v1031
        %v1033 = vpop.f32.mrb[0].mxu0
        %v1034 = vpop.f32.mrb[0].mxu0
        %v1035 = vadd.f32 0.0, %v1034
        %v1036 = vpop.f32.mrb[0].mxu0
        %1037 = vdwg.mxu0
        %v1038 = vpack.c.bf16 %v1027, %v1024
        %v1039 = vpack.c.bf16 %v1035, %v1032
        %s1040 = scalar_lea.vmem %s5, 16
        %v1041 = vld [vmem:[%s1040] sm:$0xf]
        %v1042 = vld [vmem:[%s1040 + $0x4] sm:$0xf]
        %v1045 = vunpack.c.l.b16 %v1041
        %v1046 = vunpack.c.l.b16 %v1042
        %v1047 = vpack.c.b16 %v1046, %v1045
        %v1050 = vsel %vm674, %v1038, 0
        %v1053 = vsel %vm674, %v1039, 0
        %1055 = vmatprep.subr.bf16.mxu0 0
        %1056 = vmatpush1.bf16.msra.mxu0 %v1047
        %1057 = vmatprep.subr.bf16.mxu0 0
        %1058 = vmatpush1.bf16.msra.mxu0 0
        %1059 = vmatprep.subr.bf16.mxu0 0
        %1060 = vmatpush1.bf16.msra.mxu0 0
        %1061 = vmatprep.subr.bf16.mxu0 0
        %1062 = vmatpush1.bf16.msra.mxu0 0
        %1063 = vmatprep.subr.bf16.mxu0 0
        %1064 = vmatpush1.bf16.msra.mxu0 0
        %1065 = vmatprep.subr.bf16.mxu0 0
        %1066 = vmatpush1.bf16.msra.mxu0 0
        %1067 = vmatprep.subr.bf16.mxu0 0
        %1068 = vmatpush1.bf16.msra.mxu0 0
        %1069 = vmatprep.subr.bf16.mxu0 0
        %1070 = vmatpush1.bf16.msra.mxu0 0
        %1071 = vmatprep.subr.bf16.mxu0 0
        %1072 = vmatpush1.bf16.msra.mxu0 0
        %1073 = vmatprep.subr.bf16.mxu0 0
        %1074 = vmatpush1.bf16.msra.mxu0 0
        %1075 = vmatprep.subr.bf16.mxu0 0
        %1076 = vmatpush1.bf16.msra.mxu0 0
        %1077 = vmatprep.subr.bf16.mxu0 0
        %1078 = vmatpush1.bf16.msra.mxu0 0
        %1079 = vmatprep.subr.bf16.mxu0 0
        %1080 = vmatpush1.bf16.msra.mxu0 0
        %1081 = vmatprep.subr.bf16.mxu0 0
        %1082 = vmatpush1.bf16.msra.mxu0 0
        %1083 = vmatprep.subr.bf16.mxu0 0
        %1084 = vmatpush1.bf16.msra.mxu0 0
        %1085 = vmatprep.subr.bf16.mxu0 0
        %1086 = vmatpush1.bf16.msra.mxu0 0
        %1087 = vmatprep.mubr.bf16.mxu0 0
        %1088 = vmatmul.mubr.bf16.gmra.mrb[0].mxu0 %v1050
        %v1089 = vpop.f32.mrb[0].mxu0
        %v1090 = vadd.f32 0.0, %v1089
        %v1091 = vpop.f32.mrb[0].mxu0
        %v1092 = vpop.f32.mrb[0].mxu0
        %v1093 = vadd.f32 0.0, %v1092
        %v1094 = vpop.f32.mrb[0].mxu0
        %1095 = vmatprep.mubr.bf16.mxu0 0
        %1096 = vmatmul.mubr.bf16.gmra.mrb[0].mxu0 %v1053
        %v1097 = vpop.f32.mrb[0].mxu0
        %v1098 = vadd.f32 0.0, %v1097
        %v1099 = vpop.f32.mrb[0].mxu0
        %v1100 = vpop.f32.mrb[0].mxu0
        %v1101 = vadd.f32 0.0, %v1100
        %v1102 = vpop.f32.mrb[0].mxu0
        %1103 = vdwg.mxu0
        %v1104 = vadd.f32 %v968, %v1090
        %v1105 = vadd.f32 %v969, %v1093
        %v1106 = vadd.f32 %v970, %v1098
        %v1107 = vadd.f32 %v971, %v1101
        %vm1108 = vcmask 277504
        %1109 = vst.msk [vmem:[#allocation2] sm:$0xff] %vm1108, 0.0
        %1110 = vst.msk [vmem:[#allocation2 + $0x8] sm:$0xff] %vm1108, 0.0
        %1111 = vst.msk [vmem:[#allocation2 + $0x10] sm:$0xff] %vm1108, 0.0
        %1112 = vst.msk [vmem:[#allocation2 + $0x18] sm:$0xff] %vm1108, 0.0
        %vm1113 = vcmask 271360
        %1114 = vst.msk [vmem:[#allocation2 + $0x20] sm:$0x3] %vm1113, 0.0
        %v1115 = vld [vmem:[%s416] sm:$0xff]
        %v1116 = vld [vmem:[%s416 + $0x8] sm:$0xff]
        %v1117 = vld [vmem:[%s416 + $0x10] sm:$0xff]
        %v1118 = vld [vmem:[%s416 + $0x18] sm:$0xff]
        %1123 = vrot.lane.b32.xlu0 %v1115, 1
        %v1124 = vpop.permute.xlu0 %1123
        %1125 = vrot.lane.b32.xlu0 %v1116, 1
        %v1126 = vpop.permute.xlu0 %1125
        %1127 = vrot.lane.b32.xlu0 %v1117, 1
        %v1128 = vpop.permute.xlu0 %1127
        %1129 = vrot.lane.b32.xlu0 %v1118, 1
        %v1130 = vpop.permute.xlu0 %1129
        %vm1135 = vcmask 269320
        %1136 = vst.msk [vmem:[#allocation2 + $0x1] sm:$0xff] %vm1135, %v1124
        %1137 = vst.msk [vmem:[#allocation2 + $0x9] sm:$0xff] %vm1135, %v1126
        %1138 = vst.msk [vmem:[#allocation2 + $0x11] sm:$0xff] %vm1135, %v1128
        %1139 = vst.msk [vmem:[#allocation2 + $0x19] sm:$0xff] %vm1135, %v1130
        %v1140 = vld [vmem:[#allocation2] sm:$0xff]
        %v1141 = vld [vmem:[#allocation2 + $0x8] sm:$0xff]
        %v1142 = vld [vmem:[#allocation2 + $0x10] sm:$0xff]
        %v1143 = vld [vmem:[#allocation2 + $0x18] sm:$0xff]
        %v1144 = vld [vmem:[#allocation2 + $0x20] sm:$0x3]
        %s1145 = sld [smem:[#allocation4]]
        %v1146 = vstv %s1145
        %v1147 = vmul.f32 %v1146, %v1140
        %v1148 = vmul.f32 %v1146, %v1141
        %v1149 = vmul.f32 %v1146, %v1142
        %v1150 = vmul.f32 %v1146, %v1143
        %v1151 = vadd.f32 %v1104, %v1147
        %v1152 = vadd.f32 %v1105, %v1148
        %v1153 = vadd.f32 %v1106, %v1149
        %v1154 = vadd.f32 %v1107, %v1150
        %s1155 = sld [smem:[#allocation4 + $0x1]]
        %v1156 = vstv %s1155
        %v1157 = vmul.f32 %v1156, %v1140
        %v1158 = vmul.f32 %v1156, %v1141
        %v1159 = vmul.f32 %v1156, %v1142
        %v1160 = vmul.f32 %v1156, %v1143
        %1165 = vrot.lane.b32.xlu0 %v1157, 127
        %v1166 = vpop.permute.xlu0 %1165
        %1167 = vrot.lane.b32.xlu0 %v1158, 127
        %v1168 = vpop.permute.xlu0 %1167
        %1169 = vrot.lane.b32.xlu0 %v1159, 127
        %v1170 = vpop.permute.xlu0 %1169
        %1171 = vrot.lane.b32.xlu0 %v1160, 127
        %v1172 = vpop.permute.xlu0 %1171
        %v1177 = vadd.f32 %v1151, %v1166
        %v1178 = vadd.f32 %v1152, %v1168
        %v1179 = vadd.f32 %v1153, %v1170
        %v1180 = vadd.f32 %v1154, %v1172
        %s1181 = sld [smem:[#allocation4 + $0x2]]
        %v1182 = vstv %s1181
        %v1183 = vmul.f32 %v1182, %v1140
        %v1184 = vmul.f32 %v1182, %v1141
        %v1185 = vmul.f32 %v1182, %v1142
        %v1186 = vmul.f32 %v1182, %v1143
        %1191 = vrot.lane.b32.xlu0 %v1183, 126
        %v1192 = vpop.permute.xlu0 %1191
        %1193 = vrot.lane.b32.xlu0 %v1184, 126
        %v1194 = vpop.permute.xlu0 %1193
        %1195 = vrot.lane.b32.xlu0 %v1185, 126
        %v1196 = vpop.permute.xlu0 %1195
        %1197 = vrot.lane.b32.xlu0 %v1186, 126
        %v1198 = vpop.permute.xlu0 %1197
        %v1203 = vadd.f32 %v1177, %v1192
        %v1204 = vadd.f32 %v1178, %v1194
        %v1205 = vadd.f32 %v1179, %v1196
        %v1206 = vadd.f32 %v1180, %v1198
        %s1207 = sld [smem:[#allocation4 + $0x3]]
        %v1208 = vstv %s1207
        %v1209 = vmul.f32 %v1208, %v1140
        %v1210 = vmul.f32 %v1208, %v1141
        %v1211 = vmul.f32 %v1208, %v1142
        %v1212 = vmul.f32 %v1208, %v1143
        %v1213 = vmul.f32 %v1208, %v1144
        %vm1219 = vcmask 1046528
        %v1220 = vrot.slane %v1209, 1
        %v1221 = vrot.slane %v1210, 1
        %v1222 = vsel %vm1219, %v1220, %v1221
        %v1223 = vrot.slane %v1211, 1
        %v1224 = vsel %vm1219, %v1221, %v1223
        %v1225 = vrot.slane %v1212, 1
        %v1226 = vsel %vm1219, %v1223, %v1225
        %v1227 = vrot.slane %v1213, 1
        %v1228 = vsel %vm1219, %v1225, %v1227
        %v1233 = vadd.f32 %v1203, %v1222
        %v1234 = vadd.f32 %v1204, %v1224
        %v1235 = vadd.f32 %v1205, %v1226
        %v1236 = vadd.f32 %v1206, %v1228
        %s1237 = sld [smem:[#allocation4 + $0x4]]
        %v1238 = vstv %s1237
        %v1239 = vmul.f32 %v1238, %v1140
        %v1240 = vmul.f32 %v1238, %v1141
        %v1241 = vmul.f32 %v1238, %v1142
        %v1242 = vmul.f32 %v1238, %v1143
        %v1243 = vmul.f32 %v1238, %v1144
        %v1249 = vrot.slane %v1239, 1
        %v1250 = vrot.slane %v1240, 1
        %v1251 = vsel %vm1219, %v1249, %v1250
        %v1252 = vrot.slane %v1241, 1
        %v1253 = vsel %vm1219, %v1250, %v1252
        %v1254 = vrot.slane %v1242, 1
        %v1255 = vsel %vm1219, %v1252, %v1254
        %v1256 = vrot.slane %v1243, 1
        %v1257 = vsel %vm1219, %v1254, %v1256
        %1258 = vrot.lane.b32.xlu0 %v1251, 127
        %v1259 = vpop.permute.xlu0 %1258
        %1260 = vrot.lane.b32.xlu0 %v1253, 127
        %v1261 = vpop.permute.xlu0 %1260
        %1262 = vrot.lane.b32.xlu0 %v1255, 127
        %v1263 = vpop.permute.xlu0 %1262
        %1264 = vrot.lane.b32.xlu0 %v1257, 127
        %v1265 = vpop.permute.xlu0 %1264
        %v1270 = vadd.f32 %v1233, %v1259
        %v1271 = vadd.f32 %v1234, %v1261
        %v1272 = vadd.f32 %v1235, %v1263
        %v1273 = vadd.f32 %v1236, %v1265
        %s1274 = sld [smem:[#allocation4 + $0x5]]
        %v1275 = vstv %s1274
        %v1276 = vmul.f32 %v1275, %v1140
        %v1277 = vmul.f32 %v1275, %v1141
        %v1278 = vmul.f32 %v1275, %v1142
        %v1279 = vmul.f32 %v1275, %v1143
        %v1280 = vmul.f32 %v1275, %v1144
        %v1286 = vrot.slane %v1276, 1
        %v1287 = vrot.slane %v1277, 1
        %v1288 = vsel %vm1219, %v1286, %v1287
        %v1289 = vrot.slane %v1278, 1
        %v1290 = vsel %vm1219, %v1287, %v1289
        %v1291 = vrot.slane %v1279, 1
        %v1292 = vsel %vm1219, %v1289, %v1291
        %v1293 = vrot.slane %v1280, 1
        %v1294 = vsel %vm1219, %v1291, %v1293
        %1295 = vrot.lane.b32.xlu0 %v1288, 126
        %v1296 = vpop.permute.xlu0 %1295
        %1297 = vrot.lane.b32.xlu0 %v1290, 126
        %v1298 = vpop.permute.xlu0 %1297
        %1299 = vrot.lane.b32.xlu0 %v1292, 126
        %v1300 = vpop.permute.xlu0 %1299
        %1301 = vrot.lane.b32.xlu0 %v1294, 126
        %v1302 = vpop.permute.xlu0 %1301
        %v1307 = vadd.f32 %v1270, %v1296
        %v1308 = vadd.f32 %v1271, %v1298
        %v1309 = vadd.f32 %v1272, %v1300
        %v1310 = vadd.f32 %v1273, %v1302
        %s1311 = sld [smem:[#allocation4 + $0x6]]
        %v1312 = vstv %s1311
        %v1313 = vmul.f32 %v1312, %v1140
        %v1314 = vmul.f32 %v1312, %v1141
        %v1315 = vmul.f32 %v1312, %v1142
        %v1316 = vmul.f32 %v1312, %v1143
        %v1317 = vmul.f32 %v1312, %v1144
        %vm1323 = vcmask 1045504
        %v1324 = vrot.slane %v1313, 2
        %v1325 = vrot.slane %v1314, 2
        %v1326 = vsel %vm1323, %v1324, %v1325
        %v1327 = vrot.slane %v1315, 2
        %v1328 = vsel %vm1323, %v1325, %v1327
        %v1329 = vrot.slane %v1316, 2
        %v1330 = vsel %vm1323, %v1327, %v1329
        %v1331 = vrot.slane %v1317, 2
        %v1332 = vsel %vm1323, %v1329, %v1331
        %v1337 = vadd.f32 %v1307, %v1326
        %v1338 = vadd.f32 %v1308, %v1328
        %v1339 = vadd.f32 %v1309, %v1330
        %v1340 = vadd.f32 %v1310, %v1332
        %s1341 = sld [smem:[#allocation4 + $0x7]]
        %v1342 = vstv %s1341
        %v1343 = vmul.f32 %v1342, %v1140
        %v1344 = vmul.f32 %v1342, %v1141
        %v1345 = vmul.f32 %v1342, %v1142
        %v1346 = vmul.f32 %v1342, %v1143
        %v1347 = vmul.f32 %v1342, %v1144
        %v1353 = vrot.slane %v1343, 2
        %v1354 = vrot.slane %v1344, 2
        %v1355 = vsel %vm1323, %v1353, %v1354
        %v1356 = vrot.slane %v1345, 2
        %v1357 = vsel %vm1323, %v1354, %v1356
        %v1358 = vrot.slane %v1346, 2
        %v1359 = vsel %vm1323, %v1356, %v1358
        %v1360 = vrot.slane %v1347, 2
        %v1361 = vsel %vm1323, %v1358, %v1360
        %1362 = vrot.lane.b32.xlu0 %v1355, 127
        %v1363 = vpop.permute.xlu0 %1362
        %1364 = vrot.lane.b32.xlu0 %v1357, 127
        %v1365 = vpop.permute.xlu0 %1364
        %1366 = vrot.lane.b32.xlu0 %v1359, 127
        %v1367 = vpop.permute.xlu0 %1366
        %1368 = vrot.lane.b32.xlu0 %v1361, 127
        %v1369 = vpop.permute.xlu0 %1368
        %v1374 = vadd.f32 %v1337, %v1363
        %v1375 = vadd.f32 %v1338, %v1365
        %v1376 = vadd.f32 %v1339, %v1367
        %v1377 = vadd.f32 %v1340, %v1369
        %s1378 = sld [smem:[#allocation4 + $0x8]]
        %v1379 = vstv %s1378
        %v1380 = vmul.f32 %v1379, %v1140
        %v1381 = vmul.f32 %v1379, %v1141
        %v1382 = vmul.f32 %v1379, %v1142
        %v1383 = vmul.f32 %v1379, %v1143
        %v1384 = vmul.f32 %v1379, %v1144
        %v1390 = vrot.slane %v1380, 2
        %v1391 = vrot.slane %v1381, 2
        %v1392 = vsel %vm1323, %v1390, %v1391
        %v1393 = vrot.slane %v1382, 2
        %v1394 = vsel %vm1323, %v1391, %v1393
        %v1395 = vrot.slane %v1383, 2
        %v1396 = vsel %vm1323, %v1393, %v1395
        %v1397 = vrot.slane %v1384, 2
        %v1398 = vsel %vm1323, %v1395, %v1397
        %1399 = vrot.lane.b32.xlu0 %v1392, 126
        %v1400 = vpop.permute.xlu0 %1399
        %1401 = vrot.lane.b32.xlu0 %v1394, 126
        %v1402 = vpop.permute.xlu0 %1401
        %1403 = vrot.lane.b32.xlu0 %v1396, 126
        %v1404 = vpop.permute.xlu0 %1403
        %1405 = vrot.lane.b32.xlu0 %v1398, 126
        %v1406 = vpop.permute.xlu0 %1405
        %v1411 = vadd.f32 %v1374, %v1400
        %v1412 = vadd.f32 %v1375, %v1402
        %v1413 = vadd.f32 %v1376, %v1404
        %v1414 = vadd.f32 %v1377, %v1406
        %s1415 = scalar_lea.vmem %s416, 32
        %v1416 = vld [vmem:[%s1415] sm:$0xff]
        %v1417 = vld [vmem:[%s1415 + $0x8] sm:$0xff]
        %v1418 = vld [vmem:[%s1415 + $0x10] sm:$0xff]
        %v1419 = vld [vmem:[%s1415 + $0x18] sm:$0xff]
        %1424 = vrot.lane.b32.xlu0 %v1416, 1
        %v1425 = vpop.permute.xlu0 %1424
        %1426 = vrot.lane.b32.xlu0 %v1417, 1
        %v1427 = vpop.permute.xlu0 %1426
        %1428 = vrot.lane.b32.xlu0 %v1418, 1
        %v1429 = vpop.permute.xlu0 %1428
        %1430 = vrot.lane.b32.xlu0 %v1419, 1
        %v1431 = vpop.permute.xlu0 %1430
        %1436 = vst.msk [vmem:[#allocation2 + $0x1] sm:$0xff] %vm1135, %v1425
        %1437 = vst.msk [vmem:[#allocation2 + $0x9] sm:$0xff] %vm1135, %v1427
        %1438 = vst.msk [vmem:[#allocation2 + $0x11] sm:$0xff] %vm1135, %v1429
        %1439 = vst.msk [vmem:[#allocation2 + $0x19] sm:$0xff] %vm1135, %v1431
        %v1440 = vld [vmem:[#allocation2] sm:$0xff]
        %v1441 = vld [vmem:[#allocation2 + $0x8] sm:$0xff]
        %v1442 = vld [vmem:[#allocation2 + $0x10] sm:$0xff]
        %v1443 = vld [vmem:[#allocation2 + $0x18] sm:$0xff]
        %v1444 = vld [vmem:[#allocation2 + $0x20] sm:$0x3]
        %s1445 = sld [smem:[#allocation4 + $0x9]]
        %v1446 = vstv %s1445
        %v1447 = vmul.f32 %v1446, %v1440
        %v1448 = vmul.f32 %v1446, %v1441
        %v1449 = vmul.f32 %v1446, %v1442
        %v1450 = vmul.f32 %v1446, %v1443
        %v1451 = vadd.f32 %v1411, %v1447
        %v1452 = vadd.f32 %v1412, %v1448
        %v1453 = vadd.f32 %v1413, %v1449
        %v1454 = vadd.f32 %v1414, %v1450
        %s1455 = sld [smem:[#allocation4 + $0xa]]
        %v1456 = vstv %s1455
        %v1457 = vmul.f32 %v1456, %v1440
        %v1458 = vmul.f32 %v1456, %v1441
        %v1459 = vmul.f32 %v1456, %v1442
        %v1460 = vmul.f32 %v1456, %v1443
        %1465 = vrot.lane.b32.xlu0 %v1457, 127
        %v1466 = vpop.permute.xlu0 %1465
        %1467 = vrot.lane.b32.xlu0 %v1458, 127
        %v1468 = vpop.permute.xlu0 %1467
        %1469 = vrot.lane.b32.xlu0 %v1459, 127
        %v1470 = vpop.permute.xlu0 %1469
        %1471 = vrot.lane.b32.xlu0 %v1460, 127
        %v1472 = vpop.permute.xlu0 %1471
        %v1477 = vadd.f32 %v1451, %v1466
        %v1478 = vadd.f32 %v1452, %v1468
        %v1479 = vadd.f32 %v1453, %v1470
        %v1480 = vadd.f32 %v1454, %v1472
        %s1481 = sld [smem:[#allocation4 + $0xb]]
        %v1482 = vstv %s1481
        %v1483 = vmul.f32 %v1482, %v1440
        %v1484 = vmul.f32 %v1482, %v1441
        %v1485 = vmul.f32 %v1482, %v1442
        %v1486 = vmul.f32 %v1482, %v1443
        %1491 = vrot.lane.b32.xlu0 %v1483, 126
        %v1492 = vpop.permute.xlu0 %1491
        %1493 = vrot.lane.b32.xlu0 %v1484, 126
        %v1494 = vpop.permute.xlu0 %1493
        %1495 = vrot.lane.b32.xlu0 %v1485, 126
        %v1496 = vpop.permute.xlu0 %1495
        %1497 = vrot.lane.b32.xlu0 %v1486, 126
        %v1498 = vpop.permute.xlu0 %1497
        %v1503 = vadd.f32 %v1477, %v1492
        %v1504 = vadd.f32 %v1478, %v1494
        %v1505 = vadd.f32 %v1479, %v1496
        %v1506 = vadd.f32 %v1480, %v1498
        %s1507 = sld [smem:[#allocation4 + $0xc]]
        %v1508 = vstv %s1507
        %v1509 = vmul.f32 %v1508, %v1440
        %v1510 = vmul.f32 %v1508, %v1441
        %v1511 = vmul.f32 %v1508, %v1442
        %v1512 = vmul.f32 %v1508, %v1443
        %v1513 = vmul.f32 %v1508, %v1444
        %v1519 = vrot.slane %v1509, 1
        %v1520 = vrot.slane %v1510, 1
        %v1521 = vsel %vm1219, %v1519, %v1520
        %v1522 = vrot.slane %v1511, 1
        %v1523 = vsel %vm1219, %v1520, %v1522
        %v1524 = vrot.slane %v1512, 1
        %v1525 = vsel %vm1219, %v1522, %v1524
        %v1526 = vrot.slane %v1513, 1
        %v1527 = vsel %vm1219, %v1524, %v1526
        %v1532 = vadd.f32 %v1503, %v1521
        %v1533 = vadd.f32 %v1504, %v1523
        %v1534 = vadd.f32 %v1505, %v1525
        %v1535 = vadd.f32 %v1506, %v1527
        %s1536 = sld [smem:[#allocation4 + $0xd]]
        %v1537 = vstv %s1536
        %v1538 = vmul.f32 %v1537, %v1440
        %v1539 = vmul.f32 %v1537, %v1441
        %v1540 = vmul.f32 %v1537, %v1442
        %v1541 = vmul.f32 %v1537, %v1443
        %v1542 = vmul.f32 %v1537, %v1444
        %v1548 = vrot.slane %v1538, 1
        %v1549 = vrot.slane %v1539, 1
        %v1550 = vsel %vm1219, %v1548, %v1549
        %v1551 = vrot.slane %v1540, 1
        %v1552 = vsel %vm1219, %v1549, %v1551
        %v1553 = vrot.slane %v1541, 1
        %v1554 = vsel %vm1219, %v1551, %v1553
        %v1555 = vrot.slane %v1542, 1
        %v1556 = vsel %vm1219, %v1553, %v1555
        %1557 = vrot.lane.b32.xlu0 %v1550, 127
        %v1558 = vpop.permute.xlu0 %1557
        %1559 = vrot.lane.b32.xlu0 %v1552, 127
        %v1560 = vpop.permute.xlu0 %1559
        %1561 = vrot.lane.b32.xlu0 %v1554, 127
        %v1562 = vpop.permute.xlu0 %1561
        %1563 = vrot.lane.b32.xlu0 %v1556, 127
        %v1564 = vpop.permute.xlu0 %1563
        %v1569 = vadd.f32 %v1532, %v1558
        %v1570 = vadd.f32 %v1533, %v1560
        %v1571 = vadd.f32 %v1534, %v1562
        %v1572 = vadd.f32 %v1535, %v1564
        %s1573 = sld [smem:[#allocation4 + $0xe]]
        %v1574 = vstv %s1573
        %v1575 = vmul.f32 %v1574, %v1440
        %v1576 = vmul.f32 %v1574, %v1441
        %v1577 = vmul.f32 %v1574, %v1442
        %v1578 = vmul.f32 %v1574, %v1443
        %v1579 = vmul.f32 %v1574, %v1444
        %v1585 = vrot.slane %v1575, 1
        %v1586 = vrot.slane %v1576, 1
        %v1587 = vsel %vm1219, %v1585, %v1586
        %v1588 = vrot.slane %v1577, 1
        %v1589 = vsel %vm1219, %v1586, %v1588
        %v1590 = vrot.slane %v1578, 1
        %v1591 = vsel %vm1219, %v1588, %v1590
        %v1592 = vrot.slane %v1579, 1
        %v1593 = vsel %vm1219, %v1590, %v1592
        %1594 = vrot.lane.b32.xlu0 %v1587, 126
        %v1595 = vpop.permute.xlu0 %1594
        %1596 = vrot.lane.b32.xlu0 %v1589, 126
        %v1597 = vpop.permute.xlu0 %1596
        %1598 = vrot.lane.b32.xlu0 %v1591, 126
        %v1599 = vpop.permute.xlu0 %1598
        %1600 = vrot.lane.b32.xlu0 %v1593, 126
        %v1601 = vpop.permute.xlu0 %1600
        %v1606 = vadd.f32 %v1569, %v1595
        %v1607 = vadd.f32 %v1570, %v1597
        %v1608 = vadd.f32 %v1571, %v1599
        %v1609 = vadd.f32 %v1572, %v1601
        %s1610 = sld [smem:[#allocation4 + $0xf]]
        %v1611 = vstv %s1610
        %v1612 = vmul.f32 %v1611, %v1440
        %v1613 = vmul.f32 %v1611, %v1441
        %v1614 = vmul.f32 %v1611, %v1442
        %v1615 = vmul.f32 %v1611, %v1443
        %v1616 = vmul.f32 %v1611, %v1444
        %v1622 = vrot.slane %v1612, 2
        %v1623 = vrot.slane %v1613, 2
        %v1624 = vsel %vm1323, %v1622, %v1623
        %v1625 = vrot.slane %v1614, 2
        %v1626 = vsel %vm1323, %v1623, %v1625
        %v1627 = vrot.slane %v1615, 2
        %v1628 = vsel %vm1323, %v1625, %v1627
        %v1629 = vrot.slane %v1616, 2
        %v1630 = vsel %vm1323, %v1627, %v1629
        %v1635 = vadd.f32 %v1606, %v1624
        %v1636 = vadd.f32 %v1607, %v1626
        %v1637 = vadd.f32 %v1608, %v1628
        %v1638 = vadd.f32 %v1609, %v1630
        %s1639 = sld [smem:[#allocation4 + $0x10]]
        %v1640 = vstv %s1639
        %v1641 = vmul.f32 %v1640, %v1440
        %v1642 = vmul.f32 %v1640, %v1441
        %v1643 = vmul.f32 %v1640, %v1442
        %v1644 = vmul.f32 %v1640, %v1443
        %v1645 = vmul.f32 %v1640, %v1444
        %v1651 = vrot.slane %v1641, 2
        %v1652 = vrot.slane %v1642, 2
        %v1653 = vsel %vm1323, %v1651, %v1652
        %v1654 = vrot.slane %v1643, 2
        %v1655 = vsel %vm1323, %v1652, %v1654
        %v1656 = vrot.slane %v1644, 2
        %v1657 = vsel %vm1323, %v1654, %v1656
        %v1658 = vrot.slane %v1645, 2
        %v1659 = vsel %vm1323, %v1656, %v1658
        %1660 = vrot.lane.b32.xlu0 %v1653, 127
        %v1661 = vpop.permute.xlu0 %1660
        %1662 = vrot.lane.b32.xlu0 %v1655, 127
        %v1663 = vpop.permute.xlu0 %1662
        %1664 = vrot.lane.b32.xlu0 %v1657, 127
        %v1665 = vpop.permute.xlu0 %1664
        %1666 = vrot.lane.b32.xlu0 %v1659, 127
        %v1667 = vpop.permute.xlu0 %1666
        %v1672 = vadd.f32 %v1635, %v1661
        %v1673 = vadd.f32 %v1636, %v1663
        %v1674 = vadd.f32 %v1637, %v1665
        %v1675 = vadd.f32 %v1638, %v1667
        %s1676 = sld [smem:[#allocation4 + $0x11]]
        %v1677 = vstv %s1676
        %v1678 = vmul.f32 %v1677, %v1440
        %v1679 = vmul.f32 %v1677, %v1441
        %v1680 = vmul.f32 %v1677, %v1442
        %v1681 = vmul.f32 %v1677, %v1443
        %v1682 = vmul.f32 %v1677, %v1444
        %v1688 = vrot.slane %v1678, 2
        %v1689 = vrot.slane %v1679, 2
        %v1690 = vsel %vm1323, %v1688, %v1689
        %v1691 = vrot.slane %v1680, 2
        %v1692 = vsel %vm1323, %v1689, %v1691
        %v1693 = vrot.slane %v1681, 2
        %v1694 = vsel %vm1323, %v1691, %v1693
        %v1695 = vrot.slane %v1682, 2
        %v1696 = vsel %vm1323, %v1693, %v1695
        %1697 = vrot.lane.b32.xlu0 %v1690, 126
        %v1698 = vpop.permute.xlu0 %1697
        %1699 = vrot.lane.b32.xlu0 %v1692, 126
        %v1700 = vpop.permute.xlu0 %1699
        %1701 = vrot.lane.b32.xlu0 %v1694, 126
        %v1702 = vpop.permute.xlu0 %1701
        %1703 = vrot.lane.b32.xlu0 %v1696, 126
        %v1704 = vpop.permute.xlu0 %1703
        %v1709 = vadd.f32 %v1672, %v1698
        %v1710 = vadd.f32 %v1673, %v1700
        %v1711 = vadd.f32 %v1674, %v1702
        %v1712 = vadd.f32 %v1675, %v1704
        %s1713 = scalar_lea.vmem %s416, 64
        %v1714 = vld [vmem:[%s1713] sm:$0xff]
        %v1715 = vld [vmem:[%s1713 + $0x8] sm:$0xff]
        %v1716 = vld [vmem:[%s1713 + $0x10] sm:$0xff]
        %v1717 = vld [vmem:[%s1713 + $0x18] sm:$0xff]
        %1722 = vrot.lane.b32.xlu0 %v1714, 1
        %v1723 = vpop.permute.xlu0 %1722
        %1724 = vrot.lane.b32.xlu0 %v1715, 1
        %v1725 = vpop.permute.xlu0 %1724
        %1726 = vrot.lane.b32.xlu0 %v1716, 1
        %v1727 = vpop.permute.xlu0 %1726
        %1728 = vrot.lane.b32.xlu0 %v1717, 1
        %v1729 = vpop.permute.xlu0 %1728
        %1734 = vst.msk [vmem:[#allocation2 + $0x1] sm:$0xff] %vm1135, %v1723
        %1735 = vst.msk [vmem:[#allocation2 + $0x9] sm:$0xff] %vm1135, %v1725
        %1736 = vst.msk [vmem:[#allocation2 + $0x11] sm:$0xff] %vm1135, %v1727
        %1737 = vst.msk [vmem:[#allocation2 + $0x19] sm:$0xff] %vm1135, %v1729
        %v1738 = vld [vmem:[#allocation2] sm:$0xff]
        %v1739 = vld [vmem:[#allocation2 + $0x8] sm:$0xff]
        %v1740 = vld [vmem:[#allocation2 + $0x10] sm:$0xff]
        %v1741 = vld [vmem:[#allocation2 + $0x18] sm:$0xff]
        %v1742 = vld [vmem:[#allocation2 + $0x20] sm:$0x3]
        %s1743 = sld [smem:[#allocation4 + $0x12]]
        %v1744 = vstv %s1743
        %v1745 = vmul.f32 %v1744, %v1738
        %v1746 = vmul.f32 %v1744, %v1739
        %v1747 = vmul.f32 %v1744, %v1740
        %v1748 = vmul.f32 %v1744, %v1741
        %v1749 = vadd.f32 %v1709, %v1745
        %v1750 = vadd.f32 %v1710, %v1746
        %v1751 = vadd.f32 %v1711, %v1747
        %v1752 = vadd.f32 %v1712, %v1748
        %s1753 = sld [smem:[#allocation4 + $0x13]]
        %v1754 = vstv %s1753
        %v1755 = vmul.f32 %v1754, %v1738
        %v1756 = vmul.f32 %v1754, %v1739
        %v1757 = vmul.f32 %v1754, %v1740
        %v1758 = vmul.f32 %v1754, %v1741
        %1763 = vrot.lane.b32.xlu0 %v1755, 127
        %v1764 = vpop.permute.xlu0 %1763
        %1765 = vrot.lane.b32.xlu0 %v1756, 127
        %v1766 = vpop.permute.xlu0 %1765
        %1767 = vrot.lane.b32.xlu0 %v1757, 127
        %v1768 = vpop.permute.xlu0 %1767
        %1769 = vrot.lane.b32.xlu0 %v1758, 127
        %v1770 = vpop.permute.xlu0 %1769
        %v1775 = vadd.f32 %v1749, %v1764
        %v1776 = vadd.f32 %v1750, %v1766
        %v1777 = vadd.f32 %v1751, %v1768
        %v1778 = vadd.f32 %v1752, %v1770
        %s1779 = sld [smem:[#allocation4 + $0x14]]
        %v1780 = vstv %s1779
        %v1781 = vmul.f32 %v1780, %v1738
        %v1782 = vmul.f32 %v1780, %v1739
        %v1783 = vmul.f32 %v1780, %v1740
        %v1784 = vmul.f32 %v1780, %v1741
        %1789 = vrot.lane.b32.xlu0 %v1781, 126
        %v1790 = vpop.permute.xlu0 %1789
        %1791 = vrot.lane.b32.xlu0 %v1782, 126
        %v1792 = vpop.permute.xlu0 %1791
        %1793 = vrot.lane.b32.xlu0 %v1783, 126
        %v1794 = vpop.permute.xlu0 %1793
        %1795 = vrot.lane.b32.xlu0 %v1784, 126
        %v1796 = vpop.permute.xlu0 %1795
        %v1801 = vadd.f32 %v1775, %v1790
        %v1802 = vadd.f32 %v1776, %v1792
        %v1803 = vadd.f32 %v1777, %v1794
        %v1804 = vadd.f32 %v1778, %v1796
        %s1805 = sld [smem:[#allocation4 + $0x15]]
        %v1806 = vstv %s1805
        %v1807 = vmul.f32 %v1806, %v1738
        %v1808 = vmul.f32 %v1806, %v1739
        %v1809 = vmul.f32 %v1806, %v1740
        %v1810 = vmul.f32 %v1806, %v1741
        %v1811 = vmul.f32 %v1806, %v1742
        %v1817 = vrot.slane %v1807, 1
        %v1818 = vrot.slane %v1808, 1
        %v1819 = vsel %vm1219, %v1817, %v1818
        %v1820 = vrot.slane %v1809, 1
        %v1821 = vsel %vm1219, %v1818, %v1820
        %v1822 = vrot.slane %v1810, 1
        %v1823 = vsel %vm1219, %v1820, %v1822
        %v1824 = vrot.slane %v1811, 1
        %v1825 = vsel %vm1219, %v1822, %v1824
        %v1830 = vadd.f32 %v1801, %v1819
        %v1831 = vadd.f32 %v1802, %v1821
        %v1832 = vadd.f32 %v1803, %v1823
        %v1833 = vadd.f32 %v1804, %v1825
        %s1834 = sld [smem:[#allocation4 + $0x16]]
        %v1835 = vstv %s1834
        %v1836 = vmul.f32 %v1835, %v1738
        %v1837 = vmul.f32 %v1835, %v1739
        %v1838 = vmul.f32 %v1835, %v1740
        %v1839 = vmul.f32 %v1835, %v1741
        %v1840 = vmul.f32 %v1835, %v1742
        %v1846 = vrot.slane %v1836, 1
        %v1847 = vrot.slane %v1837, 1
        %v1848 = vsel %vm1219, %v1846, %v1847
        %v1849 = vrot.slane %v1838, 1
        %v1850 = vsel %vm1219, %v1847, %v1849
        %v1851 = vrot.slane %v1839, 1
        %v1852 = vsel %vm1219, %v1849, %v1851
        %v1853 = vrot.slane %v1840, 1
        %v1854 = vsel %vm1219, %v1851, %v1853
        %1855 = vrot.lane.b32.xlu0 %v1848, 127
        %v1856 = vpop.permute.xlu0 %1855
        %1857 = vrot.lane.b32.xlu0 %v1850, 127
        %v1858 = vpop.permute.xlu0 %1857
        %1859 = vrot.lane.b32.xlu0 %v1852, 127
        %v1860 = vpop.permute.xlu0 %1859
        %1861 = vrot.lane.b32.xlu0 %v1854, 127
        %v1862 = vpop.permute.xlu0 %1861
        %v1867 = vadd.f32 %v1830, %v1856
        %v1868 = vadd.f32 %v1831, %v1858
        %v1869 = vadd.f32 %v1832, %v1860
        %v1870 = vadd.f32 %v1833, %v1862
        %s1871 = sld [smem:[#allocation4 + $0x17]]
        %v1872 = vstv %s1871
        %v1873 = vmul.f32 %v1872, %v1738
        %v1874 = vmul.f32 %v1872, %v1739
        %v1875 = vmul.f32 %v1872, %v1740
        %v1876 = vmul.f32 %v1872, %v1741
        %v1877 = vmul.f32 %v1872, %v1742
        %v1883 = vrot.slane %v1873, 1
        %v1884 = vrot.slane %v1874, 1
        %v1885 = vsel %vm1219, %v1883, %v1884
        %v1886 = vrot.slane %v1875, 1
        %v1887 = vsel %vm1219, %v1884, %v1886
        %v1888 = vrot.slane %v1876, 1
        %v1889 = vsel %vm1219, %v1886, %v1888
        %v1890 = vrot.slane %v1877, 1
        %v1891 = vsel %vm1219, %v1888, %v1890
        %1892 = vrot.lane.b32.xlu0 %v1885, 126
        %v1893 = vpop.permute.xlu0 %1892
        %1894 = vrot.lane.b32.xlu0 %v1887, 126
        %v1895 = vpop.permute.xlu0 %1894
        %1896 = vrot.lane.b32.xlu0 %v1889, 126
        %v1897 = vpop.permute.xlu0 %1896
        %1898 = vrot.lane.b32.xlu0 %v1891, 126
        %v1899 = vpop.permute.xlu0 %1898
        %v1904 = vadd.f32 %v1867, %v1893
        %v1905 = vadd.f32 %v1868, %v1895
        %v1906 = vadd.f32 %v1869, %v1897
        %v1907 = vadd.f32 %v1870, %v1899
        %s1908 = sld [smem:[#allocation4 + $0x18]]
        %v1909 = vstv %s1908
        %v1910 = vmul.f32 %v1909, %v1738
        %v1911 = vmul.f32 %v1909, %v1739
        %v1912 = vmul.f32 %v1909, %v1740
        %v1913 = vmul.f32 %v1909, %v1741
        %v1914 = vmul.f32 %v1909, %v1742
        %v1920 = vrot.slane %v1910, 2
        %v1921 = vrot.slane %v1911, 2
        %v1922 = vsel %vm1323, %v1920, %v1921
        %v1923 = vrot.slane %v1912, 2
        %v1924 = vsel %vm1323, %v1921, %v1923
        %v1925 = vrot.slane %v1913, 2
        %v1926 = vsel %vm1323, %v1923, %v1925
        %v1927 = vrot.slane %v1914, 2
        %v1928 = vsel %vm1323, %v1925, %v1927
        %v1933 = vadd.f32 %v1904, %v1922
        %v1934 = vadd.f32 %v1905, %v1924
        %v1935 = vadd.f32 %v1906, %v1926
        %v1936 = vadd.f32 %v1907, %v1928
        %s1937 = sld [smem:[#allocation4 + $0x19]]
        %v1938 = vstv %s1937
        %v1939 = vmul.f32 %v1938, %v1738
        %v1940 = vmul.f32 %v1938, %v1739
        %v1941 = vmul.f32 %v1938, %v1740
        %v1942 = vmul.f32 %v1938, %v1741
        %v1943 = vmul.f32 %v1938, %v1742
        %v1949 = vrot.slane %v1939, 2
        %v1950 = vrot.slane %v1940, 2
        %v1951 = vsel %vm1323, %v1949, %v1950
        %v1952 = vrot.slane %v1941, 2
        %v1953 = vsel %vm1323, %v1950, %v1952
        %v1954 = vrot.slane %v1942, 2
        %v1955 = vsel %vm1323, %v1952, %v1954
        %v1956 = vrot.slane %v1943, 2
        %v1957 = vsel %vm1323, %v1954, %v1956
        %1958 = vrot.lane.b32.xlu0 %v1951, 127
        %v1959 = vpop.permute.xlu0 %1958
        %1960 = vrot.lane.b32.xlu0 %v1953, 127
        %v1961 = vpop.permute.xlu0 %1960
        %1962 = vrot.lane.b32.xlu0 %v1955, 127
        %v1963 = vpop.permute.xlu0 %1962
        %1964 = vrot.lane.b32.xlu0 %v1957, 127
        %v1965 = vpop.permute.xlu0 %1964
        %v1970 = vadd.f32 %v1933, %v1959
        %v1971 = vadd.f32 %v1934, %v1961
        %v1972 = vadd.f32 %v1935, %v1963
        %v1973 = vadd.f32 %v1936, %v1965
        %s1974 = sld [smem:[#allocation4 + $0x1a]]
        %v1975 = vstv %s1974
        %v1976 = vmul.f32 %v1975, %v1738
        %v1977 = vmul.f32 %v1975, %v1739
        %v1978 = vmul.f32 %v1975, %v1740
        %v1979 = vmul.f32 %v1975, %v1741
        %v1980 = vmul.f32 %v1975, %v1742
        %v1986 = vrot.slane %v1976, 2
        %v1987 = vrot.slane %v1977, 2
        %v1988 = vsel %vm1323, %v1986, %v1987
        %v1989 = vrot.slane %v1978, 2
        %v1990 = vsel %vm1323, %v1987, %v1989
        %v1991 = vrot.slane %v1979, 2
        %v1992 = vsel %vm1323, %v1989, %v1991
        %v1993 = vrot.slane %v1980, 2
        %v1994 = vsel %vm1323, %v1991, %v1993
        %1995 = vrot.lane.b32.xlu0 %v1988, 126
        %v1996 = vpop.permute.xlu0 %1995
        %1997 = vrot.lane.b32.xlu0 %v1990, 126
        %v1998 = vpop.permute.xlu0 %1997
        %1999 = vrot.lane.b32.xlu0 %v1992, 126
        %v2000 = vpop.permute.xlu0 %1999
        %2001 = vrot.lane.b32.xlu0 %v1994, 126
        %v2002 = vpop.permute.xlu0 %2001
        %v2007 = vadd.f32 %v1970, %v1996
        %v2008 = vadd.f32 %v1971, %v1998
        %v2009 = vadd.f32 %v1972, %v2000
        %v2010 = vadd.f32 %v1973, %v2002
        %v2011 = vxor.u32 %v2007, 2147483648
        %v2012 = vxor.u32 %v2008, 2147483648
        %v2013 = vxor.u32 %v2009, 2147483648
        %v2014 = vxor.u32 %v2010, 2147483648
        %v2015 = vmul.f32 %v2011, 1.442695
        %v2016 = vpow.pop %v2015
        %v2017 = vmul.f32 %v2012, 1.442695
        %v2018 = vpow.pop %v2017
        %v2019 = vmul.f32 %v2013, 1.442695
        %v2020 = vpow.pop %v2019
        %v2021 = vmul.f32 %v2014, 1.442695
        %v2022 = vpow.pop %v2021
        %v2023 = vadd.f32 %v2016, 1.0
        %v2024 = vadd.f32 %v2018, 1.0
        %v2025 = vadd.f32 %v2020, 1.0
        %v2026 = vadd.f32 %v2022, 1.0
        %v2027 = vrcp.pop %v2023
        %v2028 = vmul.f32 1.0, %v2027
        %v2029 = vrcp.pop %v2024
        %v2030 = vmul.f32 1.0, %v2029
        %v2031 = vrcp.pop %v2025
        %v2032 = vmul.f32 1.0, %v2031
        %v2033 = vrcp.pop %v2026
        %v2034 = vmul.f32 1.0, %v2033
        %vm2035 = vcmask 261120
        %2036 = vst.msk [vmem:[%s396] sm:$0xff] %vm2035, %v2028
        %2037 = vst.msk [vmem:[%s396 + $0x8] sm:$0xff] %vm2035, %v2030
        %2038 = vst.msk [vmem:[%s396 + $0x10] sm:$0xff] %vm2035, %v2032
        %2039 = vst.msk [vmem:[%s396 + $0x18] sm:$0xff] %vm2035, %v2034
        %s2040 = sand.u32 %s225, 1
        %s2041 = scalar_lea.sflag [#allocation5], %s2040
        %s2042 = sand.u32 %s225, 1
        %s2043 = smul.addr %s2042, 128
        %s2044 = scalar_lea.vmem [#allocation7], %s2043
        %s2045 = sand.u32 %s251, 1
        %s2046 = scalar_lea.sflag [#allocation9], %s2045
        %s2047 = sand.u32 %s251, 1
        %s2048 = smul.addr %s2047, 32
        %s2049 = scalar_lea.vmem [#allocation8], %s2048
        // Predicated region
        $region57: #{layer2_for_hr_branch_forward.3} parent=51 // pred_check
          %p2050 = pneg %p235
        $region58: #{layer2_for_hr_branch_forward.3} parent=51 // pred_check_branch
          %2052 = sbr.rel (%p2050) target = $region60
        $region59: #{layer2_for_hr_branch_forward.3} parent=51 // pred_region
          %s2054 = ssub.s32 2048, 2048
          %2055 = vsyncadd %s2041, %s2054
          %s2056 = smul.addr %s29, 16
          %s2057 = smul.addr %s2056, 128
          %s2058 = scalar_lea.hbm %s8, %s2057
          %s2059 = sshll.u32 %s2044, 4
          %s2060 = int_to_ptr.vmem [resolvable:$true] %s2059
          %2065 = dma.vmem_to_hbm [thread:$0]  %s2060, 2048, %s2058, %s2041, 128, 128, 8
        $region60: #{layer2_for_hr_branch_forward.3} parent=51 // pred_fallthru
          _
        // Predicated region
        $region61: #{layer2_for_hr_branch_forward.3} parent=51 // pred_check
          %p2066 = pneg %p261
        $region62: #{layer2_for_hr_branch_forward.3} parent=51 // pred_check_branch
          %2068 = sbr.rel (%p2066) target = $region64
        $region63: #{layer2_for_hr_branch_forward.3} parent=51 // pred_region
          %s2070 = ssub.s32 512, 512
          %2071 = vsyncadd %s2046, %s2070
          %s2072 = smul.addr %s29, 4
          %s2073 = smul.addr %s2072, 128
          %s2074 = scalar_lea.hbm %s9, %s2073
          %s2075 = sshll.u32 %s2049, 4
          %s2076 = int_to_ptr.vmem [resolvable:$true] %s2075
          %2081 = dma.vmem_to_hbm [thread:$0]  %s2076, 512, %s2074, %s2046, 128, 128, 8
        $region64: #{layer2_for_hr_branch_forward.3} parent=51 // pred_fallthru
          _
      $region52: #{layer2_for_hr_branch_forward.3} parent=5 // pred_fallthru
        _
      %p2082 = scmp.le.s32.totalorder 2, %s24
      // Predicated region
      $region65: #{layer2_for_hr_branch_forward.3} parent=5 // pred_check
        %p2083 = pneg %p2082
      $region66: #{layer2_for_hr_branch_forward.3} parent=5 // pred_check_branch
        %2085 = sbr.rel (%p2083) target = $region68
      $region67: #{layer2_for_hr_branch_forward.3} parent=5 // pred_region
        %s2086 = ssub.s32 %s24, 2
        // Predicated region
        $region69: #{layer2_for_hr_branch_forward.3} parent=67 // pred_check
          %p2087 = pneg %p241
        $region70: #{layer2_for_hr_branch_forward.3} parent=67 // pred_check_branch
          %2089 = sbr.rel (%p2087) target = $region72
        $region71: #{layer2_for_hr_branch_forward.3} parent=67 // pred_region
          %s2090 = sand.u32 %s226, 1
          %s2091 = scalar_lea.sflag [#allocation5], %s2090
          %s2092 = sand.u32 %s226, 1
          %s2093 = smul.addr %s2092, 128
          %s2094 = scalar_lea.vmem [#allocation7], %s2093
          %2095 = dma.done %s2091, 2048
        $region72: #{layer2_for_hr_branch_forward.3} parent=67 // pred_fallthru
          _
        // Predicated region
        $region73: #{layer2_for_hr_branch_forward.3} parent=67 // pred_check
          %p2096 = pneg %p267
        $region74: #{layer2_for_hr_branch_forward.3} parent=67 // pred_check_branch
          %2098 = sbr.rel (%p2096) target = $region76
        $region75: #{layer2_for_hr_branch_forward.3} parent=67 // pred_region
          %s2099 = sand.u32 %s252, 1
          %s2100 = scalar_lea.sflag [#allocation9], %s2099
          %s2101 = sand.u32 %s252, 1
          %s2102 = smul.addr %s2101, 32
          %s2103 = scalar_lea.vmem [#allocation8], %s2102
          %2104 = dma.done %s2100, 512
        $region76: #{layer2_for_hr_branch_forward.3} parent=67 // pred_fallthru
          _
      $region68: #{layer2_for_hr_branch_forward.3} parent=5 // pred_fallthru
        _
    $region6: #{layer2_for_hr_branch_forward.3} parent=1 // loop_footer
      %s28 = sadd.s32 1, %s24
    $region7: #{layer2_for_hr_branch_forward.3} parent=1 // loop_footer_branch
      %23 = sbr.rel target = $region3
    $region8: #{layer2_for_hr_branch_forward.3} parent=1 // loop_exit
      _
    %2105 = vsyncpa [#allocation5], 1
    %s2106 = scalar_lea.sflag [#allocation5], 1
    %2107 = vsyncpa %s2106, 1
    %2108 = vsyncpa [#allocation9], 1
    %s2109 = scalar_lea.sflag [#allocation9], 1
    %2110 = vsyncpa %s2109, 1
    %2111 = vsyncpa [#allocation6], 1
    %s2112 = scalar_lea.sflag [#allocation6], 1
    %2113 = vsyncpa %s2112, 1

// kernel: layer2_for_hr_branch_forward.2
$region0: #{layer2_for_hr_branch_forward.2}
  #allocation0 [shape = 'u32[]', space=smem, size = 0x4, offset = 0x4, fixed_abs, tag = 'smem constant byte address 0x4 - core index']
  #allocation1 [shape = 'u32[144,128]{1,0:T(1,128)}', space=vmem, size = 0x12000, scoped, tag = 'internal scratch']
  #allocation2 [shape = 'bf16[18,18,4]{2,1,0:T(8,128)(2,1)}', space=vmem, size = 0x1b000, scoped, tag = 'scratch operand']
  #allocation3 [shape = 'bf16[256,36]{1,0:T(16,128)(2,1)}', space=vmem, size = 0x10000, scoped, tag = 'scratch operand']
  %s0 = inlined_call_operand.vmem [shape: bf16[2,16,16,4], index: 0, kind: input, shape index: {}]
  %s1 = inlined_call_operand.vmem [shape: bf16[36,8], index: 1, kind: input, shape index: {}]
  %s2 = inlined_call_operand.vmem [shape: f32[2,8,256], index: 2, kind: output, shape index: {0}]
  %s3 = inlined_call_operand.vmem [shape: f32[2,1,8], index: 3, kind: output, shape index: {1}]
  %s4 = inlined_call_operand.vmem [shape: f32[2,1,8], index: 4, kind: output, shape index: {2}]
  %5 = xla_tuple %s2, %s3, %s4
  %s6 = sld [smem:[#allocation0]]
  $region57: #{layer2_for_hr_branch_forward.2} parent=0
    _
  %s8 = ssub.s32 1, %s6
  %s9 = scalar_select 0, %s8, %s6
  loop: start=0, step=1, limit=4
  $region2: #{layer2_for_hr_branch_forward.2} parent=0 // loop_pre_header
    _
  $region3: #{layer2_for_hr_branch_forward.2} parent=0 // loop_header
    %s11 = sphi 0, %s15
    %p12 = scmp.ge.s32.totalorder %s11, 4
    %s21 = sphi 0, %s23
    %s24 = sphi 0, %s21
    %s25 = sphi 0, %s24
    %s41 = sphi 0, %s25
    %s45 = sphi 0, %s45
    %s47 = sphi 0, %s45
    %s48 = sphi 0, %s47
    %s62 = sphi 0, %s48
    %s68 = sphi 0, %s70
    %s71 = sphi 0, %s68
    %s72 = sphi 0, %s71
    %s88 = sphi 0, %s72
    %s94 = sphi 0, %s96
    %s97 = sphi 0, %s94
    %s98 = sphi 0, %s97
    %s114 = sphi 0, %s98
    %s120 = sphi 0, %s122
    %s123 = sphi 0, %s120
    %s124 = sphi 0, %s123
    %s140 = sphi 0, %s124
  $region4: #{layer2_for_hr_branch_forward.2} parent=0 // loop_header_branch
    %14 = sbr.rel (%p12) target = $region8
  $region5: #{layer2_for_hr_branch_forward.2} parent=0 // loop_body
    %s16 = ssub.s32 %s11, 1
    %s17 = ssub.s32 %s11, 2
    %s18 = sadd.s32 %s11, 1
    %s19 = ssub.s32 %s11, %s18
    %p20 = scmp.eq.s32.totalorder %s19, 0
    %s22 = sadd.s32 %s21, 1
    %s23 = scalar_select %p20, %s21, %s22
    %p26 = pneg %p20
    %p27 = scmp.eq.s32.totalorder %s11, 1
    %p28 = por %p26, %p27
    %p29 = scmp.ne.s32.totalorder %s21, %s24
    %p30 = scmp.eq.s32.totalorder %s11, 0
    %p31 = por %p29, %p30
    %p32 = scmp.ne.s32.totalorder %s21, %s24
    %p33 = scmp.eq.s32.totalorder %s16, 1
    %p34 = por %p32, %p33
    %p35 = scmp.ne.s32.totalorder %s24, %s25
    %p36 = scmp.eq.s32.totalorder %s16, 0
    %p37 = por %p35, %p36
    %p38 = scmp.ne.s32.totalorder %s24, %s25
    %p39 = scmp.eq.s32.totalorder %s17, 1
    %p40 = por %p38, %p39
    %p42 = scmp.ne.s32.totalorder %s25, %s41
    %p43 = scmp.eq.s32.totalorder %s17, 0
    %p44 = por %p42, %p43
    %s46 = sadd.s32 %s45, 1
    %p49 = scmp.eq.s32.totalorder %s11, 1
    %p50 = scmp.ne.s32.totalorder %s45, %s47
    %p51 = scmp.eq.s32.totalorder %s11, 0
    %p52 = por %p50, %p51
    %p53 = scmp.ne.s32.totalorder %s45, %s47
    %p54 = scmp.eq.s32.totalorder %s16, 1
    %p55 = por %p53, %p54
    %p56 = scmp.ne.s32.totalorder %s47, %s48
    %p57 = scmp.eq.s32.totalorder %s16, 0
    %p58 = por %p56, %p57
    %p59 = scmp.ne.s32.totalorder %s47, %s48
    %p60 = scmp.eq.s32.totalorder %s17, 1
    %p61 = por %p59, %p60
    %p63 = scmp.ne.s32.totalorder %s48, %s62
    %p64 = scmp.eq.s32.totalorder %s17, 0
    %p65 = por %p63, %p64
    %s66 = ssub.s32 %s11, %s18
    %p67 = scmp.eq.s32.totalorder %s66, 0
    %s69 = sadd.s32 %s68, 1
    %s70 = scalar_select %p67, %s68, %s69
    %p73 = pneg %p67
    %p74 = scmp.eq.s32.totalorder %s11, 1
    %p75 = por %p73, %p74
    %p76 = scmp.ne.s32.totalorder %s68, %s71
    %p77 = scmp.eq.s32.totalorder %s11, 0
    %p78 = por %p76, %p77
    %p79 = scmp.ne.s32.totalorder %s68, %s71
    %p80 = scmp.eq.s32.totalorder %s16, 1
    %p81 = por %p79, %p80
    %p82 = scmp.ne.s32.totalorder %s71, %s72
    %p83 = scmp.eq.s32.totalorder %s16, 0
    %p84 = por %p82, %p83
    %p85 = scmp.ne.s32.totalorder %s71, %s72
    %p86 = scmp.eq.s32.totalorder %s17, 1
    %p87 = por %p85, %p86
    %p89 = scmp.ne.s32.totalorder %s72, %s88
    %p90 = scmp.eq.s32.totalorder %s17, 0
    %p91 = por %p89, %p90
    %s92 = ssub.s32 %s11, %s18
    %p93 = scmp.eq.s32.totalorder %s92, 0
    %s95 = sadd.s32 %s94, 1
    %s96 = scalar_select %p93, %s94, %s95
    %p99 = pneg %p93
    %p100 = scmp.eq.s32.totalorder %s11, 1
    %p101 = por %p99, %p100
    %p102 = scmp.ne.s32.totalorder %s94, %s97
    %p103 = scmp.eq.s32.totalorder %s11, 0
    %p104 = por %p102, %p103
    %p105 = scmp.ne.s32.totalorder %s94, %s97
    %p106 = scmp.eq.s32.totalorder %s16, 1
    %p107 = por %p105, %p106
    %p108 = scmp.ne.s32.totalorder %s97, %s98
    %p109 = scmp.eq.s32.totalorder %s16, 0
    %p110 = por %p108, %p109
    %p111 = scmp.ne.s32.totalorder %s97, %s98
    %p112 = scmp.eq.s32.totalorder %s17, 1
    %p113 = por %p111, %p112
    %p115 = scmp.ne.s32.totalorder %s98, %s114
    %p116 = scmp.eq.s32.totalorder %s17, 0
    %p117 = por %p115, %p116
    %s118 = ssub.s32 %s11, %s18
    %p119 = scmp.eq.s32.totalorder %s118, 0
    %s121 = sadd.s32 %s120, 1
    %s122 = scalar_select %p119, %s120, %s121
    %p125 = pneg %p119
    %p126 = scmp.eq.s32.totalorder %s11, 1
    %p127 = por %p125, %p126
    %p128 = scmp.ne.s32.totalorder %s120, %s123
    %p129 = scmp.eq.s32.totalorder %s11, 0
    %p130 = por %p128, %p129
    %p131 = scmp.ne.s32.totalorder %s120, %s123
    %p132 = scmp.eq.s32.totalorder %s16, 1
    %p133 = por %p131, %p132
    %p134 = scmp.ne.s32.totalorder %s123, %s124
    %p135 = scmp.eq.s32.totalorder %s16, 0
    %p136 = por %p134, %p135
    %p137 = scmp.ne.s32.totalorder %s123, %s124
    %p138 = scmp.eq.s32.totalorder %s17, 1
    %p139 = por %p137, %p138
    %p141 = scmp.ne.s32.totalorder %s124, %s140
    %p142 = scmp.eq.s32.totalorder %s17, 0
    %p143 = por %p141, %p142
    %p144 = scmp.le.s32.totalorder 1, %s11
    %p145 = scmp.lt.s32.totalorder %s11, 3
    %p146 = pnand %p144, %p145
    %p147 = pneg %p146
    // Predicated region
    $region9: #{layer2_for_hr_branch_forward.2} parent=5 // pred_check
      _
    $region10: #{layer2_for_hr_branch_forward.2} parent=5 // pred_check_branch
      %149 = sbr.rel (%p146) target = $region12
    $region11: #{layer2_for_hr_branch_forward.2} parent=5 // pred_region
      %s150 = ssub.s32 %s11, 1
      // Predicated region
      $region13: #{layer2_for_hr_branch_forward.2} parent=11 // pred_check
        %p151 = pneg %p58
      $region14: #{layer2_for_hr_branch_forward.2} parent=11 // pred_check_branch
        %153 = sbr.rel (%p151) target = $region16
      $region15: #{layer2_for_hr_branch_forward.2} parent=11 // pred_region
        _
      $region16: #{layer2_for_hr_branch_forward.2} parent=11 // pred_fallthru
        _
    $region12: #{layer2_for_hr_branch_forward.2} parent=5 // pred_fallthru
      _
    %p154 = scmp.lt.s32.totalorder %s11, 2
    // Predicated region
    $region17: #{layer2_for_hr_branch_forward.2} parent=5 // pred_check
      %p155 = pneg %p154
    $region18: #{layer2_for_hr_branch_forward.2} parent=5 // pred_check_branch
      %157 = sbr.rel (%p155) target = $region20
    $region19: #{layer2_for_hr_branch_forward.2} parent=5 // pred_region
      // Predicated region
      $region21: #{layer2_for_hr_branch_forward.2} parent=19 // pred_check
        %p158 = pneg %p31
      $region22: #{layer2_for_hr_branch_forward.2} parent=19 // pred_check_branch
        %160 = sbr.rel (%p158) target = $region24
      $region23: #{layer2_for_hr_branch_forward.2} parent=19 // pred_region
        %p161 = scmp.lt.s32.totalorder %s11, 1
        %s162 = scalar_select %p161, %s11, 1
        %s163 = smul.addr %s162, 32
        %s164 = smul.addr %s163, 4
        %s165 = scalar_lea.vmem %s0, %s164
      $region24: #{layer2_for_hr_branch_forward.2} parent=19 // pred_fallthru
        _
    $region20: #{layer2_for_hr_branch_forward.2} parent=5 // pred_fallthru
      _
    %p166 = scmp.le.s32.totalorder 1, %s11
    %p167 = scmp.lt.s32.totalorder %s11, 3
    %p168 = pnand %p166, %p167
    %p169 = pneg %p168
    // Predicated region
    $region25: #{layer2_for_hr_branch_forward.2} parent=5 // pred_check
      _
    $region26: #{layer2_for_hr_branch_forward.2} parent=5 // pred_check_branch
      %171 = sbr.rel (%p168) target = $region28
    $region27: #{layer2_for_hr_branch_forward.2} parent=5 // pred_region
      %s172 = ssub.s32 %s11, 1
      %p173 = scmp.lt.s32.totalorder %s16, 1
      %s174 = scalar_select %p173, %s16, 1
      %s175 = smul.addr %s174, 32
      %s176 = smul.addr %s175, 4
      %s177 = scalar_lea.vmem %s0, %s176
      %p178 = pneg %p37
      %p179 = pneg %p34
      %p180 = pneg %p58
      %p181 = pneg %p55
      %p182 = pneg %p84
      %p183 = pneg %p81
      %p184 = scmp.lt.s32.totalorder %s16, 1
      %s185 = scalar_select %p184, %s16, 1
      %s186 = smul.addr %s185, 2
      %s187 = smul.addr %s186, 8
      %s188 = scalar_lea.vmem %s2, %s187
      %p189 = pneg %p110
      %p190 = pneg %p107
      %p191 = scmp.lt.s32.totalorder %s16, 1
      %s192 = scalar_select %p191, %s16, 1
      %s193 = scalar_lea.vmem %s3, %s192
      %p194 = pneg %p136
      %p195 = pneg %p133
      %p196 = scmp.lt.s32.totalorder %s16, 1
      %s197 = scalar_select %p196, %s16, 1
      %s198 = scalar_lea.vmem %s4, %s197
      %p199 = scmp.lt.s32.totalorder %s16, 1
      %s200 = scalar_select %p199, %s16, 1
      %s201 = smul.addr %s200, 32
      %s202 = smul.addr %s201, 4
      %s203 = scalar_lea.vmem %s0, %s202
      %p204 = scmp.lt.s32.totalorder %s16, 1
      %s205 = scalar_select %p204, %s16, 1
      %s206 = smul.addr %s205, 2
      %s207 = smul.addr %s206, 8
      %s208 = scalar_lea.vmem %s2, %s207
      %p209 = scmp.lt.s32.totalorder %s16, 1
      %s210 = scalar_select %p209, %s16, 1
      %s211 = scalar_lea.vmem %s3, %s210
      %p212 = scmp.lt.s32.totalorder %s16, 1
      %s213 = scalar_select %p212, %s16, 1
      %s214 = scalar_lea.vmem %s4, %s213
      %vm216 = vcmask 27648
      %217 = vst.msk [vmem:[#allocation2] sm:$0xf] %vm216, 0
      %218 = vst.msk [vmem:[#allocation2 + $0x4] sm:$0xf] %vm216, 0
      %vm219 = vcmask 24576
      %220 = vst.msk [vmem:[#allocation2 + $0x8] sm:$0x1] %vm219, 0
      %221 = vst.msk [vmem:[#allocation2 + $0xc] sm:$0xf] %vm216, 0
      %222 = vst.msk [vmem:[#allocation2 + $0x10] sm:$0xf] %vm216, 0
      %223 = vst.msk [vmem:[#allocation2 + $0x14] sm:$0x1] %vm219, 0
      %224 = vst.msk [vmem:[#allocation2 + $0x18] sm:$0xf] %vm216, 0
      %225 = vst.msk [vmem:[#allocation2 + $0x1c] sm:$0xf] %vm216, 0
      %226 = vst.msk [vmem:[#allocation2 + $0x20] sm:$0x1] %vm219, 0
      %227 = vst.msk [vmem:[#allocation2 + $0x24] sm:$0xf] %vm216, 0
      %228 = vst.msk [vmem:[#allocation2 + $0x28] sm:$0xf] %vm216, 0
      %229 = vst.msk [vmem:[#allocation2 + $0x2c] sm:$0x1] %vm219, 0
      %230 = vst.msk [vmem:[#allocation2 + $0x30] sm:$0xf] %vm216, 0
      %231 = vst.msk [vmem:[#allocation2 + $0x34] sm:$0xf] %vm216, 0
      %232 = vst.msk [vmem:[#allocation2 + $0x38] sm:$0x1] %vm219, 0
      %233 = vst.msk [vmem:[#allocation2 + $0x3c] sm:$0xf] %vm216, 0
      %234 = vst.msk [vmem:[#allocation2 + $0x40] sm:$0xf] %vm216, 0
      %235 = vst.msk [vmem:[#allocation2 + $0x44] sm:$0x1] %vm219, 0
      %236 = vst.msk [vmem:[#allocation2 + $0x48] sm:$0xf] %vm216, 0
      %237 = vst.msk [vmem:[#allocation2 + $0x4c] sm:$0xf] %vm216, 0
      %238 = vst.msk [vmem:[#allocation2 + $0x50] sm:$0x1] %vm219, 0
      %239 = vst.msk [vmem:[#allocation2 + $0x54] sm:$0xf] %vm216, 0
      %240 = vst.msk [vmem:[#allocation2 + $0x58] sm:$0xf] %vm216, 0
      %241 = vst.msk [vmem:[#allocation2 + $0x5c] sm:$0x1] %vm219, 0
      %242 = vst.msk [vmem:[#allocation2 + $0x60] sm:$0xf] %vm216, 0
      %243 = vst.msk [vmem:[#allocation2 + $0x64] sm:$0xf] %vm216, 0
      %244 = vst.msk [vmem:[#allocation2 + $0x68] sm:$0x1] %vm219, 0
      %245 = vst.msk [vmem:[#allocation2 + $0x6c] sm:$0xf] %vm216, 0
      %246 = vst.msk [vmem:[#allocation2 + $0x70] sm:$0xf] %vm216, 0
      %247 = vst.msk [vmem:[#allocation2 + $0x74] sm:$0x1] %vm219, 0
      %248 = vst.msk [vmem:[#allocation2 + $0x78] sm:$0xf] %vm216, 0
      %249 = vst.msk [vmem:[#allocation2 + $0x7c] sm:$0xf] %vm216, 0
      %250 = vst.msk [vmem:[#allocation2 + $0x80] sm:$0x1] %vm219, 0
      %251 = vst.msk [vmem:[#allocation2 + $0x84] sm:$0xf] %vm216, 0
      %252 = vst.msk [vmem:[#allocation2 + $0x88] sm:$0xf] %vm216, 0
      %253 = vst.msk [vmem:[#allocation2 + $0x8c] sm:$0x1] %vm219, 0
      %254 = vst.msk [vmem:[#allocation2 + $0x90] sm:$0xf] %vm216, 0
      %255 = vst.msk [vmem:[#allocation2 + $0x94] sm:$0xf] %vm216, 0
      %256 = vst.msk [vmem:[#allocation2 + $0x98] sm:$0x1] %vm219, 0
      %257 = vst.msk [vmem:[#allocation2 + $0x9c] sm:$0xf] %vm216, 0
      %258 = vst.msk [vmem:[#allocation2 + $0xa0] sm:$0xf] %vm216, 0
      %259 = vst.msk [vmem:[#allocation2 + $0xa4] sm:$0x1] %vm219, 0
      %260 = vst.msk [vmem:[#allocation2 + $0xa8] sm:$0xf] %vm216, 0
      %261 = vst.msk [vmem:[#allocation2 + $0xac] sm:$0xf] %vm216, 0
      %262 = vst.msk [vmem:[#allocation2 + $0xb0] sm:$0x1] %vm219, 0
      %263 = vst.msk [vmem:[#allocation2 + $0xb4] sm:$0xf] %vm216, 0
      %264 = vst.msk [vmem:[#allocation2 + $0xb8] sm:$0xf] %vm216, 0
      %265 = vst.msk [vmem:[#allocation2 + $0xbc] sm:$0x1] %vm219, 0
      %266 = vst.msk [vmem:[#allocation2 + $0xc0] sm:$0xf] %vm216, 0
      %267 = vst.msk [vmem:[#allocation2 + $0xc4] sm:$0xf] %vm216, 0
      %268 = vst.msk [vmem:[#allocation2 + $0xc8] sm:$0x1] %vm219, 0
      %269 = vst.msk [vmem:[#allocation2 + $0xcc] sm:$0xf] %vm216, 0
      %270 = vst.msk [vmem:[#allocation2 + $0xd0] sm:$0xf] %vm216, 0
      %271 = vst.msk [vmem:[#allocation2 + $0xd4] sm:$0x1] %vm219, 0
      %v272 = vld [vmem:[%s203] sm:$0xf]
      %v273 = vld [vmem:[%s203 + $0x4] sm:$0xf]
      %v274 = vld [vmem:[%s203 + $0x8] sm:$0xf]
      %v275 = vld [vmem:[%s203 + $0xc] sm:$0xf]
      %v276 = vld [vmem:[%s203 + $0x10] sm:$0xf]
      %v277 = vld [vmem:[%s203 + $0x14] sm:$0xf]
      %v278 = vld [vmem:[%s203 + $0x18] sm:$0xf]
      %v279 = vld [vmem:[%s203 + $0x1c] sm:$0xf]
      %v280 = vld [vmem:[%s203 + $0x20] sm:$0xf]
      %v281 = vld [vmem:[%s203 + $0x24] sm:$0xf]
      %v282 = vld [vmem:[%s203 + $0x28] sm:$0xf]
      %v283 = vld [vmem:[%s203 + $0x2c] sm:$0xf]
      %v284 = vld [vmem:[%s203 + $0x30] sm:$0xf]
      %v285 = vld [vmem:[%s203 + $0x34] sm:$0xf]
      %v286 = vld [vmem:[%s203 + $0x38] sm:$0xf]
      %v287 = vld [vmem:[%s203 + $0x3c] sm:$0xf]
      %v288 = vld [vmem:[%s203 + $0x40] sm:$0xf]
      %v289 = vld [vmem:[%s203 + $0x44] sm:$0xf]
      %v290 = vld [vmem:[%s203 + $0x48] sm:$0xf]
      %v291 = vld [vmem:[%s203 + $0x4c] sm:$0xf]
      %v292 = vld [vmem:[%s203 + $0x50] sm:$0xf]
      %v293 = vld [vmem:[%s203 + $0x54] sm:$0xf]
      %v294 = vld [vmem:[%s203 + $0x58] sm:$0xf]
      %v295 = vld [vmem:[%s203 + $0x5c] sm:$0xf]
      %v296 = vld [vmem:[%s203 + $0x60] sm:$0xf]
      %v297 = vld [vmem:[%s203 + $0x64] sm:$0xf]
      %v298 = vld [vmem:[%s203 + $0x68] sm:$0xf]
      %v299 = vld [vmem:[%s203 + $0x6c] sm:$0xf]
      %v300 = vld [vmem:[%s203 + $0x70] sm:$0xf]
      %v301 = vld [vmem:[%s203 + $0x74] sm:$0xf]
      %v302 = vld [vmem:[%s203 + $0x78] sm:$0xf]
      %v303 = vld [vmem:[%s203 + $0x7c] sm:$0xf]
      %vm304 = vsmask.f32 256
      %vm305 = vsmask.f32 4368
      %vm306 = vmor %vm304, %vm305
      %v308 = vshrl.u32 %v272, 16
      %v310 = vrot.slane %v308, 7
      %v311 = vshll.u32 %v272, 16
      %v313 = vor.u32 %v310, %v311
      %v314 = vrot.slane %v310, 4
      %v316 = vshrl.u32 %v273, 16
      %v318 = vrot.slane %v316, 7
      %v319 = vshll.u32 %v273, 16
      %v321 = vor.u32 %v318, %v319
      %v322 = vsel %vm306, %v314, %v321
      %v323 = vrot.slane %v318, 4
      %v325 = vshrl.u32 %v274, 16
      %v327 = vrot.slane %v325, 7
      %v328 = vshll.u32 %v274, 16
      %v330 = vor.u32 %v327, %v328
      %v331 = vrot.slane %v327, 4
      %v333 = vshrl.u32 %v275, 16
      %v335 = vrot.slane %v333, 7
      %v336 = vshll.u32 %v275, 16
      %v338 = vor.u32 %v335, %v336
      %v339 = vsel %vm306, %v331, %v338
      %v340 = vrot.slane %v335, 4
      %v342 = vshrl.u32 %v276, 16
      %v344 = vrot.slane %v342, 7
      %v345 = vshll.u32 %v276, 16
      %v347 = vor.u32 %v344, %v345
      %v348 = vrot.slane %v344, 4
      %v350 = vshrl.u32 %v277, 16
      %v352 = vrot.slane %v350, 7
      %v353 = vshll.u32 %v277, 16
      %v355 = vor.u32 %v352, %v353
      %v356 = vsel %vm306, %v348, %v355
      %v357 = vrot.slane %v352, 4
      %v359 = vshrl.u32 %v278, 16
      %v361 = vrot.slane %v359, 7
      %v362 = vshll.u32 %v278, 16
      %v364 = vor.u32 %v361, %v362
      %v365 = vrot.slane %v361, 4
      %v367 = vshrl.u32 %v279, 16
      %v369 = vrot.slane %v367, 7
      %v370 = vshll.u32 %v279, 16
      %v372 = vor.u32 %v369, %v370
      %v373 = vsel %vm306, %v365, %v372
      %v374 = vrot.slane %v369, 4
      %v376 = vshrl.u32 %v280, 16
      %v378 = vrot.slane %v376, 7
      %v379 = vshll.u32 %v280, 16
      %v381 = vor.u32 %v378, %v379
      %v382 = vrot.slane %v378, 4
      %v384 = vshrl.u32 %v281, 16
      %v386 = vrot.slane %v384, 7
      %v387 = vshll.u32 %v281, 16
      %v389 = vor.u32 %v386, %v387
      %v390 = vsel %vm306, %v382, %v389
      %v391 = vrot.slane %v386, 4
      %v393 = vshrl.u32 %v282, 16
      %v395 = vrot.slane %v393, 7
      %v396 = vshll.u32 %v282, 16
      %v398 = vor.u32 %v395, %v396
      %v399 = vrot.slane %v395, 4
      %v401 = vshrl.u32 %v283, 16
      %v403 = vrot.slane %v401, 7
      %v404 = vshll.u32 %v283, 16
      %v406 = vor.u32 %v403, %v404
      %v407 = vsel %vm306, %v399, %v406
      %v408 = vrot.slane %v403, 4
      %v410 = vshrl.u32 %v284, 16
      %v412 = vrot.slane %v410, 7
      %v413 = vshll.u32 %v284, 16
      %v415 = vor.u32 %v412, %v413
      %v416 = vrot.slane %v412, 4
      %v418 = vshrl.u32 %v285, 16
      %v420 = vrot.slane %v418, 7
      %v421 = vshll.u32 %v285, 16
      %v423 = vor.u32 %v420, %v421
      %v424 = vsel %vm306, %v416, %v423
      %v425 = vrot.slane %v420, 4
      %v427 = vshrl.u32 %v286, 16
      %v429 = vrot.slane %v427, 7
      %v430 = vshll.u32 %v286, 16
      %v432 = vor.u32 %v429, %v430
      %v433 = vrot.slane %v429, 4
      %v435 = vshrl.u32 %v287, 16
      %v437 = vrot.slane %v435, 7
      %v438 = vshll.u32 %v287, 16
      %v440 = vor.u32 %v437, %v438
      %v441 = vsel %vm306, %v433, %v440
      %v442 = vrot.slane %v437, 4
      %v444 = vshrl.u32 %v288, 16
      %v446 = vrot.slane %v444, 7
      %v447 = vshll.u32 %v288, 16
      %v449 = vor.u32 %v446, %v447
      %v450 = vrot.slane %v446, 4
      %v452 = vshrl.u32 %v289, 16
      %v454 = vrot.slane %v452, 7
      %v455 = vshll.u32 %v289, 16
      %v457 = vor.u32 %v454, %v455
      %v458 = vsel %vm306, %v450, %v457
      %v459 = vrot.slane %v454, 4
      %v461 = vshrl.u32 %v290, 16
      %v463 = vrot.slane %v461, 7
      %v464 = vshll.u32 %v290, 16
      %v466 = vor.u32 %v463, %v464
      %v467 = vrot.slane %v463, 4
      %v469 = vshrl.u32 %v291, 16
      %v471 = vrot.slane %v469, 7
      %v472 = vshll.u32 %v291, 16
      %v474 = vor.u32 %v471, %v472
      %v475 = vsel %vm306, %v467, %v474
      %v476 = vrot.slane %v471, 4
      %v478 = vshrl.u32 %v292, 16
      %v480 = vrot.slane %v478, 7
      %v481 = vshll.u32 %v292, 16
      %v483 = vor.u32 %v480, %v481
      %v484 = vrot.slane %v480, 4
      %v486 = vshrl.u32 %v293, 16
      %v488 = vrot.slane %v486, 7
      %v489 = vshll.u32 %v293, 16
      %v491 = vor.u32 %v488, %v489
      %v492 = vsel %vm306, %v484, %v491
      %v493 = vrot.slane %v488, 4
      %v495 = vshrl.u32 %v294, 16
      %v497 = vrot.slane %v495, 7
      %v498 = vshll.u32 %v294, 16
      %v500 = vor.u32 %v497, %v498
      %v501 = vrot.slane %v497, 4
      %v503 = vshrl.u32 %v295, 16
      %v505 = vrot.slane %v503, 7
      %v506 = vshll.u32 %v295, 16
      %v508 = vor.u32 %v505, %v506
      %v509 = vsel %vm306, %v501, %v508
      %v510 = vrot.slane %v505, 4
      %v512 = vshrl.u32 %v296, 16
      %v514 = vrot.slane %v512, 7
      %v515 = vshll.u32 %v296, 16
      %v517 = vor.u32 %v514, %v515
      %v518 = vrot.slane %v514, 4
      %v520 = vshrl.u32 %v297, 16
      %v522 = vrot.slane %v520, 7
      %v523 = vshll.u32 %v297, 16
      %v525 = vor.u32 %v522, %v523
      %v526 = vsel %vm306, %v518, %v525
      %v527 = vrot.slane %v522, 4
      %v529 = vshrl.u32 %v298, 16
      %v531 = vrot.slane %v529, 7
      %v532 = vshll.u32 %v298, 16
      %v534 = vor.u32 %v531, %v532
      %v535 = vrot.slane %v531, 4
      %v537 = vshrl.u32 %v299, 16
      %v539 = vrot.slane %v537, 7
      %v540 = vshll.u32 %v299, 16
      %v542 = vor.u32 %v539, %v540
      %v543 = vsel %vm306, %v535, %v542
      %v544 = vrot.slane %v539, 4
      %v546 = vshrl.u32 %v300, 16
      %v548 = vrot.slane %v546, 7
      %v549 = vshll.u32 %v300, 16
      %v551 = vor.u32 %v548, %v549
      %v552 = vrot.slane %v548, 4
      %v554 = vshrl.u32 %v301, 16
      %v556 = vrot.slane %v554, 7
      %v557 = vshll.u32 %v301, 16
      %v559 = vor.u32 %v556, %v557
      %v560 = vsel %vm306, %v552, %v559
      %v561 = vrot.slane %v556, 4
      %v563 = vshrl.u32 %v302, 16
      %v565 = vrot.slane %v563, 7
      %v566 = vshll.u32 %v302, 16
      %v568 = vor.u32 %v565, %v566
      %v569 = vrot.slane %v565, 4
      %v571 = vshrl.u32 %v303, 16
      %v573 = vrot.slane %v571, 7
      %v574 = vshll.u32 %v303, 16
      %v576 = vor.u32 %v573, %v574
      %v577 = vsel %vm306, %v569, %v576
      %v578 = vrot.slane %v573, 4
      %s627 = scalar_lea.vmem [#allocation2], 12
      %vm628 = vcmask 27648
      %vm629 = vsmask.f32 7938
      %vm630 = vmand %vm628, %vm629
      %v631 = vld [vmem:[%s627] sm:$0xf]
      %v632 = vsel %vm630, %v313, %v631
      %633 = vst [vmem:[%s627] sm:$0xf] %v632
      %634 = vst.msk [vmem:[%s627 + $0x4] sm:$0xf] %vm216, %v322
      %vm635 = vcmask 24576
      %vm636 = vmand %vm635, %vm304
      %v637 = vld [vmem:[%s627 + $0x8] sm:$0x1]
      %v638 = vsel %vm636, %v323, %v637
      %639 = vst [vmem:[%s627 + $0x8] sm:$0x1] %v638
      %v640 = vld [vmem:[%s627 + $0xc] sm:$0xf]
      %v641 = vsel %vm630, %v330, %v640
      %642 = vst [vmem:[%s627 + $0xc] sm:$0xf] %v641
      %643 = vst.msk [vmem:[%s627 + $0x10] sm:$0xf] %vm216, %v339
      %v644 = vld [vmem:[%s627 + $0x14] sm:$0x1]
      %v645 = vsel %vm636, %v340, %v644
      %646 = vst [vmem:[%s627 + $0x14] sm:$0x1] %v645
      %v647 = vld [vmem:[%s627 + $0x18] sm:$0xf]
      %v648 = vsel %vm630, %v347, %v647
      %649 = vst [vmem:[%s627 + $0x18] sm:$0xf] %v648
      %650 = vst.msk [vmem:[%s627 + $0x1c] sm:$0xf] %vm216, %v356
      %v651 = vld [vmem:[%s627 + $0x20] sm:$0x1]
      %v652 = vsel %vm636, %v357, %v651
      %653 = vst [vmem:[%s627 + $0x20] sm:$0x1] %v652
      %v654 = vld [vmem:[%s627 + $0x24] sm:$0xf]
      %v655 = vsel %vm630, %v364, %v654
      %656 = vst [vmem:[%s627 + $0x24] sm:$0xf] %v655
      %657 = vst.msk [vmem:[%s627 + $0x28] sm:$0xf] %vm216, %v373
      %v658 = vld [vmem:[%s627 + $0x2c] sm:$0x1]
      %v659 = vsel %vm636, %v374, %v658
      %660 = vst [vmem:[%s627 + $0x2c] sm:$0x1] %v659
      %v661 = vld [vmem:[%s627 + $0x30] sm:$0xf]
      %v662 = vsel %vm630, %v381, %v661
      %663 = vst [vmem:[%s627 + $0x30] sm:$0xf] %v662
      %664 = vst.msk [vmem:[%s627 + $0x34] sm:$0xf] %vm216, %v390
      %v665 = vld [vmem:[%s627 + $0x38] sm:$0x1]
      %v666 = vsel %vm636, %v391, %v665
      %667 = vst [vmem:[%s627 + $0x38] sm:$0x1] %v666
      %v668 = vld [vmem:[%s627 + $0x3c] sm:$0xf]
      %v669 = vsel %vm630, %v398, %v668
      %670 = vst [vmem:[%s627 + $0x3c] sm:$0xf] %v669
      %671 = vst.msk [vmem:[%s627 + $0x40] sm:$0xf] %vm216, %v407
      %v672 = vld [vmem:[%s627 + $0x44] sm:$0x1]
      %v673 = vsel %vm636, %v408, %v672
      %674 = vst [vmem:[%s627 + $0x44] sm:$0x1] %v673
      %v675 = vld [vmem:[%s627 + $0x48] sm:$0xf]
      %v676 = vsel %vm630, %v415, %v675
      %677 = vst [vmem:[%s627 + $0x48] sm:$0xf] %v676
      %678 = vst.msk [vmem:[%s627 + $0x4c] sm:$0xf] %vm216, %v424
      %v679 = vld [vmem:[%s627 + $0x50] sm:$0x1]
      %v680 = vsel %vm636, %v425, %v679
      %681 = vst [vmem:[%s627 + $0x50] sm:$0x1] %v680
      %v682 = vld [vmem:[%s627 + $0x54] sm:$0xf]
      %v683 = vsel %vm630, %v432, %v682
      %684 = vst [vmem:[%s627 + $0x54] sm:$0xf] %v683
      %685 = vst.msk [vmem:[%s627 + $0x58] sm:$0xf] %vm216, %v441
      %v686 = vld [vmem:[%s627 + $0x5c] sm:$0x1]
      %v687 = vsel %vm636, %v442, %v686
      %688 = vst [vmem:[%s627 + $0x5c] sm:$0x1] %v687
      %v689 = vld [vmem:[%s627 + $0x60] sm:$0xf]
      %v690 = vsel %vm630, %v449, %v689
      %691 = vst [vmem:[%s627 + $0x60] sm:$0xf] %v690
      %692 = vst.msk [vmem:[%s627 + $0x64] sm:$0xf] %vm216, %v458
      %v693 = vld [vmem:[%s627 + $0x68] sm:$0x1]
      %v694 = vsel %vm636, %v459, %v693
      %695 = vst [vmem:[%s627 + $0x68] sm:$0x1] %v694
      %v696 = vld [vmem:[%s627 + $0x6c] sm:$0xf]
      %v697 = vsel %vm630, %v466, %v696
      %698 = vst [vmem:[%s627 + $0x6c] sm:$0xf] %v697
      %699 = vst.msk [vmem:[%s627 + $0x70] sm:$0xf] %vm216, %v475
      %v700 = vld [vmem:[%s627 + $0x74] sm:$0x1]
      %v701 = vsel %vm636, %v476, %v700
      %702 = vst [vmem:[%s627 + $0x74] sm:$0x1] %v701
      %v703 = vld [vmem:[%s627 + $0x78] sm:$0xf]
      %v704 = vsel %vm630, %v483, %v703
      %705 = vst [vmem:[%s627 + $0x78] sm:$0xf] %v704
      %706 = vst.msk [vmem:[%s627 + $0x7c] sm:$0xf] %vm216, %v492
      %v707 = vld [vmem:[%s627 + $0x80] sm:$0x1]
      %v708 = vsel %vm636, %v493, %v707
      %709 = vst [vmem:[%s627 + $0x80] sm:$0x1] %v708
      %v710 = vld [vmem:[%s627 + $0x84] sm:$0xf]
      %v711 = vsel %vm630, %v500, %v710
      %712 = vst [vmem:[%s627 + $0x84] sm:$0xf] %v711
      %713 = vst.msk [vmem:[%s627 + $0x88] sm:$0xf] %vm216, %v509
      %v714 = vld [vmem:[%s627 + $0x8c] sm:$0x1]
      %v715 = vsel %vm636, %v510, %v714
      %716 = vst [vmem:[%s627 + $0x8c] sm:$0x1] %v715
      %v717 = vld [vmem:[%s627 + $0x90] sm:$0xf]
      %v718 = vsel %vm630, %v517, %v717
      %719 = vst [vmem:[%s627 + $0x90] sm:$0xf] %v718
      %720 = vst.msk [vmem:[%s627 + $0x94] sm:$0xf] %vm216, %v526
      %v721 = vld [vmem:[%s627 + $0x98] sm:$0x1]
      %v722 = vsel %vm636, %v527, %v721
      %723 = vst [vmem:[%s627 + $0x98] sm:$0x1] %v722
      %v724 = vld [vmem:[%s627 + $0x9c] sm:$0xf]
      %v725 = vsel %vm630, %v534, %v724
      %726 = vst [vmem:[%s627 + $0x9c] sm:$0xf] %v725
      %727 = vst.msk [vmem:[%s627 + $0xa0] sm:$0xf] %vm216, %v543
      %v728 = vld [vmem:[%s627 + $0xa4] sm:$0x1]
      %v729 = vsel %vm636, %v544, %v728
      %730 = vst [vmem:[%s627 + $0xa4] sm:$0x1] %v729
      %v731 = vld [vmem:[%s627 + $0xa8] sm:$0xf]
      %v732 = vsel %vm630, %v551, %v731
      %733 = vst [vmem:[%s627 + $0xa8] sm:$0xf] %v732
      %734 = vst.msk [vmem:[%s627 + $0xac] sm:$0xf] %vm216, %v560
      %v735 = vld [vmem:[%s627 + $0xb0] sm:$0x1]
      %v736 = vsel %vm636, %v561, %v735
      %737 = vst [vmem:[%s627 + $0xb0] sm:$0x1] %v736
      %v738 = vld [vmem:[%s627 + $0xb4] sm:$0xf]
      %v739 = vsel %vm630, %v568, %v738
      %740 = vst [vmem:[%s627 + $0xb4] sm:$0xf] %v739
      %741 = vst.msk [vmem:[%s627 + $0xb8] sm:$0xf] %vm216, %v577
      %v742 = vld [vmem:[%s627 + $0xbc] sm:$0x1]
      %v743 = vsel %vm636, %v578, %v742
      %744 = vst [vmem:[%s627 + $0xbc] sm:$0x1] %v743
      %v745 = vld [vmem:[#allocation2] sm:$0xf]
      %v746 = vld [vmem:[#allocation2 + $0x4] sm:$0xf]
      %v747 = vld [vmem:[#allocation2 + $0x8] sm:$0x1]
      %v748 = vld [vmem:[#allocation2 + $0xc] sm:$0xf]
      %v749 = vld [vmem:[#allocation2 + $0x10] sm:$0xf]
      %v750 = vld [vmem:[#allocation2 + $0x14] sm:$0x1]
      %v751 = vld [vmem:[#allocation2 + $0x18] sm:$0xf]
      %v752 = vld [vmem:[#allocation2 + $0x1c] sm:$0xf]
      %v753 = vld [vmem:[#allocation2 + $0x20] sm:$0x1]
      %v754 = vld [vmem:[#allocation2 + $0x24] sm:$0xf]
      %v755 = vld [vmem:[#allocation2 + $0x28] sm:$0xf]
      %v756 = vld [vmem:[#allocation2 + $0x2c] sm:$0x1]
      %v757 = vld [vmem:[#allocation2 + $0x30] sm:$0xf]
      %v758 = vld [vmem:[#allocation2 + $0x34] sm:$0xf]
      %v759 = vld [vmem:[#allocation2 + $0x38] sm:$0x1]
      %v760 = vld [vmem:[#allocation2 + $0x3c] sm:$0xf]
      %v761 = vld [vmem:[#allocation2 + $0x40] sm:$0xf]
      %v762 = vld [vmem:[#allocation2 + $0x44] sm:$0x1]
      %v763 = vld [vmem:[#allocation2 + $0x48] sm:$0xf]
      %v764 = vld [vmem:[#allocation2 + $0x4c] sm:$0xf]
      %v765 = vld [vmem:[#allocation2 + $0x50] sm:$0x1]
      %v766 = vld [vmem:[#allocation2 + $0x54] sm:$0xf]
      %v767 = vld [vmem:[#allocation2 + $0x58] sm:$0xf]
      %v768 = vld [vmem:[#allocation2 + $0x5c] sm:$0x1]
      %v769 = vld [vmem:[#allocation2 + $0x60] sm:$0xf]
      %v770 = vld [vmem:[#allocation2 + $0x64] sm:$0xf]
      %v771 = vld [vmem:[#allocation2 + $0x68] sm:$0x1]
      %v772 = vld [vmem:[#allocation2 + $0x6c] sm:$0xf]
      %v773 = vld [vmem:[#allocation2 + $0x70] sm:$0xf]
      %v774 = vld [vmem:[#allocation2 + $0x74] sm:$0x1]
      %v775 = vld [vmem:[#allocation2 + $0x78] sm:$0xf]
      %v776 = vld [vmem:[#allocation2 + $0x7c] sm:$0xf]
      %v777 = vld [vmem:[#allocation2 + $0x80] sm:$0x1]
      %v778 = vld [vmem:[#allocation2 + $0x84] sm:$0xf]
      %v779 = vld [vmem:[#allocation2 + $0x88] sm:$0xf]
      %v780 = vld [vmem:[#allocation2 + $0x8c] sm:$0x1]
      %v781 = vld [vmem:[#allocation2 + $0x90] sm:$0xf]
      %v782 = vld [vmem:[#allocation2 + $0x94] sm:$0xf]
      %v783 = vld [vmem:[#allocation2 + $0x98] sm:$0x1]
      %v784 = vld [vmem:[#allocation2 + $0x9c] sm:$0xf]
      %v785 = vld [vmem:[#allocation2 + $0xa0] sm:$0xf]
      %v786 = vld [vmem:[#allocation2 + $0xa4] sm:$0x1]
      %v787 = vld [vmem:[#allocation2 + $0xa8] sm:$0xf]
      %v788 = vld [vmem:[#allocation2 + $0xac] sm:$0xf]
      %v789 = vld [vmem:[#allocation2 + $0xb0] sm:$0x1]
      %v790 = vld [vmem:[#allocation2 + $0xb4] sm:$0xf]
      %v791 = vld [vmem:[#allocation2 + $0xb8] sm:$0xf]
      %v792 = vld [vmem:[#allocation2 + $0xbc] sm:$0x1]
      %v793 = vld [vmem:[#allocation2 + $0xc0] sm:$0xf]
      %v794 = vld [vmem:[#allocation2 + $0xc4] sm:$0xf]
      %v795 = vld [vmem:[#allocation2 + $0xc8] sm:$0x1]
      %v796 = vld [vmem:[#allocation2 + $0xcc] sm:$0xf]
      %v797 = vld [vmem:[#allocation2 + $0xd0] sm:$0xf]
      %v798 = vld [vmem:[#allocation2 + $0xd4] sm:$0x1]
      %v831 = vunpack.c.l.b16 %v745
      %v832 = vunpack.c.l.b16 %v746
      %v833 = vunpack.c.l.b16 %v748
      %v834 = vunpack.c.l.b16 %v749
      %v835 = vunpack.c.l.b16 %v751
      %v836 = vunpack.c.l.b16 %v752
      %v837 = vunpack.c.l.b16 %v754
      %v838 = vunpack.c.l.b16 %v755
      %v839 = vunpack.c.l.b16 %v757
      %v840 = vunpack.c.l.b16 %v758
      %v841 = vunpack.c.l.b16 %v760
      %v842 = vunpack.c.l.b16 %v761
      %v843 = vunpack.c.l.b16 %v763
      %v844 = vunpack.c.l.b16 %v764
      %v845 = vunpack.c.l.b16 %v766
      %v846 = vunpack.c.l.b16 %v767
      %v847 = vunpack.c.l.b16 %v769
      %v848 = vunpack.c.l.b16 %v770
      %v849 = vunpack.c.l.b16 %v772
      %v850 = vunpack.c.l.b16 %v773
      %v851 = vunpack.c.l.b16 %v775
      %v852 = vunpack.c.l.b16 %v776
      %v853 = vunpack.c.l.b16 %v778
      %v854 = vunpack.c.l.b16 %v779
      %v855 = vunpack.c.l.b16 %v781
      %v856 = vunpack.c.l.b16 %v782
      %v857 = vunpack.c.l.b16 %v784
      %v858 = vunpack.c.l.b16 %v785
      %v859 = vunpack.c.l.b16 %v787
      %v860 = vunpack.c.l.b16 %v788
      %v861 = vunpack.c.l.b16 %v790
      %v862 = vunpack.c.l.b16 %v791
      %v863 = vpack.c.b16 %v832, %v831
      %v864 = vpack.c.b16 %v834, %v833
      %v865 = vpack.c.b16 %v836, %v835
      %v866 = vpack.c.b16 %v838, %v837
      %v867 = vpack.c.b16 %v840, %v839
      %v868 = vpack.c.b16 %v842, %v841
      %v869 = vpack.c.b16 %v844, %v843
      %v870 = vpack.c.b16 %v846, %v845
      %v871 = vpack.c.b16 %v848, %v847
      %v872 = vpack.c.b16 %v850, %v849
      %v873 = vpack.c.b16 %v852, %v851
      %v874 = vpack.c.b16 %v854, %v853
      %v875 = vpack.c.b16 %v856, %v855
      %v876 = vpack.c.b16 %v858, %v857
      %v877 = vpack.c.b16 %v860, %v859
      %v878 = vpack.c.b16 %v862, %v861
      %vm895 = vcmask 31744
      %896 = vst.msk [vmem:[#allocation3] sm:$0xff] %vm895, %v863
      %897 = vst.msk [vmem:[#allocation3 + $0x8] sm:$0xff] %vm895, %v864
      %898 = vst.msk [vmem:[#allocation3 + $0x10] sm:$0xff] %vm895, %v865
      %899 = vst.msk [vmem:[#allocation3 + $0x18] sm:$0xff] %vm895, %v866
      %900 = vst.msk [vmem:[#allocation3 + $0x20] sm:$0xff] %vm895, %v867
      %901 = vst.msk [vmem:[#allocation3 + $0x28] sm:$0xff] %vm895, %v868
      %902 = vst.msk [vmem:[#allocation3 + $0x30] sm:$0xff] %vm895, %v869
      %903 = vst.msk [vmem:[#allocation3 + $0x38] sm:$0xff] %vm895, %v870
      %904 = vst.msk [vmem:[#allocation3 + $0x40] sm:$0xff] %vm895, %v871
      %905 = vst.msk [vmem:[#allocation3 + $0x48] sm:$0xff] %vm895, %v872
      %906 = vst.msk [vmem:[#allocation3 + $0x50] sm:$0xff] %vm895, %v873
      %907 = vst.msk [vmem:[#allocation3 + $0x58] sm:$0xff] %vm895, %v874
      %908 = vst.msk [vmem:[#allocation3 + $0x60] sm:$0xff] %vm895, %v875
      %909 = vst.msk [vmem:[#allocation3 + $0x68] sm:$0xff] %vm895, %v876
      %910 = vst.msk [vmem:[#allocation3 + $0x70] sm:$0xff] %vm895, %v877
      %911 = vst.msk [vmem:[#allocation3 + $0x78] sm:$0xff] %vm895, %v878
      %vm912 = vsmask.f32 3328
      %vm913 = vsmask.f32 7440
      %vm914 = vmor %vm912, %vm913
      %v916 = vshrl.u32 %v745, 16
      %v918 = vrot.slane %v916, 4
      %v919 = vshll.u32 %v745, 16
      %v921 = vrot.slane %v919, 5
      %v922 = vor.u32 %v918, %v921
      %v923 = vrot.slane %v922, 4
      %v925 = vshll.u32 %v746, 16
      %v927 = vrot.slane %v925, 5
      %v928 = vsel %vm914, %v923, %v927
      %v929 = vshrl.u32 %v746, 16
      %v931 = vrot.slane %v929, 4
      %v932 = vor.u32 %v931, %v927
      %v933 = vrot.slane %v932, 4
      %v935 = vshll.u32 %v747, 16
      %v937 = vrot.slane %v935, 5
      %v938 = vsel %vm914, %v933, %v937
      %v940 = vshrl.u32 %v748, 16
      %v942 = vrot.slane %v940, 4
      %v943 = vshll.u32 %v748, 16
      %v945 = vrot.slane %v943, 5
      %v946 = vor.u32 %v942, %v945
      %v947 = vrot.slane %v946, 4
      %v949 = vshll.u32 %v749, 16
      %v951 = vrot.slane %v949, 5
      %v952 = vsel %vm914, %v947, %v951
      %v953 = vshrl.u32 %v749, 16
      %v955 = vrot.slane %v953, 4
      %v956 = vor.u32 %v955, %v951
      %v957 = vrot.slane %v956, 4
      %v959 = vshll.u32 %v750, 16
      %v961 = vrot.slane %v959, 5
      %v962 = vsel %vm914, %v957, %v961
      %v964 = vshrl.u32 %v751, 16
      %v966 = vrot.slane %v964, 4
      %v967 = vshll.u32 %v751, 16
      %v969 = vrot.slane %v967, 5
      %v970 = vor.u32 %v966, %v969
      %v971 = vrot.slane %v970, 4
      %v973 = vshll.u32 %v752, 16
      %v975 = vrot.slane %v973, 5
      %v976 = vsel %vm914, %v971, %v975
      %v977 = vshrl.u32 %v752, 16
      %v979 = vrot.slane %v977, 4
      %v980 = vor.u32 %v979, %v975
      %v981 = vrot.slane %v980, 4
      %v983 = vshll.u32 %v753, 16
      %v985 = vrot.slane %v983, 5
      %v986 = vsel %vm914, %v981, %v985
      %v988 = vshrl.u32 %v754, 16
      %v990 = vrot.slane %v988, 4
      %v991 = vshll.u32 %v754, 16
      %v993 = vrot.slane %v991, 5
      %v994 = vor.u32 %v990, %v993
      %v995 = vrot.slane %v994, 4
      %v997 = vshll.u32 %v755, 16
      %v999 = vrot.slane %v997, 5
      %v1000 = vsel %vm914, %v995, %v999
      %v1001 = vshrl.u32 %v755, 16
      %v1003 = vrot.slane %v1001, 4
      %v1004 = vor.u32 %v1003, %v999
      %v1005 = vrot.slane %v1004, 4
      %v1007 = vshll.u32 %v756, 16
      %v1009 = vrot.slane %v1007, 5
      %v1010 = vsel %vm914, %v1005, %v1009
      %v1012 = vshrl.u32 %v757, 16
      %v1014 = vrot.slane %v1012, 4
      %v1015 = vshll.u32 %v757, 16
      %v1017 = vrot.slane %v1015, 5
      %v1018 = vor.u32 %v1014, %v1017
      %v1019 = vrot.slane %v1018, 4
      %v1021 = vshll.u32 %v758, 16
      %v1023 = vrot.slane %v1021, 5
      %v1024 = vsel %vm914, %v1019, %v1023
      %v1025 = vshrl.u32 %v758, 16
      %v1027 = vrot.slane %v1025, 4
      %v1028 = vor.u32 %v1027, %v1023
      %v1029 = vrot.slane %v1028, 4
      %v1031 = vshll.u32 %v759, 16
      %v1033 = vrot.slane %v1031, 5
      %v1034 = vsel %vm914, %v1029, %v1033
      %v1036 = vshrl.u32 %v760, 16
      %v1038 = vrot.slane %v1036, 4
      %v1039 = vshll.u32 %v760, 16
      %v1041 = vrot.slane %v1039, 5
      %v1042 = vor.u32 %v1038, %v1041
      %v1043 = vrot.slane %v1042, 4
      %v1045 = vshll.u32 %v761, 16
      %v1047 = vrot.slane %v1045, 5
      %v1048 = vsel %vm914, %v1043, %v1047
      %v1049 = vshrl.u32 %v761, 16
      %v1051 = vrot.slane %v1049, 4
      %v1052 = vor.u32 %v1051, %v1047
      %v1053 = vrot.slane %v1052, 4
      %v1055 = vshll.u32 %v762, 16
      %v1057 = vrot.slane %v1055, 5
      %v1058 = vsel %vm914, %v1053, %v1057
      %v1060 = vshrl.u32 %v763, 16
      %v1062 = vrot.slane %v1060, 4
      %v1063 = vshll.u32 %v763, 16
      %v1065 = vrot.slane %v1063, 5
      %v1066 = vor.u32 %v1062, %v1065
      %v1067 = vrot.slane %v1066, 4
      %v1069 = vshll.u32 %v764, 16
      %v1071 = vrot.slane %v1069, 5
      %v1072 = vsel %vm914, %v1067, %v1071
      %v1073 = vshrl.u32 %v764, 16
      %v1075 = vrot.slane %v1073, 4
      %v1076 = vor.u32 %v1075, %v1071
      %v1077 = vrot.slane %v1076, 4
      %v1079 = vshll.u32 %v765, 16
      %v1081 = vrot.slane %v1079, 5
      %v1082 = vsel %vm914, %v1077, %v1081
      %v1084 = vshrl.u32 %v766, 16
      %v1086 = vrot.slane %v1084, 4
      %v1087 = vshll.u32 %v766, 16
      %v1089 = vrot.slane %v1087, 5
      %v1090 = vor.u32 %v1086, %v1089
      %v1091 = vrot.slane %v1090, 4
      %v1093 = vshll.u32 %v767, 16
      %v1095 = vrot.slane %v1093, 5
      %v1096 = vsel %vm914, %v1091, %v1095
      %v1097 = vshrl.u32 %v767, 16
      %v1099 = vrot.slane %v1097, 4
      %v1100 = vor.u32 %v1099, %v1095
      %v1101 = vrot.slane %v1100, 4
      %v1103 = vshll.u32 %v768, 16
      %v1105 = vrot.slane %v1103, 5
      %v1106 = vsel %vm914, %v1101, %v1105
      %v1108 = vshrl.u32 %v769, 16
      %v1110 = vrot.slane %v1108, 4
      %v1111 = vshll.u32 %v769, 16
      %v1113 = vrot.slane %v1111, 5
      %v1114 = vor.u32 %v1110, %v1113
      %v1115 = vrot.slane %v1114, 4
      %v1117 = vshll.u32 %v770, 16
      %v1119 = vrot.slane %v1117, 5
      %v1120 = vsel %vm914, %v1115, %v1119
      %v1121 = vshrl.u32 %v770, 16
      %v1123 = vrot.slane %v1121, 4
      %v1124 = vor.u32 %v1123, %v1119
      %v1125 = vrot.slane %v1124, 4
      %v1127 = vshll.u32 %v771, 16
      %v1129 = vrot.slane %v1127, 5
      %v1130 = vsel %vm914, %v1125, %v1129
      %v1132 = vshrl.u32 %v772, 16
      %v1134 = vrot.slane %v1132, 4
      %v1135 = vshll.u32 %v772, 16
      %v1137 = vrot.slane %v1135, 5
      %v1138 = vor.u32 %v1134, %v1137
      %v1139 = vrot.slane %v1138, 4
      %v1141 = vshll.u32 %v773, 16
      %v1143 = vrot.slane %v1141, 5
      %v1144 = vsel %vm914, %v1139, %v1143
      %v1145 = vshrl.u32 %v773, 16
      %v1147 = vrot.slane %v1145, 4
      %v1148 = vor.u32 %v1147, %v1143
      %v1149 = vrot.slane %v1148, 4
      %v1151 = vshll.u32 %v774, 16
      %v1153 = vrot.slane %v1151, 5
      %v1154 = vsel %vm914, %v1149, %v1153
      %v1156 = vshrl.u32 %v775, 16
      %v1158 = vrot.slane %v1156, 4
      %v1159 = vshll.u32 %v775, 16
      %v1161 = vrot.slane %v1159, 5
      %v1162 = vor.u32 %v1158, %v1161
      %v1163 = vrot.slane %v1162, 4
      %v1165 = vshll.u32 %v776, 16
      %v1167 = vrot.slane %v1165, 5
      %v1168 = vsel %vm914, %v1163, %v1167
      %v1169 = vshrl.u32 %v776, 16
      %v1171 = vrot.slane %v1169, 4
      %v1172 = vor.u32 %v1171, %v1167
      %v1173 = vrot.slane %v1172, 4
      %v1175 = vshll.u32 %v777, 16
      %v1177 = vrot.slane %v1175, 5
      %v1178 = vsel %vm914, %v1173, %v1177
      %v1180 = vshrl.u32 %v778, 16
      %v1182 = vrot.slane %v1180, 4
      %v1183 = vshll.u32 %v778, 16
      %v1185 = vrot.slane %v1183, 5
      %v1186 = vor.u32 %v1182, %v1185
      %v1187 = vrot.slane %v1186, 4
      %v1189 = vshll.u32 %v779, 16
      %v1191 = vrot.slane %v1189, 5
      %v1192 = vsel %vm914, %v1187, %v1191
      %v1193 = vshrl.u32 %v779, 16
      %v1195 = vrot.slane %v1193, 4
      %v1196 = vor.u32 %v1195, %v1191
      %v1197 = vrot.slane %v1196, 4
      %v1199 = vshll.u32 %v780, 16
      %v1201 = vrot.slane %v1199, 5
      %v1202 = vsel %vm914, %v1197, %v1201
      %v1204 = vshrl.u32 %v781, 16
      %v1206 = vrot.slane %v1204, 4
      %v1207 = vshll.u32 %v781, 16
      %v1209 = vrot.slane %v1207, 5
      %v1210 = vor.u32 %v1206, %v1209
      %v1211 = vrot.slane %v1210, 4
      %v1213 = vshll.u32 %v782, 16
      %v1215 = vrot.slane %v1213, 5
      %v1216 = vsel %vm914, %v1211, %v1215
      %v1217 = vshrl.u32 %v782, 16
      %v1219 = vrot.slane %v1217, 4
      %v1220 = vor.u32 %v1219, %v1215
      %v1221 = vrot.slane %v1220, 4
      %v1223 = vshll.u32 %v783, 16
      %v1225 = vrot.slane %v1223, 5
      %v1226 = vsel %vm914, %v1221, %v1225
      %v1228 = vshrl.u32 %v784, 16
      %v1230 = vrot.slane %v1228, 4
      %v1231 = vshll.u32 %v784, 16
      %v1233 = vrot.slane %v1231, 5
      %v1234 = vor.u32 %v1230, %v1233
      %v1235 = vrot.slane %v1234, 4
      %v1237 = vshll.u32 %v785, 16
      %v1239 = vrot.slane %v1237, 5
      %v1240 = vsel %vm914, %v1235, %v1239
      %v1241 = vshrl.u32 %v785, 16
      %v1243 = vrot.slane %v1241, 4
      %v1244 = vor.u32 %v1243, %v1239
      %v1245 = vrot.slane %v1244, 4
      %v1247 = vshll.u32 %v786, 16
      %v1249 = vrot.slane %v1247, 5
      %v1250 = vsel %vm914, %v1245, %v1249
      %v1252 = vshrl.u32 %v787, 16
      %v1254 = vrot.slane %v1252, 4
      %v1255 = vshll.u32 %v787, 16
      %v1257 = vrot.slane %v1255, 5
      %v1258 = vor.u32 %v1254, %v1257
      %v1259 = vrot.slane %v1258, 4
      %v1261 = vshll.u32 %v788, 16
      %v1263 = vrot.slane %v1261, 5
      %v1264 = vsel %vm914, %v1259, %v1263
      %v1265 = vshrl.u32 %v788, 16
      %v1267 = vrot.slane %v1265, 4
      %v1268 = vor.u32 %v1267, %v1263
      %v1269 = vrot.slane %v1268, 4
      %v1271 = vshll.u32 %v789, 16
      %v1273 = vrot.slane %v1271, 5
      %v1274 = vsel %vm914, %v1269, %v1273
      %v1276 = vshrl.u32 %v790, 16
      %v1278 = vrot.slane %v1276, 4
      %v1279 = vshll.u32 %v790, 16
      %v1281 = vrot.slane %v1279, 5
      %v1282 = vor.u32 %v1278, %v1281
      %v1283 = vrot.slane %v1282, 4
      %v1285 = vshll.u32 %v791, 16
      %v1287 = vrot.slane %v1285, 5
      %v1288 = vsel %vm914, %v1283, %v1287
      %v1289 = vshrl.u32 %v791, 16
      %v1291 = vrot.slane %v1289, 4
      %v1292 = vor.u32 %v1291, %v1287
      %v1293 = vrot.slane %v1292, 4
      %v1295 = vshll.u32 %v792, 16
      %v1297 = vrot.slane %v1295, 5
      %v1298 = vsel %vm914, %v1293, %v1297
      %v1299 = vunpack.c.l.b16 %v928
      %v1300 = vunpack.c.l.b16 %v938
      %v1301 = vunpack.c.l.b16 %v952
      %v1302 = vunpack.c.l.b16 %v962
      %v1303 = vunpack.c.l.b16 %v976
      %v1304 = vunpack.c.l.b16 %v986
      %v1305 = vunpack.c.l.b16 %v1000
      %v1306 = vunpack.c.l.b16 %v1010
      %v1307 = vunpack.c.l.b16 %v1024
      %v1308 = vunpack.c.l.b16 %v1034
      %v1309 = vunpack.c.l.b16 %v1048
      %v1310 = vunpack.c.l.b16 %v1058
      %v1311 = vunpack.c.l.b16 %v1072
      %v1312 = vunpack.c.l.b16 %v1082
      %v1313 = vunpack.c.l.b16 %v1096
      %v1314 = vunpack.c.l.b16 %v1106
      %v1315 = vunpack.c.l.b16 %v1120
      %v1316 = vunpack.c.l.b16 %v1130
      %v1317 = vunpack.c.l.b16 %v1144
      %v1318 = vunpack.c.l.b16 %v1154
      %v1319 = vunpack.c.l.b16 %v1168
      %v1320 = vunpack.c.l.b16 %v1178
      %v1321 = vunpack.c.l.b16 %v1192
      %v1322 = vunpack.c.l.b16 %v1202
      %v1323 = vunpack.c.l.b16 %v1216
      %v1324 = vunpack.c.l.b16 %v1226
      %v1325 = vunpack.c.l.b16 %v1240
      %v1326 = vunpack.c.l.b16 %v1250
      %v1327 = vunpack.c.l.b16 %v1264
      %v1328 = vunpack.c.l.b16 %v1274
      %v1329 = vunpack.c.l.b16 %v1288
      %v1330 = vunpack.c.l.b16 %v1298
      %v1331 = vpack.c.b16 %v1300, %v1299
      %v1332 = vpack.c.b16 %v1302, %v1301
      %v1333 = vpack.c.b16 %v1304, %v1303
      %v1334 = vpack.c.b16 %v1306, %v1305
      %v1335 = vpack.c.b16 %v1308, %v1307
      %v1336 = vpack.c.b16 %v1310, %v1309
      %v1337 = vpack.c.b16 %v1312, %v1311
      %v1338 = vpack.c.b16 %v1314, %v1313
      %v1339 = vpack.c.b16 %v1316, %v1315
      %v1340 = vpack.c.b16 %v1318, %v1317
      %v1341 = vpack.c.b16 %v1320, %v1319
      %v1342 = vpack.c.b16 %v1322, %v1321
      %v1343 = vpack.c.b16 %v1324, %v1323
      %v1344 = vpack.c.b16 %v1326, %v1325
      %v1345 = vpack.c.b16 %v1328, %v1327
      %v1346 = vpack.c.b16 %v1330, %v1329
      %1347 = vrot.lane.b32.xlu0 %v1331, 4
      %v1348 = vpop.permute.xlu0 %1347
      %1349 = vrot.lane.b32.xlu0 %v1332, 4
      %v1350 = vpop.permute.xlu0 %1349
      %1351 = vrot.lane.b32.xlu0 %v1333, 4
      %v1352 = vpop.permute.xlu0 %1351
      %1353 = vrot.lane.b32.xlu0 %v1334, 4
      %v1354 = vpop.permute.xlu0 %1353
      %1355 = vrot.lane.b32.xlu0 %v1335, 4
      %v1356 = vpop.permute.xlu0 %1355
      %1357 = vrot.lane.b32.xlu0 %v1336, 4
      %v1358 = vpop.permute.xlu0 %1357
      %1359 = vrot.lane.b32.xlu0 %v1337, 4
      %v1360 = vpop.permute.xlu0 %1359
      %1361 = vrot.lane.b32.xlu0 %v1338, 4
      %v1362 = vpop.permute.xlu0 %1361
      %1363 = vrot.lane.b32.xlu0 %v1339, 4
      %v1364 = vpop.permute.xlu0 %1363
      %1365 = vrot.lane.b32.xlu0 %v1340, 4
      %v1366 = vpop.permute.xlu0 %1365
      %1367 = vrot.lane.b32.xlu0 %v1341, 4
      %v1368 = vpop.permute.xlu0 %1367
      %1369 = vrot.lane.b32.xlu0 %v1342, 4
      %v1370 = vpop.permute.xlu0 %1369
      %1371 = vrot.lane.b32.xlu0 %v1343, 4
      %v1372 = vpop.permute.xlu0 %1371
      %1373 = vrot.lane.b32.xlu0 %v1344, 4
      %v1374 = vpop.permute.xlu0 %1373
      %1375 = vrot.lane.b32.xlu0 %v1345, 4
      %v1376 = vpop.permute.xlu0 %1375
      %1377 = vrot.lane.b32.xlu0 %v1346, 4
      %v1378 = vpop.permute.xlu0 %1377
      %vm1395 = vcmask 64544
      %1396 = vst.msk [vmem:[#allocation3] sm:$0xff] %vm1395, %v1348
      %1397 = vst.msk [vmem:[#allocation3 + $0x8] sm:$0xff] %vm1395, %v1350
      %1398 = vst.msk [vmem:[#allocation3 + $0x10] sm:$0xff] %vm1395, %v1352
      %1399 = vst.msk [vmem:[#allocation3 + $0x18] sm:$0xff] %vm1395, %v1354
      %1400 = vst.msk [vmem:[#allocation3 + $0x20] sm:$0xff] %vm1395, %v1356
      %1401 = vst.msk [vmem:[#allocation3 + $0x28] sm:$0xff] %vm1395, %v1358
      %1402 = vst.msk [vmem:[#allocation3 + $0x30] sm:$0xff] %vm1395, %v1360
      %1403 = vst.msk [vmem:[#allocation3 + $0x38] sm:$0xff] %vm1395, %v1362
      %1404 = vst.msk [vmem:[#allocation3 + $0x40] sm:$0xff] %vm1395, %v1364
      %1405 = vst.msk [vmem:[#allocation3 + $0x48] sm:$0xff] %vm1395, %v1366
      %1406 = vst.msk [vmem:[#allocation3 + $0x50] sm:$0xff] %vm1395, %v1368
      %1407 = vst.msk [vmem:[#allocation3 + $0x58] sm:$0xff] %vm1395, %v1370
      %1408 = vst.msk [vmem:[#allocation3 + $0x60] sm:$0xff] %vm1395, %v1372
      %1409 = vst.msk [vmem:[#allocation3 + $0x68] sm:$0xff] %vm1395, %v1374
      %1410 = vst.msk [vmem:[#allocation3 + $0x70] sm:$0xff] %vm1395, %v1376
      %1411 = vst.msk [vmem:[#allocation3 + $0x78] sm:$0xff] %vm1395, %v1378
      %vm1428 = vcmask 1042432
      %vm1429 = vcmask 1046532
      %vm1430 = vmor %vm1428, %vm1429
      %v1431 = vrot.slane %v745, 5
      %v1432 = vrot.slane %v1431, 4
      %v1433 = vrot.slane %v746, 5
      %v1434 = vsel %vm1430, %v1432, %v1433
      %v1435 = vrot.slane %v1433, 4
      %v1436 = vrot.slane %v747, 5
      %v1437 = vsel %vm1430, %v1435, %v1436
      %v1438 = vrot.slane %v748, 5
      %v1439 = vrot.slane %v1438, 4
      %v1440 = vrot.slane %v749, 5
      %v1441 = vsel %vm1430, %v1439, %v1440
      %v1442 = vrot.slane %v1440, 4
      %v1443 = vrot.slane %v750, 5
      %v1444 = vsel %vm1430, %v1442, %v1443
      %v1445 = vrot.slane %v751, 5
      %v1446 = vrot.slane %v1445, 4
      %v1447 = vrot.slane %v752, 5
      %v1448 = vsel %vm1430, %v1446, %v1447
      %v1449 = vrot.slane %v1447, 4
      %v1450 = vrot.slane %v753, 5
      %v1451 = vsel %vm1430, %v1449, %v1450
      %v1452 = vrot.slane %v754, 5
      %v1453 = vrot.slane %v1452, 4
      %v1454 = vrot.slane %v755, 5
      %v1455 = vsel %vm1430, %v1453, %v1454
      %v1456 = vrot.slane %v1454, 4
      %v1457 = vrot.slane %v756, 5
      %v1458 = vsel %vm1430, %v1456, %v1457
      %v1459 = vrot.slane %v757, 5
      %v1460 = vrot.slane %v1459, 4
      %v1461 = vrot.slane %v758, 5
      %v1462 = vsel %vm1430, %v1460, %v1461
      %v1463 = vrot.slane %v1461, 4
      %v1464 = vrot.slane %v759, 5
      %v1465 = vsel %vm1430, %v1463, %v1464
      %v1466 = vrot.slane %v760, 5
      %v1467 = vrot.slane %v1466, 4
      %v1468 = vrot.slane %v761, 5
      %v1469 = vsel %vm1430, %v1467, %v1468
      %v1470 = vrot.slane %v1468, 4
      %v1471 = vrot.slane %v762, 5
      %v1472 = vsel %vm1430, %v1470, %v1471
      %v1473 = vrot.slane %v763, 5
      %v1474 = vrot.slane %v1473, 4
      %v1475 = vrot.slane %v764, 5
      %v1476 = vsel %vm1430, %v1474, %v1475
      %v1477 = vrot.slane %v1475, 4
      %v1478 = vrot.slane %v765, 5
      %v1479 = vsel %vm1430, %v1477, %v1478
      %v1480 = vrot.slane %v766, 5
      %v1481 = vrot.slane %v1480, 4
      %v1482 = vrot.slane %v767, 5
      %v1483 = vsel %vm1430, %v1481, %v1482
      %v1484 = vrot.slane %v1482, 4
      %v1485 = vrot.slane %v768, 5
      %v1486 = vsel %vm1430, %v1484, %v1485
      %v1487 = vrot.slane %v769, 5
      %v1488 = vrot.slane %v1487, 4
      %v1489 = vrot.slane %v770, 5
      %v1490 = vsel %vm1430, %v1488, %v1489
      %v1491 = vrot.slane %v1489, 4
      %v1492 = vrot.slane %v771, 5
      %v1493 = vsel %vm1430, %v1491, %v1492
      %v1494 = vrot.slane %v772, 5
      %v1495 = vrot.slane %v1494, 4
      %v1496 = vrot.slane %v773, 5
      %v1497 = vsel %vm1430, %v1495, %v1496
      %v1498 = vrot.slane %v1496, 4
      %v1499 = vrot.slane %v774, 5
      %v1500 = vsel %vm1430, %v1498, %v1499
      %v1501 = vrot.slane %v775, 5
      %v1502 = vrot.slane %v1501, 4
      %v1503 = vrot.slane %v776, 5
      %v1504 = vsel %vm1430, %v1502, %v1503
      %v1505 = vrot.slane %v1503, 4
      %v1506 = vrot.slane %v777, 5
      %v1507 = vsel %vm1430, %v1505, %v1506
      %v1508 = vrot.slane %v778, 5
      %v1509 = vrot.slane %v1508, 4
      %v1510 = vrot.slane %v779, 5
      %v1511 = vsel %vm1430, %v1509, %v1510
      %v1512 = vrot.slane %v1510, 4
      %v1513 = vrot.slane %v780, 5
      %v1514 = vsel %vm1430, %v1512, %v1513
      %v1515 = vrot.slane %v781, 5
      %v1516 = vrot.slane %v1515, 4
      %v1517 = vrot.slane %v782, 5
      %v1518 = vsel %vm1430, %v1516, %v1517
      %v1519 = vrot.slane %v1517, 4
      %v1520 = vrot.slane %v783, 5
      %v1521 = vsel %vm1430, %v1519, %v1520
      %v1522 = vrot.slane %v784, 5
      %v1523 = vrot.slane %v1522, 4
      %v1524 = vrot.slane %v785, 5
      %v1525 = vsel %vm1430, %v1523, %v1524
      %v1526 = vrot.slane %v1524, 4
      %v1527 = vrot.slane %v786, 5
      %v1528 = vsel %vm1430, %v1526, %v1527
      %v1529 = vrot.slane %v787, 5
      %v1530 = vrot.slane %v1529, 4
      %v1531 = vrot.slane %v788, 5
      %v1532 = vsel %vm1430, %v1530, %v1531
      %v1533 = vrot.slane %v1531, 4
      %v1534 = vrot.slane %v789, 5
      %v1535 = vsel %vm1430, %v1533, %v1534
      %v1536 = vrot.slane %v790, 5
      %v1537 = vrot.slane %v1536, 4
      %v1538 = vrot.slane %v791, 5
      %v1539 = vsel %vm1430, %v1537, %v1538
      %v1540 = vrot.slane %v1538, 4
      %v1541 = vrot.slane %v792, 5
      %v1542 = vsel %vm1430, %v1540, %v1541
      %v1543 = vunpack.c.l.b16 %v1434
      %v1544 = vunpack.c.l.b16 %v1437
      %v1545 = vunpack.c.l.b16 %v1441
      %v1546 = vunpack.c.l.b16 %v1444
      %v1547 = vunpack.c.l.b16 %v1448
      %v1548 = vunpack.c.l.b16 %v1451
      %v1549 = vunpack.c.l.b16 %v1455
      %v1550 = vunpack.c.l.b16 %v1458
      %v1551 = vunpack.c.l.b16 %v1462
      %v1552 = vunpack.c.l.b16 %v1465
      %v1553 = vunpack.c.l.b16 %v1469
      %v1554 = vunpack.c.l.b16 %v1472
      %v1555 = vunpack.c.l.b16 %v1476
      %v1556 = vunpack.c.l.b16 %v1479
      %v1557 = vunpack.c.l.b16 %v1483
      %v1558 = vunpack.c.l.b16 %v1486
      %v1559 = vunpack.c.l.b16 %v1490
      %v1560 = vunpack.c.l.b16 %v1493
      %v1561 = vunpack.c.l.b16 %v1497
      %v1562 = vunpack.c.l.b16 %v1500
      %v1563 = vunpack.c.l.b16 %v1504
      %v1564 = vunpack.c.l.b16 %v1507
      %v1565 = vunpack.c.l.b16 %v1511
      %v1566 = vunpack.c.l.b16 %v1514
      %v1567 = vunpack.c.l.b16 %v1518
      %v1568 = vunpack.c.l.b16 %v1521
      %v1569 = vunpack.c.l.b16 %v1525
      %v1570 = vunpack.c.l.b16 %v1528
      %v1571 = vunpack.c.l.b16 %v1532
      %v1572 = vunpack.c.l.b16 %v1535
      %v1573 = vunpack.c.l.b16 %v1539
      %v1574 = vunpack.c.l.b16 %v1542
      %v1575 = vpack.c.b16 %v1544, %v1543
      %v1576 = vpack.c.b16 %v1546, %v1545
      %v1577 = vpack.c.b16 %v1548, %v1547
      %v1578 = vpack.c.b16 %v1550, %v1549
      %v1579 = vpack.c.b16 %v1552, %v1551
      %v1580 = vpack.c.b16 %v1554, %v1553
      %v1581 = vpack.c.b16 %v1556, %v1555
      %v1582 = vpack.c.b16 %v1558, %v1557
      %v1583 = vpack.c.b16 %v1560, %v1559
      %v1584 = vpack.c.b16 %v1562, %v1561
      %v1585 = vpack.c.b16 %v1564, %v1563
      %v1586 = vpack.c.b16 %v1566, %v1565
      %v1587 = vpack.c.b16 %v1568, %v1567
      %v1588 = vpack.c.b16 %v1570, %v1569
      %v1589 = vpack.c.b16 %v1572, %v1571
      %v1590 = vpack.c.b16 %v1574, %v1573
      %1591 = vrot.lane.b32.xlu0 %v1575, 8
      %v1592 = vpop.permute.xlu0 %1591
      %1593 = vrot.lane.b32.xlu0 %v1576, 8
      %v1594 = vpop.permute.xlu0 %1593
      %1595 = vrot.lane.b32.xlu0 %v1577, 8
      %v1596 = vpop.permute.xlu0 %1595
      %1597 = vrot.lane.b32.xlu0 %v1578, 8
      %v1598 = vpop.permute.xlu0 %1597
      %1599 = vrot.lane.b32.xlu0 %v1579, 8
      %v1600 = vpop.permute.xlu0 %1599
      %1601 = vrot.lane.b32.xlu0 %v1580, 8
      %v1602 = vpop.permute.xlu0 %1601
      %1603 = vrot.lane.b32.xlu0 %v1581, 8
      %v1604 = vpop.permute.xlu0 %1603
      %1605 = vrot.lane.b32.xlu0 %v1582, 8
      %v1606 = vpop.permute.xlu0 %1605
      %1607 = vrot.lane.b32.xlu0 %v1583, 8
      %v1608 = vpop.permute.xlu0 %1607
      %1609 = vrot.lane.b32.xlu0 %v1584, 8
      %v1610 = vpop.permute.xlu0 %1609
      %1611 = vrot.lane.b32.xlu0 %v1585, 8
      %v1612 = vpop.permute.xlu0 %1611
      %1613 = vrot.lane.b32.xlu0 %v1586, 8
      %v1614 = vpop.permute.xlu0 %1613
      %1615 = vrot.lane.b32.xlu0 %v1587, 8
      %v1616 = vpop.permute.xlu0 %1615
      %1617 = vrot.lane.b32.xlu0 %v1588, 8
      %v1618 = vpop.permute.xlu0 %1617
      %1619 = vrot.lane.b32.xlu0 %v1589, 8
      %v1620 = vpop.permute.xlu0 %1619
      %1621 = vrot.lane.b32.xlu0 %v1590, 8
      %v1622 = vpop.permute.xlu0 %1621
      %vm1639 = vcmask 97344
      %1640 = vst.msk [vmem:[#allocation3] sm:$0xff] %vm1639, %v1592
      %1641 = vst.msk [vmem:[#allocation3 + $0x8] sm:$0xff] %vm1639, %v1594
      %1642 = vst.msk [vmem:[#allocation3 + $0x10] sm:$0xff] %vm1639, %v1596
      %1643 = vst.msk [vmem:[#allocation3 + $0x18] sm:$0xff] %vm1639, %v1598
      %1644 = vst.msk [vmem:[#allocation3 + $0x20] sm:$0xff] %vm1639, %v1600
      %1645 = vst.msk [vmem:[#allocation3 + $0x28] sm:$0xff] %vm1639, %v1602
      %1646 = vst.msk [vmem:[#allocation3 + $0x30] sm:$0xff] %vm1639, %v1604
      %1647 = vst.msk [vmem:[#allocation3 + $0x38] sm:$0xff] %vm1639, %v1606
      %1648 = vst.msk [vmem:[#allocation3 + $0x40] sm:$0xff] %vm1639, %v1608
      %1649 = vst.msk [vmem:[#allocation3 + $0x48] sm:$0xff] %vm1639, %v1610
      %1650 = vst.msk [vmem:[#allocation3 + $0x50] sm:$0xff] %vm1639, %v1612
      %1651 = vst.msk [vmem:[#allocation3 + $0x58] sm:$0xff] %vm1639, %v1614
      %1652 = vst.msk [vmem:[#allocation3 + $0x60] sm:$0xff] %vm1639, %v1616
      %1653 = vst.msk [vmem:[#allocation3 + $0x68] sm:$0xff] %vm1639, %v1618
      %1654 = vst.msk [vmem:[#allocation3 + $0x70] sm:$0xff] %vm1639, %v1620
      %1655 = vst.msk [vmem:[#allocation3 + $0x78] sm:$0xff] %vm1639, %v1622
      %v1658 = vunpack.c.l.b16 %v793
      %v1659 = vunpack.c.l.b16 %v794
      %v1660 = vpack.c.b16 %v1659, %v1658
      %1661 = vrot.lane.b32.xlu0 %v864, 12
      %v1662 = vpop.permute.xlu0 %1661
      %1663 = vrot.lane.b32.xlu0 %v865, 12
      %v1664 = vpop.permute.xlu0 %1663
      %1665 = vrot.lane.b32.xlu0 %v866, 12
      %v1666 = vpop.permute.xlu0 %1665
      %1667 = vrot.lane.b32.xlu0 %v867, 12
      %v1668 = vpop.permute.xlu0 %1667
      %1669 = vrot.lane.b32.xlu0 %v868, 12
      %v1670 = vpop.permute.xlu0 %1669
      %1671 = vrot.lane.b32.xlu0 %v869, 12
      %v1672 = vpop.permute.xlu0 %1671
      %1673 = vrot.lane.b32.xlu0 %v870, 12
      %v1674 = vpop.permute.xlu0 %1673
      %1675 = vrot.lane.b32.xlu0 %v871, 12
      %v1676 = vpop.permute.xlu0 %1675
      %1677 = vrot.lane.b32.xlu0 %v872, 12
      %v1678 = vpop.permute.xlu0 %1677
      %1679 = vrot.lane.b32.xlu0 %v873, 12
      %v1680 = vpop.permute.xlu0 %1679
      %1681 = vrot.lane.b32.xlu0 %v874, 12
      %v1682 = vpop.permute.xlu0 %1681
      %1683 = vrot.lane.b32.xlu0 %v875, 12
      %v1684 = vpop.permute.xlu0 %1683
      %1685 = vrot.lane.b32.xlu0 %v876, 12
      %v1686 = vpop.permute.xlu0 %1685
      %1687 = vrot.lane.b32.xlu0 %v877, 12
      %v1688 = vpop.permute.xlu0 %1687
      %1689 = vrot.lane.b32.xlu0 %v878, 12
      %v1690 = vpop.permute.xlu0 %1689
      %1691 = vrot.lane.b32.xlu0 %v1660, 12
      %v1692 = vpop.permute.xlu0 %1691
      %vm1709 = vcmask 130144
      %1710 = vst.msk [vmem:[#allocation3] sm:$0xff] %vm1709, %v1662
      %1711 = vst.msk [vmem:[#allocation3 + $0x8] sm:$0xff] %vm1709, %v1664
      %1712 = vst.msk [vmem:[#allocation3 + $0x10] sm:$0xff] %vm1709, %v1666
      %1713 = vst.msk [vmem:[#allocation3 + $0x18] sm:$0xff] %vm1709, %v1668
      %1714 = vst.msk [vmem:[#allocation3 + $0x20] sm:$0xff] %vm1709, %v1670
      %1715 = vst.msk [vmem:[#allocation3 + $0x28] sm:$0xff] %vm1709, %v1672
      %1716 = vst.msk [vmem:[#allocation3 + $0x30] sm:$0xff] %vm1709, %v1674
      %1717 = vst.msk [vmem:[#allocation3 + $0x38] sm:$0xff] %vm1709, %v1676
      %1718 = vst.msk [vmem:[#allocation3 + $0x40] sm:$0xff] %vm1709, %v1678
      %1719 = vst.msk [vmem:[#allocation3 + $0x48] sm:$0xff] %vm1709, %v1680
      %1720 = vst.msk [vmem:[#allocation3 + $0x50] sm:$0xff] %vm1709, %v1682
      %1721 = vst.msk [vmem:[#allocation3 + $0x58] sm:$0xff] %vm1709, %v1684
      %1722 = vst.msk [vmem:[#allocation3 + $0x60] sm:$0xff] %vm1709, %v1686
      %1723 = vst.msk [vmem:[#allocation3 + $0x68] sm:$0xff] %vm1709, %v1688
      %1724 = vst.msk [vmem:[#allocation3 + $0x70] sm:$0xff] %vm1709, %v1690
      %1725 = vst.msk [vmem:[#allocation3 + $0x78] sm:$0xff] %vm1709, %v1692
      %v1727 = vshrl.u32 %v793, 16
      %v1729 = vrot.slane %v1727, 4
      %v1730 = vshll.u32 %v793, 16
      %v1732 = vrot.slane %v1730, 5
      %v1733 = vor.u32 %v1729, %v1732
      %v1734 = vrot.slane %v1733, 4
      %v1736 = vshll.u32 %v794, 16
      %v1738 = vrot.slane %v1736, 5
      %v1739 = vsel %vm914, %v1734, %v1738
      %v1740 = vshrl.u32 %v794, 16
      %v1742 = vrot.slane %v1740, 4
      %v1743 = vor.u32 %v1742, %v1738
      %v1744 = vrot.slane %v1743, 4
      %v1746 = vshll.u32 %v795, 16
      %v1748 = vrot.slane %v1746, 5
      %v1749 = vsel %vm914, %v1744, %v1748
      %v1750 = vunpack.c.l.b16 %v1739
      %v1751 = vunpack.c.l.b16 %v1749
      %v1752 = vpack.c.b16 %v1751, %v1750
      %1753 = vrot.lane.b32.xlu0 %v1332, 16
      %v1754 = vpop.permute.xlu0 %1753
      %1755 = vrot.lane.b32.xlu0 %v1333, 16
      %v1756 = vpop.permute.xlu0 %1755
      %1757 = vrot.lane.b32.xlu0 %v1334, 16
      %v1758 = vpop.permute.xlu0 %1757
      %1759 = vrot.lane.b32.xlu0 %v1335, 16
      %v1760 = vpop.permute.xlu0 %1759
      %1761 = vrot.lane.b32.xlu0 %v1336, 16
      %v1762 = vpop.permute.xlu0 %1761
      %1763 = vrot.lane.b32.xlu0 %v1337, 16
      %v1764 = vpop.permute.xlu0 %1763
      %1765 = vrot.lane.b32.xlu0 %v1338, 16
      %v1766 = vpop.permute.xlu0 %1765
      %1767 = vrot.lane.b32.xlu0 %v1339, 16
      %v1768 = vpop.permute.xlu0 %1767
      %1769 = vrot.lane.b32.xlu0 %v1340, 16
      %v1770 = vpop.permute.xlu0 %1769
      %1771 = vrot.lane.b32.xlu0 %v1341, 16
      %v1772 = vpop.permute.xlu0 %1771
      %1773 = vrot.lane.b32.xlu0 %v1342, 16
      %v1774 = vpop.permute.xlu0 %1773
      %1775 = vrot.lane.b32.xlu0 %v1343, 16
      %v1776 = vpop.permute.xlu0 %1775
      %1777 = vrot.lane.b32.xlu0 %v1344, 16
      %v1778 = vpop.permute.xlu0 %1777
      %1779 = vrot.lane.b32.xlu0 %v1345, 16
      %v1780 = vpop.permute.xlu0 %1779
      %1781 = vrot.lane.b32.xlu0 %v1346, 16
      %v1782 = vpop.permute.xlu0 %1781
      %1783 = vrot.lane.b32.xlu0 %v1752, 16
      %v1784 = vpop.permute.xlu0 %1783
      %vm1801 = vcmask 162944
      %1802 = vst.msk [vmem:[#allocation3] sm:$0xff] %vm1801, %v1754
      %1803 = vst.msk [vmem:[#allocation3 + $0x8] sm:$0xff] %vm1801, %v1756
      %1804 = vst.msk [vmem:[#allocation3 + $0x10] sm:$0xff] %vm1801, %v1758
      %1805 = vst.msk [vmem:[#allocation3 + $0x18] sm:$0xff] %vm1801, %v1760
      %1806 = vst.msk [vmem:[#allocation3 + $0x20] sm:$0xff] %vm1801, %v1762
      %1807 = vst.msk [vmem:[#allocation3 + $0x28] sm:$0xff] %vm1801, %v1764
      %1808 = vst.msk [vmem:[#allocation3 + $0x30] sm:$0xff] %vm1801, %v1766
      %1809 = vst.msk [vmem:[#allocation3 + $0x38] sm:$0xff] %vm1801, %v1768
      %1810 = vst.msk [vmem:[#allocation3 + $0x40] sm:$0xff] %vm1801, %v1770
      %1811 = vst.msk [vmem:[#allocation3 + $0x48] sm:$0xff] %vm1801, %v1772
      %1812 = vst.msk [vmem:[#allocation3 + $0x50] sm:$0xff] %vm1801, %v1774
      %1813 = vst.msk [vmem:[#allocation3 + $0x58] sm:$0xff] %vm1801, %v1776
      %1814 = vst.msk [vmem:[#allocation3 + $0x60] sm:$0xff] %vm1801, %v1778
      %1815 = vst.msk [vmem:[#allocation3 + $0x68] sm:$0xff] %vm1801, %v1780
      %1816 = vst.msk [vmem:[#allocation3 + $0x70] sm:$0xff] %vm1801, %v1782
      %1817 = vst.msk [vmem:[#allocation3 + $0x78] sm:$0xff] %vm1801, %v1784
      %v1819 = vrot.slane %v793, 5
      %v1820 = vrot.slane %v1819, 4
      %v1821 = vrot.slane %v794, 5
      %v1822 = vsel %vm1430, %v1820, %v1821
      %v1823 = vrot.slane %v1821, 4
      %v1824 = vrot.slane %v795, 5
      %v1825 = vsel %vm1430, %v1823, %v1824
      %v1826 = vunpack.c.l.b16 %v1822
      %v1827 = vunpack.c.l.b16 %v1825
      %v1828 = vpack.c.b16 %v1827, %v1826
      %1829 = vrot.lane.b32.xlu0 %v1576, 20
      %v1830 = vpop.permute.xlu0 %1829
      %1831 = vrot.lane.b32.xlu0 %v1577, 20
      %v1832 = vpop.permute.xlu0 %1831
      %1833 = vrot.lane.b32.xlu0 %v1578, 20
      %v1834 = vpop.permute.xlu0 %1833
      %1835 = vrot.lane.b32.xlu0 %v1579, 20
      %v1836 = vpop.permute.xlu0 %1835
      %1837 = vrot.lane.b32.xlu0 %v1580, 20
      %v1838 = vpop.permute.xlu0 %1837
      %1839 = vrot.lane.b32.xlu0 %v1581, 20
      %v1840 = vpop.permute.xlu0 %1839
      %1841 = vrot.lane.b32.xlu0 %v1582, 20
      %v1842 = vpop.permute.xlu0 %1841
      %1843 = vrot.lane.b32.xlu0 %v1583, 20
      %v1844 = vpop.permute.xlu0 %1843
      %1845 = vrot.lane.b32.xlu0 %v1584, 20
      %v1846 = vpop.permute.xlu0 %1845
      %1847 = vrot.lane.b32.xlu0 %v1585, 20
      %v1848 = vpop.permute.xlu0 %1847
      %1849 = vrot.lane.b32.xlu0 %v1586, 20
      %v1850 = vpop.permute.xlu0 %1849
      %1851 = vrot.lane.b32.xlu0 %v1587, 20
      %v1852 = vpop.permute.xlu0 %1851
      %1853 = vrot.lane.b32.xlu0 %v1588, 20
      %v1854 = vpop.permute.xlu0 %1853
      %1855 = vrot.lane.b32.xlu0 %v1589, 20
      %v1856 = vpop.permute.xlu0 %1855
      %1857 = vrot.lane.b32.xlu0 %v1590, 20
      %v1858 = vpop.permute.xlu0 %1857
      %1859 = vrot.lane.b32.xlu0 %v1828, 20
      %v1860 = vpop.permute.xlu0 %1859
      %vm1877 = vcmask 195744
      %1878 = vst.msk [vmem:[#allocation3] sm:$0xff] %vm1877, %v1830
      %1879 = vst.msk [vmem:[#allocation3 + $0x8] sm:$0xff] %vm1877, %v1832
      %1880 = vst.msk [vmem:[#allocation3 + $0x10] sm:$0xff] %vm1877, %v1834
      %1881 = vst.msk [vmem:[#allocation3 + $0x18] sm:$0xff] %vm1877, %v1836
      %1882 = vst.msk [vmem:[#allocation3 + $0x20] sm:$0xff] %vm1877, %v1838
      %1883 = vst.msk [vmem:[#allocation3 + $0x28] sm:$0xff] %vm1877, %v1840
      %1884 = vst.msk [vmem:[#allocation3 + $0x30] sm:$0xff] %vm1877, %v1842
      %1885 = vst.msk [vmem:[#allocation3 + $0x38] sm:$0xff] %vm1877, %v1844
      %1886 = vst.msk [vmem:[#allocation3 + $0x40] sm:$0xff] %vm1877, %v1846
      %1887 = vst.msk [vmem:[#allocation3 + $0x48] sm:$0xff] %vm1877, %v1848
      %1888 = vst.msk [vmem:[#allocation3 + $0x50] sm:$0xff] %vm1877, %v1850
      %1889 = vst.msk [vmem:[#allocation3 + $0x58] sm:$0xff] %vm1877, %v1852
      %1890 = vst.msk [vmem:[#allocation3 + $0x60] sm:$0xff] %vm1877, %v1854
      %1891 = vst.msk [vmem:[#allocation3 + $0x68] sm:$0xff] %vm1877, %v1856
      %1892 = vst.msk [vmem:[#allocation3 + $0x70] sm:$0xff] %vm1877, %v1858
      %1893 = vst.msk [vmem:[#allocation3 + $0x78] sm:$0xff] %vm1877, %v1860
      %v1896 = vunpack.c.l.b16 %v796
      %v1897 = vunpack.c.l.b16 %v797
      %v1898 = vpack.c.b16 %v1897, %v1896
      %1899 = vrot.lane.b32.xlu0 %v865, 24
      %v1900 = vpop.permute.xlu0 %1899
      %1901 = vrot.lane.b32.xlu0 %v866, 24
      %v1902 = vpop.permute.xlu0 %1901
      %1903 = vrot.lane.b32.xlu0 %v867, 24
      %v1904 = vpop.permute.xlu0 %1903
      %1905 = vrot.lane.b32.xlu0 %v868, 24
      %v1906 = vpop.permute.xlu0 %1905
      %1907 = vrot.lane.b32.xlu0 %v869, 24
      %v1908 = vpop.permute.xlu0 %1907
      %1909 = vrot.lane.b32.xlu0 %v870, 24
      %v1910 = vpop.permute.xlu0 %1909
      %1911 = vrot.lane.b32.xlu0 %v871, 24
      %v1912 = vpop.permute.xlu0 %1911
      %1913 = vrot.lane.b32.xlu0 %v872, 24
      %v1914 = vpop.permute.xlu0 %1913
      %1915 = vrot.lane.b32.xlu0 %v873, 24
      %v1916 = vpop.permute.xlu0 %1915
      %1917 = vrot.lane.b32.xlu0 %v874, 24
      %v1918 = vpop.permute.xlu0 %1917
      %1919 = vrot.lane.b32.xlu0 %v875, 24
      %v1920 = vpop.permute.xlu0 %1919
      %1921 = vrot.lane.b32.xlu0 %v876, 24
      %v1922 = vpop.permute.xlu0 %1921
      %1923 = vrot.lane.b32.xlu0 %v877, 24
      %v1924 = vpop.permute.xlu0 %1923
      %1925 = vrot.lane.b32.xlu0 %v878, 24
      %v1926 = vpop.permute.xlu0 %1925
      %1927 = vrot.lane.b32.xlu0 %v1660, 24
      %v1928 = vpop.permute.xlu0 %1927
      %1929 = vrot.lane.b32.xlu0 %v1898, 24
      %v1930 = vpop.permute.xlu0 %1929
      %vm1947 = vcmask 228544
      %1948 = vst.msk [vmem:[#allocation3] sm:$0xff] %vm1947, %v1900
      %1949 = vst.msk [vmem:[#allocation3 + $0x8] sm:$0xff] %vm1947, %v1902
      %1950 = vst.msk [vmem:[#allocation3 + $0x10] sm:$0xff] %vm1947, %v1904
      %1951 = vst.msk [vmem:[#allocation3 + $0x18] sm:$0xff] %vm1947, %v1906
      %1952 = vst.msk [vmem:[#allocation3 + $0x20] sm:$0xff] %vm1947, %v1908
      %1953 = vst.msk [vmem:[#allocation3 + $0x28] sm:$0xff] %vm1947, %v1910
      %1954 = vst.msk [vmem:[#allocation3 + $0x30] sm:$0xff] %vm1947, %v1912
      %1955 = vst.msk [vmem:[#allocation3 + $0x38] sm:$0xff] %vm1947, %v1914
      %1956 = vst.msk [vmem:[#allocation3 + $0x40] sm:$0xff] %vm1947, %v1916
      %1957 = vst.msk [vmem:[#allocation3 + $0x48] sm:$0xff] %vm1947, %v1918
      %1958 = vst.msk [vmem:[#allocation3 + $0x50] sm:$0xff] %vm1947, %v1920
      %1959 = vst.msk [vmem:[#allocation3 + $0x58] sm:$0xff] %vm1947, %v1922
      %1960 = vst.msk [vmem:[#allocation3 + $0x60] sm:$0xff] %vm1947, %v1924
      %1961 = vst.msk [vmem:[#allocation3 + $0x68] sm:$0xff] %vm1947, %v1926
      %1962 = vst.msk [vmem:[#allocation3 + $0x70] sm:$0xff] %vm1947, %v1928
      %1963 = vst.msk [vmem:[#allocation3 + $0x78] sm:$0xff] %vm1947, %v1930
      %v1965 = vshrl.u32 %v796, 16
      %v1967 = vrot.slane %v1965, 4
      %v1968 = vshll.u32 %v796, 16
      %v1970 = vrot.slane %v1968, 5
      %v1971 = vor.u32 %v1967, %v1970
      %v1972 = vrot.slane %v1971, 4
      %v1974 = vshll.u32 %v797, 16
      %v1976 = vrot.slane %v1974, 5
      %v1977 = vsel %vm914, %v1972, %v1976
      %v1978 = vshrl.u32 %v797, 16
      %v1980 = vrot.slane %v1978, 4
      %v1981 = vor.u32 %v1980, %v1976
      %v1982 = vrot.slane %v1981, 4
      %v1984 = vshll.u32 %v798, 16
      %v1986 = vrot.slane %v1984, 5
      %v1987 = vsel %vm914, %v1982, %v1986
      %v1988 = vunpack.c.l.b16 %v1977
      %v1989 = vunpack.c.l.b16 %v1987
      %v1990 = vpack.c.b16 %v1989, %v1988
      %1991 = vrot.lane.b32.xlu0 %v1333, 28
      %v1992 = vpop.permute.xlu0 %1991
      %1993 = vrot.lane.b32.xlu0 %v1334, 28
      %v1994 = vpop.permute.xlu0 %1993
      %1995 = vrot.lane.b32.xlu0 %v1335, 28
      %v1996 = vpop.permute.xlu0 %1995
      %1997 = vrot.lane.b32.xlu0 %v1336, 28
      %v1998 = vpop.permute.xlu0 %1997
      %1999 = vrot.lane.b32.xlu0 %v1337, 28
      %v2000 = vpop.permute.xlu0 %1999
      %2001 = vrot.lane.b32.xlu0 %v1338, 28
      %v2002 = vpop.permute.xlu0 %2001
      %2003 = vrot.lane.b32.xlu0 %v1339, 28
      %v2004 = vpop.permute.xlu0 %2003
      %2005 = vrot.lane.b32.xlu0 %v1340, 28
      %v2006 = vpop.permute.xlu0 %2005
      %2007 = vrot.lane.b32.xlu0 %v1341, 28
      %v2008 = vpop.permute.xlu0 %2007
      %2009 = vrot.lane.b32.xlu0 %v1342, 28
      %v2010 = vpop.permute.xlu0 %2009
      %2011 = vrot.lane.b32.xlu0 %v1343, 28
      %v2012 = vpop.permute.xlu0 %2011
      %2013 = vrot.lane.b32.xlu0 %v1344, 28
      %v2014 = vpop.permute.xlu0 %2013
      %2015 = vrot.lane.b32.xlu0 %v1345, 28
      %v2016 = vpop.permute.xlu0 %2015
      %2017 = vrot.lane.b32.xlu0 %v1346, 28
      %v2018 = vpop.permute.xlu0 %2017
      %2019 = vrot.lane.b32.xlu0 %v1752, 28
      %v2020 = vpop.permute.xlu0 %2019
      %2021 = vrot.lane.b32.xlu0 %v1990, 28
      %v2022 = vpop.permute.xlu0 %2021
      %vm2039 = vcmask 261344
      %2040 = vst.msk [vmem:[#allocation3] sm:$0xff] %vm2039, %v1992
      %2041 = vst.msk [vmem:[#allocation3 + $0x8] sm:$0xff] %vm2039, %v1994
      %2042 = vst.msk [vmem:[#allocation3 + $0x10] sm:$0xff] %vm2039, %v1996
      %2043 = vst.msk [vmem:[#allocation3 + $0x18] sm:$0xff] %vm2039, %v1998
      %2044 = vst.msk [vmem:[#allocation3 + $0x20] sm:$0xff] %vm2039, %v2000
      %2045 = vst.msk [vmem:[#allocation3 + $0x28] sm:$0xff] %vm2039, %v2002
      %2046 = vst.msk [vmem:[#allocation3 + $0x30] sm:$0xff] %vm2039, %v2004
      %2047 = vst.msk [vmem:[#allocation3 + $0x38] sm:$0xff] %vm2039, %v2006
      %2048 = vst.msk [vmem:[#allocation3 + $0x40] sm:$0xff] %vm2039, %v2008
      %2049 = vst.msk [vmem:[#allocation3 + $0x48] sm:$0xff] %vm2039, %v2010
      %2050 = vst.msk [vmem:[#allocation3 + $0x50] sm:$0xff] %vm2039, %v2012
      %2051 = vst.msk [vmem:[#allocation3 + $0x58] sm:$0xff] %vm2039, %v2014
      %2052 = vst.msk [vmem:[#allocation3 + $0x60] sm:$0xff] %vm2039, %v2016
      %2053 = vst.msk [vmem:[#allocation3 + $0x68] sm:$0xff] %vm2039, %v2018
      %2054 = vst.msk [vmem:[#allocation3 + $0x70] sm:$0xff] %vm2039, %v2020
      %2055 = vst.msk [vmem:[#allocation3 + $0x78] sm:$0xff] %vm2039, %v2022
      %v2057 = vrot.slane %v796, 5
      %v2058 = vrot.slane %v2057, 4
      %v2059 = vrot.slane %v797, 5
      %v2060 = vsel %vm1430, %v2058, %v2059
      %v2061 = vrot.slane %v2059, 4
      %v2062 = vrot.slane %v798, 5
      %v2063 = vsel %vm1430, %v2061, %v2062
      %v2064 = vunpack.c.l.b16 %v2060
      %v2065 = vunpack.c.l.b16 %v2063
      %v2066 = vpack.c.b16 %v2065, %v2064
      %2067 = vrot.lane.b32.xlu0 %v1577, 32
      %v2068 = vpop.permute.xlu0 %2067
      %2069 = vrot.lane.b32.xlu0 %v1578, 32
      %v2070 = vpop.permute.xlu0 %2069
      %2071 = vrot.lane.b32.xlu0 %v1579, 32
      %v2072 = vpop.permute.xlu0 %2071
      %2073 = vrot.lane.b32.xlu0 %v1580, 32
      %v2074 = vpop.permute.xlu0 %2073
      %2075 = vrot.lane.b32.xlu0 %v1581, 32
      %v2076 = vpop.permute.xlu0 %2075
      %2077 = vrot.lane.b32.xlu0 %v1582, 32
      %v2078 = vpop.permute.xlu0 %2077
      %2079 = vrot.lane.b32.xlu0 %v1583, 32
      %v2080 = vpop.permute.xlu0 %2079
      %2081 = vrot.lane.b32.xlu0 %v1584, 32
      %v2082 = vpop.permute.xlu0 %2081
      %2083 = vrot.lane.b32.xlu0 %v1585, 32
      %v2084 = vpop.permute.xlu0 %2083
      %2085 = vrot.lane.b32.xlu0 %v1586, 32
      %v2086 = vpop.permute.xlu0 %2085
      %2087 = vrot.lane.b32.xlu0 %v1587, 32
      %v2088 = vpop.permute.xlu0 %2087
      %2089 = vrot.lane.b32.xlu0 %v1588, 32
      %v2090 = vpop.permute.xlu0 %2089
      %2091 = vrot.lane.b32.xlu0 %v1589, 32
      %v2092 = vpop.permute.xlu0 %2091
      %2093 = vrot.lane.b32.xlu0 %v1590, 32
      %v2094 = vpop.permute.xlu0 %2093
      %2095 = vrot.lane.b32.xlu0 %v1828, 32
      %v2096 = vpop.permute.xlu0 %2095
      %2097 = vrot.lane.b32.xlu0 %v2066, 32
      %v2098 = vpop.permute.xlu0 %2097
      %vm2115 = vcmask 294144
      %2116 = vst.msk [vmem:[#allocation3] sm:$0xff] %vm2115, %v2068
      %2117 = vst.msk [vmem:[#allocation3 + $0x8] sm:$0xff] %vm2115, %v2070
      %2118 = vst.msk [vmem:[#allocation3 + $0x10] sm:$0xff] %vm2115, %v2072
      %2119 = vst.msk [vmem:[#allocation3 + $0x18] sm:$0xff] %vm2115, %v2074
      %2120 = vst.msk [vmem:[#allocation3 + $0x20] sm:$0xff] %vm2115, %v2076
      %2121 = vst.msk [vmem:[#allocation3 + $0x28] sm:$0xff] %vm2115, %v2078
      %2122 = vst.msk [vmem:[#allocation3 + $0x30] sm:$0xff] %vm2115, %v2080
      %2123 = vst.msk [vmem:[#allocation3 + $0x38] sm:$0xff] %vm2115, %v2082
      %2124 = vst.msk [vmem:[#allocation3 + $0x40] sm:$0xff] %vm2115, %v2084
      %2125 = vst.msk [vmem:[#allocation3 + $0x48] sm:$0xff] %vm2115, %v2086
      %2126 = vst.msk [vmem:[#allocation3 + $0x50] sm:$0xff] %vm2115, %v2088
      %2127 = vst.msk [vmem:[#allocation3 + $0x58] sm:$0xff] %vm2115, %v2090
      %2128 = vst.msk [vmem:[#allocation3 + $0x60] sm:$0xff] %vm2115, %v2092
      %2129 = vst.msk [vmem:[#allocation3 + $0x68] sm:$0xff] %vm2115, %v2094
      %2130 = vst.msk [vmem:[#allocation3 + $0x70] sm:$0xff] %vm2115, %v2096
      %2131 = vst.msk [vmem:[#allocation3 + $0x78] sm:$0xff] %vm2115, %v2098
      %v2132 = vld [vmem:[#allocation3] sm:$0xff]
      %v2133 = vld [vmem:[#allocation3 + $0x8] sm:$0xff]
      %v2134 = vld [vmem:[#allocation3 + $0x10] sm:$0xff]
      %v2135 = vld [vmem:[#allocation3 + $0x18] sm:$0xff]
      %v2136 = vld [vmem:[#allocation3 + $0x20] sm:$0xff]
      %v2137 = vld [vmem:[#allocation3 + $0x28] sm:$0xff]
      %v2138 = vld [vmem:[#allocation3 + $0x30] sm:$0xff]
      %v2139 = vld [vmem:[#allocation3 + $0x38] sm:$0xff]
      %v2140 = vld [vmem:[#allocation3 + $0x40] sm:$0xff]
      %v2141 = vld [vmem:[#allocation3 + $0x48] sm:$0xff]
      %v2142 = vld [vmem:[#allocation3 + $0x50] sm:$0xff]
      %v2143 = vld [vmem:[#allocation3 + $0x58] sm:$0xff]
      %v2144 = vld [vmem:[#allocation3 + $0x60] sm:$0xff]
      %v2145 = vld [vmem:[#allocation3 + $0x68] sm:$0xff]
      %v2146 = vld [vmem:[#allocation3 + $0x70] sm:$0xff]
      %v2147 = vld [vmem:[#allocation3 + $0x78] sm:$0xff]
      %v2148 = vld [vmem:[%s1] sm:$0xf]
      %v2149 = vld [vmem:[%s1 + $0x4] sm:$0xf]
      %v2150 = vld [vmem:[%s1 + $0x8] sm:$0xf]
      %v2151 = vld [vmem:[%s1 + $0xc] sm:$0xf]
      %v2152 = vld [vmem:[%s1 + $0x10] sm:$0x3]
      %v2158 = vunpack.c.l.b16 %v2148
      %v2159 = vunpack.c.l.b16 %v2149
      %v2160 = vunpack.c.l.b16 %v2150
      %v2161 = vunpack.c.l.b16 %v2151
      %v2162 = vunpack.c.l.b16 %v2152
      %v2163 = vpack.c.b16 %v2159, %v2158
      %v2164 = vpack.c.b16 %v2161, %v2160
      %v2165 = vpack.c.b16 %v2162, %v2162
      %vm2168 = vcmask 293888
      %v2170 = vsel %vm2168, %v2132, 0
      %v2173 = vsel %vm2168, %v2133, 0
      %v2176 = vsel %vm2168, %v2134, 0
      %v2179 = vsel %vm2168, %v2135, 0
      %v2182 = vsel %vm2168, %v2136, 0
      %v2185 = vsel %vm2168, %v2137, 0
      %v2188 = vsel %vm2168, %v2138, 0
      %v2191 = vsel %vm2168, %v2139, 0
      %v2194 = vsel %vm2168, %v2140, 0
      %v2197 = vsel %vm2168, %v2141, 0
      %v2200 = vsel %vm2168, %v2142, 0
      %v2203 = vsel %vm2168, %v2143, 0
      %v2206 = vsel %vm2168, %v2144, 0
      %v2209 = vsel %vm2168, %v2145, 0
      %v2212 = vsel %vm2168, %v2146, 0
      %v2215 = vsel %vm2168, %v2147, 0
      %vm2217 = vcmask 1041408
      %v2219 = vsel %vm2217, %v2165, 0
      %2221 = vmatprep.subr.bf16.mxu0 0
      %2222 = vmatpush1.bf16.msra.mxu0 %v2163
      %2223 = vmatprep.subr.bf16.mxu0 0
      %2224 = vmatpush1.bf16.msra.mxu0 %v2164
      %2225 = vmatprep.subr.bf16.mxu0 0
      %2226 = vmatpush1.bf16.msra.mxu0 %v2219
      %2227 = vmatprep.subr.bf16.mxu0 0
      %2228 = vmatpush1.bf16.msra.mxu0 0
      %2229 = vmatprep.subr.bf16.mxu0 0
      %2230 = vmatpush1.bf16.msra.mxu0 0
      %2231 = vmatprep.subr.bf16.mxu0 0
      %2232 = vmatpush1.bf16.msra.mxu0 0
      %2233 = vmatprep.subr.bf16.mxu0 0
      %2234 = vmatpush1.bf16.msra.mxu0 0
      %2235 = vmatprep.subr.bf16.mxu0 0
      %2236 = vmatpush1.bf16.msra.mxu0 0
      %2237 = vmatprep.subr.bf16.mxu0 0
      %2238 = vmatpush1.bf16.msra.mxu0 0
      %2239 = vmatprep.subr.bf16.mxu0 0
      %2240 = vmatpush1.bf16.msra.mxu0 0
      %2241 = vmatprep.subr.bf16.mxu0 0
      %2242 = vmatpush1.bf16.msra.mxu0 0
      %2243 = vmatprep.subr.bf16.mxu0 0
      %2244 = vmatpush1.bf16.msra.mxu0 0
      %2245 = vmatprep.subr.bf16.mxu0 0
      %2246 = vmatpush1.bf16.msra.mxu0 0
      %2247 = vmatprep.subr.bf16.mxu0 0
      %2248 = vmatpush1.bf16.msra.mxu0 0
      %2249 = vmatprep.subr.bf16.mxu0 0
      %2250 = vmatpush1.bf16.msra.mxu0 0
      %2251 = vmatprep.subr.bf16.mxu0 0
      %2252 = vmatpush1.bf16.msra.mxu0 0
      %2253 = vmatprep.mubr.bf16.mxu0 0
      %2254 = vmatmul.mubr.bf16.gmra.mrb[0].mxu0 %v2170
      %v2255 = vpop.f32.mrb[0].mxu0
      %v2256 = vadd.f32 0.0, %v2255
      %v2257 = vpop.f32.mrb[0].mxu0
      %v2258 = vpop.f32.mrb[0].mxu0
      %v2259 = vadd.f32 0.0, %v2258
      %v2260 = vpop.f32.mrb[0].mxu0
      %2261 = vmatprep.mubr.bf16.mxu0 0
      %2262 = vmatmul.mubr.bf16.gmra.mrb[0].mxu0 %v2173
      %v2263 = vpop.f32.mrb[0].mxu0
      %v2264 = vadd.f32 0.0, %v2263
      %v2265 = vpop.f32.mrb[0].mxu0
      %v2266 = vpop.f32.mrb[0].mxu0
      %v2267 = vadd.f32 0.0, %v2266
      %v2268 = vpop.f32.mrb[0].mxu0
      %2269 = vmatprep.mubr.bf16.mxu0 0
      %2270 = vmatmul.mubr.bf16.gmra.mrb[0].mxu0 %v2176
      %v2271 = vpop.f32.mrb[0].mxu0
      %v2272 = vadd.f32 0.0, %v2271
      %v2273 = vpop.f32.mrb[0].mxu0
      %v2274 = vpop.f32.mrb[0].mxu0
      %v2275 = vadd.f32 0.0, %v2274
      %v2276 = vpop.f32.mrb[0].mxu0
      %2277 = vmatprep.mubr.bf16.mxu0 0
      %2278 = vmatmul.mubr.bf16.gmra.mrb[0].mxu0 %v2179
      %v2279 = vpop.f32.mrb[0].mxu0
      %v2280 = vadd.f32 0.0, %v2279
      %v2281 = vpop.f32.mrb[0].mxu0
      %v2282 = vpop.f32.mrb[0].mxu0
      %v2283 = vadd.f32 0.0, %v2282
      %v2284 = vpop.f32.mrb[0].mxu0
      %2285 = vmatprep.mubr.bf16.mxu0 0
      %2286 = vmatmul.mubr.bf16.gmra.mrb[0].mxu0 %v2182
      %v2287 = vpop.f32.mrb[0].mxu0
      %v2288 = vadd.f32 0.0, %v2287
      %v2289 = vpop.f32.mrb[0].mxu0
      %v2290 = vpop.f32.mrb[0].mxu0
      %v2291 = vadd.f32 0.0, %v2290
      %v2292 = vpop.f32.mrb[0].mxu0
      %2293 = vmatprep.mubr.bf16.mxu0 0
      %2294 = vmatmul.mubr.bf16.gmra.mrb[0].mxu0 %v2185
      %v2295 = vpop.f32.mrb[0].mxu0
      %v2296 = vadd.f32 0.0, %v2295
      %v2297 = vpop.f32.mrb[0].mxu0
      %v2298 = vpop.f32.mrb[0].mxu0
      %v2299 = vadd.f32 0.0, %v2298
      %v2300 = vpop.f32.mrb[0].mxu0
      %2301 = vmatprep.mubr.bf16.mxu0 0
      %2302 = vmatmul.mubr.bf16.gmra.mrb[0].mxu0 %v2188
      %v2303 = vpop.f32.mrb[0].mxu0
      %v2304 = vadd.f32 0.0, %v2303
      %v2305 = vpop.f32.mrb[0].mxu0
      %v2306 = vpop.f32.mrb[0].mxu0
      %v2307 = vadd.f32 0.0, %v2306
      %v2308 = vpop.f32.mrb[0].mxu0
      %2309 = vmatprep.mubr.bf16.mxu0 0
      %2310 = vmatmul.mubr.bf16.gmra.mrb[0].mxu0 %v2191
      %v2311 = vpop.f32.mrb[0].mxu0
      %v2312 = vadd.f32 0.0, %v2311
      %v2313 = vpop.f32.mrb[0].mxu0
      %v2314 = vpop.f32.mrb[0].mxu0
      %v2315 = vadd.f32 0.0, %v2314
      %v2316 = vpop.f32.mrb[0].mxu0
      %2317 = vmatprep.mubr.bf16.mxu0 0
      %2318 = vmatmul.mubr.bf16.gmra.mrb[0].mxu0 %v2194
      %v2319 = vpop.f32.mrb[0].mxu0
      %v2320 = vadd.f32 0.0, %v2319
      %v2321 = vpop.f32.mrb[0].mxu0
      %v2322 = vpop.f32.mrb[0].mxu0
      %v2323 = vadd.f32 0.0, %v2322
      %v2324 = vpop.f32.mrb[0].mxu0
      %2325 = vmatprep.mubr.bf16.mxu0 0
      %2326 = vmatmul.mubr.bf16.gmra.mrb[0].mxu0 %v2197
      %v2327 = vpop.f32.mrb[0].mxu0
      %v2328 = vadd.f32 0.0, %v2327
      %v2329 = vpop.f32.mrb[0].mxu0
      %v2330 = vpop.f32.mrb[0].mxu0
      %v2331 = vadd.f32 0.0, %v2330
      %v2332 = vpop.f32.mrb[0].mxu0
      %2333 = vmatprep.mubr.bf16.mxu0 0
      %2334 = vmatmul.mubr.bf16.gmra.mrb[0].mxu0 %v2200
      %v2335 = vpop.f32.mrb[0].mxu0
      %v2336 = vadd.f32 0.0, %v2335
      %v2337 = vpop.f32.mrb[0].mxu0
      %v2338 = vpop.f32.mrb[0].mxu0
      %v2339 = vadd.f32 0.0, %v2338
      %v2340 = vpop.f32.mrb[0].mxu0
      %2341 = vmatprep.mubr.bf16.mxu0 0
      %2342 = vmatmul.mubr.bf16.gmra.mrb[0].mxu0 %v2203
      %v2343 = vpop.f32.mrb[0].mxu0
      %v2344 = vadd.f32 0.0, %v2343
      %v2345 = vpop.f32.mrb[0].mxu0
      %v2346 = vpop.f32.mrb[0].mxu0
      %v2347 = vadd.f32 0.0, %v2346
      %v2348 = vpop.f32.mrb[0].mxu0
      %2349 = vmatprep.mubr.bf16.mxu0 0
      %2350 = vmatmul.mubr.bf16.gmra.mrb[0].mxu0 %v2206
      %v2351 = vpop.f32.mrb[0].mxu0
      %v2352 = vadd.f32 0.0, %v2351
      %v2353 = vpop.f32.mrb[0].mxu0
      %v2354 = vpop.f32.mrb[0].mxu0
      %v2355 = vadd.f32 0.0, %v2354
      %v2356 = vpop.f32.mrb[0].mxu0
      %2357 = vmatprep.mubr.bf16.mxu0 0
      %2358 = vmatmul.mubr.bf16.gmra.mrb[0].mxu0 %v2209
      %v2359 = vpop.f32.mrb[0].mxu0
      %v2360 = vadd.f32 0.0, %v2359
      %v2361 = vpop.f32.mrb[0].mxu0
      %v2362 = vpop.f32.mrb[0].mxu0
      %v2363 = vadd.f32 0.0, %v2362
      %v2364 = vpop.f32.mrb[0].mxu0
      %2365 = vmatprep.mubr.bf16.mxu0 0
      %2366 = vmatmul.mubr.bf16.gmra.mrb[0].mxu0 %v2212
      %v2367 = vpop.f32.mrb[0].mxu0
      %v2368 = vadd.f32 0.0, %v2367
      %v2369 = vpop.f32.mrb[0].mxu0
      %v2370 = vpop.f32.mrb[0].mxu0
      %v2371 = vadd.f32 0.0, %v2370
      %v2372 = vpop.f32.mrb[0].mxu0
      %2373 = vmatprep.mubr.bf16.mxu0 0
      %2374 = vmatmul.mubr.bf16.gmra.mrb[0].mxu0 %v2215
      %v2375 = vpop.f32.mrb[0].mxu0
      %v2376 = vadd.f32 0.0, %v2375
      %v2377 = vpop.f32.mrb[0].mxu0
      %v2378 = vpop.f32.mrb[0].mxu0
      %v2379 = vadd.f32 0.0, %v2378
      %v2380 = vpop.f32.mrb[0].mxu0
      %2381 = vdwg.mxu0
      %vm2382 = vcmask 64512
      %v2383 = vsel %vm2382, %v2256, 0.0
      %v2384 = vsel %vm2382, %v2259, 0.0
      %v2385 = vadd.f32 %v2383, %v2384
      %v2386 = vsel %vm2382, %v2264, 0.0
      %v2387 = vadd.f32 %v2385, %v2386
      %v2388 = vsel %vm2382, %v2267, 0.0
      %v2389 = vadd.f32 %v2387, %v2388
      %v2390 = vsel %vm2382, %v2272, 0.0
      %v2391 = vadd.f32 %v2389, %v2390
      %v2392 = vsel %vm2382, %v2275, 0.0
      %v2393 = vadd.f32 %v2391, %v2392
      %v2394 = vsel %vm2382, %v2280, 0.0
      %v2395 = vadd.f32 %v2393, %v2394
      %v2396 = vsel %vm2382, %v2283, 0.0
      %v2397 = vadd.f32 %v2395, %v2396
      %v2398 = vsel %vm2382, %v2288, 0.0
      %v2399 = vadd.f32 %v2397, %v2398
      %v2400 = vsel %vm2382, %v2291, 0.0
      %v2401 = vadd.f32 %v2399, %v2400
      %v2402 = vsel %vm2382, %v2296, 0.0
      %v2403 = vadd.f32 %v2401, %v2402
      %v2404 = vsel %vm2382, %v2299, 0.0
      %v2405 = vadd.f32 %v2403, %v2404
      %v2406 = vsel %vm2382, %v2304, 0.0
      %v2407 = vadd.f32 %v2405, %v2406
      %v2408 = vsel %vm2382, %v2307, 0.0
      %v2409 = vadd.f32 %v2407, %v2408
      %v2410 = vsel %vm2382, %v2312, 0.0
      %v2411 = vadd.f32 %v2409, %v2410
      %v2412 = vsel %vm2382, %v2315, 0.0
      %v2413 = vadd.f32 %v2411, %v2412
      %v2414 = vsel %vm2382, %v2320, 0.0
      %v2415 = vadd.f32 %v2413, %v2414
      %v2416 = vsel %vm2382, %v2323, 0.0
      %v2417 = vadd.f32 %v2415, %v2416
      %v2418 = vsel %vm2382, %v2328, 0.0
      %v2419 = vadd.f32 %v2417, %v2418
      %v2420 = vsel %vm2382, %v2331, 0.0
      %v2421 = vadd.f32 %v2419, %v2420
      %v2422 = vsel %vm2382, %v2336, 0.0
      %v2423 = vadd.f32 %v2421, %v2422
      %v2424 = vsel %vm2382, %v2339, 0.0
      %v2425 = vadd.f32 %v2423, %v2424
      %v2426 = vsel %vm2382, %v2344, 0.0
      %v2427 = vadd.f32 %v2425, %v2426
      %v2428 = vsel %vm2382, %v2347, 0.0
      %v2429 = vadd.f32 %v2427, %v2428
      %v2430 = vsel %vm2382, %v2352, 0.0
      %v2431 = vadd.f32 %v2429, %v2430
      %v2432 = vsel %vm2382, %v2355, 0.0
      %v2433 = vadd.f32 %v2431, %v2432
      %v2434 = vsel %vm2382, %v2360, 0.0
      %v2435 = vadd.f32 %v2433, %v2434
      %v2436 = vsel %vm2382, %v2363, 0.0
      %v2437 = vadd.f32 %v2435, %v2436
      %v2438 = vsel %vm2382, %v2368, 0.0
      %v2439 = vadd.f32 %v2437, %v2438
      %v2440 = vsel %vm2382, %v2371, 0.0
      %v2441 = vadd.f32 %v2439, %v2440
      %v2442 = vsel %vm2382, %v2376, 0.0
      %v2443 = vadd.f32 %v2441, %v2442
      %v2444 = vsel %vm2382, %v2379, 0.0
      %v2445 = vadd.f32 %v2443, %v2444
      %v2446 = vrot.slane %v2445, 4
      %v2447 = vadd.f32 %v2445, %v2446
      %v2448 = vrot.slane %v2447, 2
      %v2449 = vadd.f32 %v2447, %v2448
      %v2450 = vrot.slane %v2449, 1
      %v2451 = vadd.f32 %v2449, %v2450
      %vm2452 = vcmask 57344
      %2453 = vst.msk [vmem:[%s211] sm:$0x1] %vm2452, %v2451
      %v2454 = vmul.f32 %v2256, %v2256
      %v2455 = vmul.f32 %v2259, %v2259
      %v2456 = vmul.f32 %v2264, %v2264
      %v2457 = vmul.f32 %v2267, %v2267
      %v2458 = vmul.f32 %v2272, %v2272
      %v2459 = vmul.f32 %v2275, %v2275
      %v2460 = vmul.f32 %v2280, %v2280
      %v2461 = vmul.f32 %v2283, %v2283
      %v2462 = vmul.f32 %v2288, %v2288
      %v2463 = vmul.f32 %v2291, %v2291
      %v2464 = vmul.f32 %v2296, %v2296
      %v2465 = vmul.f32 %v2299, %v2299
      %v2466 = vmul.f32 %v2304, %v2304
      %v2467 = vmul.f32 %v2307, %v2307
      %v2468 = vmul.f32 %v2312, %v2312
      %v2469 = vmul.f32 %v2315, %v2315
      %v2470 = vmul.f32 %v2320, %v2320
      %v2471 = vmul.f32 %v2323, %v2323
      %v2472 = vmul.f32 %v2328, %v2328
      %v2473 = vmul.f32 %v2331, %v2331
      %v2474 = vmul.f32 %v2336, %v2336
      %v2475 = vmul.f32 %v2339, %v2339
      %v2476 = vmul.f32 %v2344, %v2344
      %v2477 = vmul.f32 %v2347, %v2347
      %v2478 = vmul.f32 %v2352, %v2352
      %v2479 = vmul.f32 %v2355, %v2355
      %v2480 = vmul.f32 %v2360, %v2360
      %v2481 = vmul.f32 %v2363, %v2363
      %v2482 = vmul.f32 %v2368, %v2368
      %v2483 = vmul.f32 %v2371, %v2371
      %v2484 = vmul.f32 %v2376, %v2376
      %v2485 = vmul.f32 %v2379, %v2379
      %v2486 = vsel %vm2382, %v2454, 0.0
      %v2487 = vsel %vm2382, %v2455, 0.0
      %v2488 = vadd.f32 %v2486, %v2487
      %v2489 = vsel %vm2382, %v2456, 0.0
      %v2490 = vadd.f32 %v2488, %v2489
      %v2491 = vsel %vm2382, %v2457, 0.0
      %v2492 = vadd.f32 %v2490, %v2491
      %v2493 = vsel %vm2382, %v2458, 0.0
      %v2494 = vadd.f32 %v2492, %v2493
      %v2495 = vsel %vm2382, %v2459, 0.0
      %v2496 = vadd.f32 %v2494, %v2495
      %v2497 = vsel %vm2382, %v2460, 0.0
      %v2498 = vadd.f32 %v2496, %v2497
      %v2499 = vsel %vm2382, %v2461, 0.0
      %v2500 = vadd.f32 %v2498, %v2499
      %v2501 = vsel %vm2382, %v2462, 0.0
      %v2502 = vadd.f32 %v2500, %v2501
      %v2503 = vsel %vm2382, %v2463, 0.0
      %v2504 = vadd.f32 %v2502, %v2503
      %v2505 = vsel %vm2382, %v2464, 0.0
      %v2506 = vadd.f32 %v2504, %v2505
      %v2507 = vsel %vm2382, %v2465, 0.0
      %v2508 = vadd.f32 %v2506, %v2507
      %v2509 = vsel %vm2382, %v2466, 0.0
      %v2510 = vadd.f32 %v2508, %v2509
      %v2511 = vsel %vm2382, %v2467, 0.0
      %v2512 = vadd.f32 %v2510, %v2511
      %v2513 = vsel %vm2382, %v2468, 0.0
      %v2514 = vadd.f32 %v2512, %v2513
      %v2515 = vsel %vm2382, %v2469, 0.0
      %v2516 = vadd.f32 %v2514, %v2515
      %v2517 = vsel %vm2382, %v2470, 0.0
      %v2518 = vadd.f32 %v2516, %v2517
      %v2519 = vsel %vm2382, %v2471, 0.0
      %v2520 = vadd.f32 %v2518, %v2519
      %v2521 = vsel %vm2382, %v2472, 0.0
      %v2522 = vadd.f32 %v2520, %v2521
      %v2523 = vsel %vm2382, %v2473, 0.0
      %v2524 = vadd.f32 %v2522, %v2523
      %v2525 = vsel %vm2382, %v2474, 0.0
      %v2526 = vadd.f32 %v2524, %v2525
      %v2527 = vsel %vm2382, %v2475, 0.0
      %v2528 = vadd.f32 %v2526, %v2527
      %v2529 = vsel %vm2382, %v2476, 0.0
      %v2530 = vadd.f32 %v2528, %v2529
      %v2531 = vsel %vm2382, %v2477, 0.0
      %v2532 = vadd.f32 %v2530, %v2531
      %v2533 = vsel %vm2382, %v2478, 0.0
      %v2534 = vadd.f32 %v2532, %v2533
      %v2535 = vsel %vm2382, %v2479, 0.0
      %v2536 = vadd.f32 %v2534, %v2535
      %v2537 = vsel %vm2382, %v2480, 0.0
      %v2538 = vadd.f32 %v2536, %v2537
      %v2539 = vsel %vm2382, %v2481, 0.0
      %v2540 = vadd.f32 %v2538, %v2539
      %v2541 = vsel %vm2382, %v2482, 0.0
      %v2542 = vadd.f32 %v2540, %v2541
      %v2543 = vsel %vm2382, %v2483, 0.0
      %v2544 = vadd.f32 %v2542, %v2543
      %v2545 = vsel %vm2382, %v2484, 0.0
      %v2546 = vadd.f32 %v2544, %v2545
      %v2547 = vsel %vm2382, %v2485, 0.0
      %v2548 = vadd.f32 %v2546, %v2547
      %v2549 = vrot.slane %v2548, 4
      %v2550 = vadd.f32 %v2548, %v2549
      %v2551 = vrot.slane %v2550, 2
      %v2552 = vadd.f32 %v2550, %v2551
      %v2553 = vrot.slane %v2552, 1
      %v2554 = vadd.f32 %v2552, %v2553
      %2555 = vst.msk [vmem:[%s214] sm:$0x1] %vm2452, %v2554
      %2556 = vxpose.xlu0.b32.start [1/16] %v2256, 128
      %2557 = vxpose.xlu0.b32.cont [2/16] %v2259, 128
      %2558 = vxpose.xlu0.b32.cont [3/16] %v2264, 128
      %2559 = vxpose.xlu0.b32.cont [4/16] %v2267, 128
      %2560 = vxpose.xlu0.b32.cont [5/16] %v2272, 128
      %2561 = vxpose.xlu0.b32.cont [6/16] %v2275, 128
      %2562 = vxpose.xlu0.b32.cont [7/16] %v2280, 128
      %2563 = vxpose.xlu0.b32.cont [8/16] %v2283, 128
      %2564 = vxpose.xlu0.b32.cont [9/16] %v2288, 128
      %2565 = vxpose.xlu0.b32.cont [10/16] %v2291, 128
      %2566 = vxpose.xlu0.b32.cont [11/16] %v2296, 128
      %2567 = vxpose.xlu0.b32.cont [12/16] %v2299, 128
      %2568 = vxpose.xlu0.b32.cont [13/16] %v2304, 128
      %2569 = vxpose.xlu0.b32.cont [14/16] %v2307, 128
      %2570 = vxpose.xlu0.b32.cont [15/16] %v2312, 128
      %2571 = vxpose.xlu0.b32.end [16/16] %v2315, 128
      %v2572 = vpop.trf.xlu0
      %v2573 = vpop.trf.xlu0
      %v2574 = vpop.trf.xlu0
      %v2575 = vpop.trf.xlu0
      %v2576 = vpop.trf.xlu0
      %v2577 = vpop.trf.xlu0
      %v2578 = vpop.trf.xlu0
      %v2579 = vpop.trf.xlu0
      %v2580 = vpop.trf.xlu0
      %v2581 = vpop.trf.xlu0
      %v2582 = vpop.trf.xlu0
      %v2583 = vpop.trf.xlu0
      %v2584 = vpop.trf.xlu0
      %v2585 = vpop.trf.xlu0
      %v2586 = vpop.trf.xlu0
      %v2587 = vpop.trf.xlu0
      %2588 = vxpose.xlu0.b32.start [1/16] %v2320, 128
      %2589 = vxpose.xlu0.b32.cont [2/16] %v2323, 128
      %2590 = vxpose.xlu0.b32.cont [3/16] %v2328, 128
      %2591 = vxpose.xlu0.b32.cont [4/16] %v2331, 128
      %2592 = vxpose.xlu0.b32.cont [5/16] %v2336, 128
      %2593 = vxpose.xlu0.b32.cont [6/16] %v2339, 128
      %2594 = vxpose.xlu0.b32.cont [7/16] %v2344, 128
      %2595 = vxpose.xlu0.b32.cont [8/16] %v2347, 128
      %2596 = vxpose.xlu0.b32.cont [9/16] %v2352, 128
      %2597 = vxpose.xlu0.b32.cont [10/16] %v2355, 128
      %2598 = vxpose.xlu0.b32.cont [11/16] %v2360, 128
      %2599 = vxpose.xlu0.b32.cont [12/16] %v2363, 128
      %2600 = vxpose.xlu0.b32.cont [13/16] %v2368, 128
      %2601 = vxpose.xlu0.b32.cont [14/16] %v2371, 128
      %2602 = vxpose.xlu0.b32.cont [15/16] %v2376, 128
      %2603 = vxpose.xlu0.b32.end [16/16] %v2379, 128
      %v2604 = vpop.trf.xlu0
      %v2605 = vpop.trf.xlu0
      %v2606 = vpop.trf.xlu0
      %v2607 = vpop.trf.xlu0
      %v2608 = vpop.trf.xlu0
      %v2609 = vpop.trf.xlu0
      %v2610 = vpop.trf.xlu0
      %v2611 = vpop.trf.xlu0
      %v2612 = vpop.trf.xlu0
      %v2613 = vpop.trf.xlu0
      %v2614 = vpop.trf.xlu0
      %v2615 = vpop.trf.xlu0
      %v2616 = vpop.trf.xlu0
      %v2617 = vpop.trf.xlu0
      %v2618 = vpop.trf.xlu0
      %v2619 = vpop.trf.xlu0
      %2620 = vst [vmem:[%s208] sm:$0xff] %v2572
      %2621 = vst [vmem:[%s208 + $0x8] sm:$0xff] %v2604
      %p2622 = scmp.lt.s32.totalorder %s16, 1
      %s2623 = scalar_select %p2622, %s16, 1
      %s2624 = smul.addr %s2623, 2
      %s2625 = smul.addr %s2624, 8
      %s2626 = scalar_lea.vmem %s2, %s2625
      %p2627 = scmp.lt.s32.totalorder %s16, 1
      %s2628 = scalar_select %p2627, %s16, 1
      %s2629 = scalar_lea.vmem %s3, %s2628
      %p2630 = scmp.lt.s32.totalorder %s16, 1
      %s2631 = scalar_select %p2630, %s16, 1
      %s2632 = scalar_lea.vmem %s4, %s2631
      // Predicated region
      $region29: #{layer2_for_hr_branch_forward.2} parent=27 // pred_check
        %p2633 = pneg %p81
      $region30: #{layer2_for_hr_branch_forward.2} parent=27 // pred_check_branch
        %2635 = sbr.rel (%p2633) target = $region32
      $region31: #{layer2_for_hr_branch_forward.2} parent=27 // pred_region
        _
      $region32: #{layer2_for_hr_branch_forward.2} parent=27 // pred_fallthru
        _
      // Predicated region
      $region33: #{layer2_for_hr_branch_forward.2} parent=27 // pred_check
        %p2636 = pneg %p107
      $region34: #{layer2_for_hr_branch_forward.2} parent=27 // pred_check_branch
        %2638 = sbr.rel (%p2636) target = $region36
      $region35: #{layer2_for_hr_branch_forward.2} parent=27 // pred_region
        _
      $region36: #{layer2_for_hr_branch_forward.2} parent=27 // pred_fallthru
        _
      // Predicated region
      $region37: #{layer2_for_hr_branch_forward.2} parent=27 // pred_check
        %p2639 = pneg %p133
      $region38: #{layer2_for_hr_branch_forward.2} parent=27 // pred_check_branch
        %2641 = sbr.rel (%p2639) target = $region40
      $region39: #{layer2_for_hr_branch_forward.2} parent=27 // pred_region
        _
      $region40: #{layer2_for_hr_branch_forward.2} parent=27 // pred_fallthru
        _
    $region28: #{layer2_for_hr_branch_forward.2} parent=5 // pred_fallthru
      _
    %p2642 = scmp.le.s32.totalorder 2, %s11
    // Predicated region
    $region41: #{layer2_for_hr_branch_forward.2} parent=5 // pred_check
      %p2643 = pneg %p2642
    $region42: #{layer2_for_hr_branch_forward.2} parent=5 // pred_check_branch
      %2645 = sbr.rel (%p2643) target = $region44
    $region43: #{layer2_for_hr_branch_forward.2} parent=5 // pred_region
      %s2646 = ssub.s32 %s11, 2
      // Predicated region
      $region45: #{layer2_for_hr_branch_forward.2} parent=43 // pred_check
        %p2647 = pneg %p87
      $region46: #{layer2_for_hr_branch_forward.2} parent=43 // pred_check_branch
        %2649 = sbr.rel (%p2647) target = $region48
      $region47: #{layer2_for_hr_branch_forward.2} parent=43 // pred_region
        %p2650 = scmp.lt.s32.totalorder %s17, 1
        %s2651 = scalar_select %p2650, %s17, 1
        %s2652 = smul.addr %s2651, 2
        %s2653 = smul.addr %s2652, 8
        %s2654 = scalar_lea.vmem %s2, %s2653
      $region48: #{layer2_for_hr_branch_forward.2} parent=43 // pred_fallthru
        _
      // Predicated region
      $region49: #{layer2_for_hr_branch_forward.2} parent=43 // pred_check
        %p2655 = pneg %p113
      $region50: #{layer2_for_hr_branch_forward.2} parent=43 // pred_check_branch
        %2657 = sbr.rel (%p2655) target = $region52
      $region51: #{layer2_for_hr_branch_forward.2} parent=43 // pred_region
        %p2658 = scmp.lt.s32.totalorder %s17, 1
        %s2659 = scalar_select %p2658, %s17, 1
        %s2660 = scalar_lea.vmem %s3, %s2659
      $region52: #{layer2_for_hr_branch_forward.2} parent=43 // pred_fallthru
        _
      // Predicated region
      $region53: #{layer2_for_hr_branch_forward.2} parent=43 // pred_check
        %p2661 = pneg %p139
      $region54: #{layer2_for_hr_branch_forward.2} parent=43 // pred_check_branch
        %2663 = sbr.rel (%p2661) target = $region56
      $region55: #{layer2_for_hr_branch_forward.2} parent=43 // pred_region
        %p2664 = scmp.lt.s32.totalorder %s17, 1
        %s2665 = scalar_select %p2664, %s17, 1
        %s2666 = scalar_lea.vmem %s4, %s2665
      $region56: #{layer2_for_hr_branch_forward.2} parent=43 // pred_fallthru
        _
    $region44: #{layer2_for_hr_branch_forward.2} parent=5 // pred_fallthru
      _
  $region6: #{layer2_for_hr_branch_forward.2} parent=0 // loop_footer
    %s15 = sadd.s32 1, %s11
  $region7: #{layer2_for_hr_branch_forward.2} parent=0 // loop_footer_branch
    %10 = sbr.rel target = $region3
  $region8: #{layer2_for_hr_branch_forward.2} parent=0 // loop_exit
    _

</llo_original>
